<compile_context>
chip_gen: v5e
topology: v5e:2x2
jax: 0.10.0
libtpu: 0.0.40
codegen_flags: <defaults>
</compile_context>

<pallas_src>
import math

import jax
import jax.numpy as jnp
from jax import lax
from jax.experimental import pallas as pl
from jax.experimental.pallas import tpu as pltpu

# ----------------------------- hyperparameters (small) -----------------------------
STATE_FEATURE_DIM = 16                      # F
PLM_EMBED_SIZE = 64                         # E
BITRATE_LEVELS = 6                          # A
SEQ_LEN = 8                                 # T  (T*8 == E so the [:, -E:, :] slice is a no-op)
STATE_HIST = 6                              # history length per state row
CONV_SIZE = 4
CONV_OUT = STATE_HIST - CONV_SIZE + 1       # 3
MAX_EP_LEN = 100
N_HEAD = 4
HEAD_DIM = PLM_EMBED_SIZE // N_HEAD         # 16
MLP_DIM = 4 * PLM_EMBED_SIZE                # 256
LN_EPS = 1e-5
RESIDUAL = False                            # module default
HEAD_PAD = 128                              # lane-dense padded head width (logits in [:A])

T = SEQ_LEN
E = PLM_EMBED_SIZE
F = STATE_FEATURE_DIM
L = T * 8                                   # 64 tokens
TS_PAD = 128                                # timestep table padded to 128 rows

# ----------------------------- packed-slab layouts -----------------------------
# dyn slab (T, 128) f32:  state row r -> cols 8r..8r+5 (cols 8r+6, 8r+7 zero),
#                         col 48 = return, col 49 = action, col 50 = timestep (float).
DYN_RET_COL = 48
DYN_ACT_COL = 49
DYN_TS_COL = 50

VEC_W = 256
VEC_LAYOUT = [
    ('ret_w', E), ('ret_b', E), ('act_w', E), ('act_b', E),
    ('st1_b', E), ('st2_b', E), ('st3_b', E), ('st4_b', E), ('st5_b', E), ('st6_b', E),
    ('enc_b3', F * CONV_OUT), ('enc_b4', F * CONV_OUT),
    ('sc_w0', F), ('sc_w1', F), ('sc_w2', F), ('sc_w3', F),
    ('sc_b0', F), ('sc_b1', F), ('sc_b2', F), ('sc_b3', F),
    ('ln_g', E), ('ln_b', E),
    ('g1', E), ('b1', E), ('g2', E), ('b2', E), ('lnf_g', E), ('lnf_b', E),
    ('bo', E), ('bpr', E),
    ('bqkv', 3 * E), ('bfc', MLP_DIM), ('head_b', HEAD_PAD),
]
VROW = {n: i for i, (n, _) in enumerate(VEC_LAYOUT)}
VWIDTH = dict(VEC_LAYOUT)
VEC_ROWS = ((len(VEC_LAYOUT) + 7) // 8) * 8                       # 40

M64_LAYOUT = [('st1_w', F), ('st2_w', F), ('st3_w', F * CONV_OUT), ('st4_w', F * CONV_OUT),
              ('st5_w', F), ('st6_w', F), ('wo', E), ('wpr', MLP_DIM), ('bd_mask', N_HEAD * L)]
M64_OFF, _o = {}, 0
for _n, _r in M64_LAYOUT:
    M64_OFF[_n] = _o
    _o += _r
M64_ROWS = _o                                                     # 736
M64_NROWS = dict(M64_LAYOUT)

M256_W = 256
M256_LAYOUT = [('enc_w3', 8), ('enc_w4', 8), ('wqkv', E), ('wfc', E), ('head_w', E)]
M256_OFF, _o = {}, 0
for _n, _r in M256_LAYOUT:
    M256_OFF[_n] = _o
    _o += _r
M256_ROWS = _o                                                    # 208
M256_NROWS = dict(M256_LAYOUT)

CONST_TABLE = 0
CONST_PERM = TS_PAD                                               # 128
CONST_SEL = CONST_PERM + L                                        # 192
CONST_CAUSAL = CONST_SEL + T                                      # 200
CONST_ROWS = CONST_CAUSAL + L                                     # 264


# ----------------------------- in-kernel helpers -----------------------------
def _ln(x, g, b):
    mu = jnp.mean(x, axis=-1, keepdims=True)
    var = jnp.mean(jnp.square(x - mu), axis=-1, keepdims=True)
    return (x - mu) * lax.rsqrt(var + LN_EPS) * g + b


def _mdot(a, b):
    # activation cast to bf16 in-kernel; weights are pre-cast bf16 on the host.
    return jnp.dot(a.astype(jnp.bfloat16), b, preferred_element_type=jnp.float32)


# ----------------------------- fused forward kernel -----------------------------
def _fused_kernel(dyn_ref, vec_ref, const_ref, m64_ref, m256_ref, out_ref):
    f32, bf16 = jnp.float32, jnp.bfloat16

    def vrow(name):
        r = VROW[name]
        return vec_ref[r:r + 1, :VWIDTH[name]]                    # (1, width) f32

    def mat64(name):
        r = M64_OFF[name]
        return m64_ref[r:r + M64_NROWS[name], :]                  # (rows, 64) bf16

    def mat256(name, width):
        r = M256_OFF[name]
        return m256_ref[r:r + M256_NROWS[name], :width]           # (rows, width) bf16

    # ---- timestep embedding: one-hot matmul gather against the padded (128, E) table ----
    ts = dyn_ref[:, DYN_TS_COL:DYN_TS_COL + 1].astype(jnp.int32)                     # (T, 1)
    tpos = lax.broadcasted_iota(jnp.int32, (T, TS_PAD), 1)
    onehot = (tpos == ts).astype(f32)                                                # (T, 128)
    time_emb = jnp.dot(onehot, const_ref[CONST_TABLE:CONST_TABLE + TS_PAD, :],
                       preferred_element_type=f32)                                   # (T, E)

    # ---- return / action embeddings (Linear(1,E) == broadcast multiply) ----
    ret_emb = dyn_ref[:, DYN_RET_COL:DYN_RET_COL + 1] * vrow('ret_w') + vrow('ret_b') + time_emb
    act_emb = dyn_ref[:, DYN_ACT_COL:DYN_ACT_COL + 1] * vrow('act_w') + vrow('act_b') + time_emb

    # ---- state encoder ----
    def scalar_enc(r, k):                          # Linear(1,F)+ReLU on last history element
        x = dyn_ref[:, 8 * r + STATE_HIST - 1: 8 * r + STATE_HIST]                   # (T, 1)
        return jnp.maximum(x * vrow('sc_w%d' % k) + vrow('sc_b%d' % k), 0.0)         # (T, F)

    def conv_enc(r, wname, bname):                 # Conv1d lowered to a dense matmul
        x = dyn_ref[:, 8 * r: 8 * r + 8]                                             # (T, 8)
        return jnp.maximum(_mdot(x, mat256(wname, F * CONV_OUT)) + vrow(bname), 0.0)  # (T, 3F)

    f1 = scalar_enc(0, 0)
    f2 = scalar_enc(1, 1)
    f3 = conv_enc(2, 'enc_w3', 'enc_b3')
    f4 = conv_enc(3, 'enc_w4', 'enc_b4')
    f5 = scalar_enc(4, 2)
    f6 = scalar_enc(5, 3)

    def embed(f, wname, bname):
        return _mdot(f, mat64(wname)) + vrow(bname) + time_emb

    s1 = embed(f1, 'st1_w', 'st1_b')
    s2 = embed(f2, 'st2_w', 'st2_b')
    s3 = embed(f3, 'st3_w', 'st3_b')
    s4 = embed(f4, 'st4_w', 'st4_b')
    s5 = embed(f5, 'st5_w', 'st5_b')
    s6 = embed(f6, 'st6_w', 'st6_b')

    # ---- interleave the 8 streams into the (T*8, E) token sequence ----
    # free sublane concat + exact precomputed permutation matmul (f32, exact gather).
    streams = jnp.concatenate([ret_emb, s1, s2, s3, s4, s5, s6, act_emb], axis=0)    # (8T, E)
    perm = const_ref[CONST_PERM:CONST_PERM + L, :]                                   # (L, L)
    stacked = jnp.dot(perm, streams, preferred_element_type=f32)                     # (L, E)
    # original: stacked_inputs[:, -plm_embed_size:, :] -> no-op since T*8 == E
    x = _ln(stacked, vrow('ln_g'), vrow('ln_b'))

    # ---- synthetic PLM: one GPT-2 block + final LN (attention_mask all ones) ----
    h1 = _ln(x, vrow('g1'), vrow('b1'))
    qkv = _mdot(h1, mat256('wqkv', 3 * E)) + vrow('bqkv')                            # (L, 3E)
    q = qkv[:, :E]                                  # 1/sqrt(head_dim) folded into wqkv/bqkv
    k = qkv[:, E:2 * E].astype(bf16)
    v = qkv[:, 2 * E:3 * E].astype(bf16)

    bd = mat64('bd_mask')                                                            # (4L, E) 0/1
    k_bd = jnp.concatenate([k, k, k, k], axis=0) * bd                                # (4L, E)
    v_bd = jnp.concatenate([v, v, v, v], axis=0) * bd                                # (4L, E)

    # all 4 head score blocks in one contraction: s_all[:, h*L:(h+1)*L] = q_h @ k_h^T
    s_all = lax.dot_general(q.astype(bf16), k_bd, (((1,), (1,)), ((), ())),
                            preferred_element_type=f32)                              # (L, 4L)
    # per-head projection weights in one contraction: vwo[h*L:(h+1)*L] = v_h @ Wo[h]
    vwo = jnp.dot(v_bd, mat64('wo'), preferred_element_type=f32)                     # (4L, E)

    causal = const_ref[CONST_CAUSAL:CONST_CAUSAL + L, :]                             # (L, L) bias
    p_blocks = []
    for h in range(N_HEAD):
        sh = s_all[:, h * L:(h + 1) * L] + causal
        m = jnp.max(sh, axis=-1, keepdims=True)
        e = jnp.exp(sh - m)
        r = pl.reciprocal(jnp.sum(e, axis=-1, keepdims=True), approx=True)
        p_blocks.append(e * r)
    p_all = jnp.concatenate(p_blocks, axis=-1)                                       # (L, 4L)
    proj = _mdot(p_all, vwo.astype(bf16))                                            # (L, E)

    x2 = x + proj + vrow('bo')
    h2 = _ln(x2, vrow('g2'), vrow('b2'))
    mfc = jax.nn.gelu(_mdot(h2, mat256('wfc', MLP_DIM)) + vrow('bfc'))               # (L, 4E)
    h3 = x2 + _mdot(mfc, mat64('wpr')) + vrow('bpr')
    hid = _ln(h3, vrow('lnf_g'), vrow('lnf_b'))                                      # last_hidden_state
    if RESIDUAL:
        hid = hid + x

    # ---- gather rows at positions (i+1)*8 - 2 via an exact precomputed selection matmul ----
    sel = const_ref[CONST_SEL:CONST_SEL + T, :]                                      # (T, L)
    logits_used = jnp.dot(sel, hid, preferred_element_type=f32)                      # (T, E)

    # ---- action head (padded to 128 lanes -> dense store) ----
    out_ref[...] = _mdot(logits_used, mat256('head_w', HEAD_PAD)) + vrow('head_b')   # (T, 128)


# ----------------------------- pallas_call plumbing -----------------------------
def _full_spec(shape):
    nd = len(shape)
    return pl.BlockSpec(shape, lambda i, _nd=nd: (0,) * _nd)


def offline_rl_policy_forward(packed, states, actions, returns, timesteps):
    """Mirrors OfflineRLPolicy.forward (training path) as a single fused Pallas kernel."""
    assert actions.shape[0] == 1, 'batch size must be 1 (as in the PyTorch module)'
    t = timesteps.shape[1]
    # The [:, -plm_embed_size:, :] truncation and the (i+1)*8-2 gather only line up when
    # T*8 == plm_embed_size (reference configuration).
    assert t * 8 == PLM_EMBED_SIZE, 'kernel assumes T*8 == plm_embed_size'

    # pack all per-call dynamic data into one lane-dense (T, 128) slab -> single DMA
    st = states[0].astype(jnp.float32)                                  # (T, 6, S)
    dyn = jnp.zeros((t, 128), jnp.float32)
    for r in range(6):
        dyn = dyn.at[:, 8 * r:8 * r + STATE_HIST].set(st[:, r, :])
    dyn = dyn.at[:, DYN_RET_COL].set(returns[0, :, 0].astype(jnp.float32))
    dyn = dyn.at[:, DYN_ACT_COL].set(actions[0, :, 0].astype(jnp.float32))
    dyn = dyn.at[:, DYN_TS_COL].set(timesteps[0].astype(jnp.float32))

    slabs = [dyn, packed['vecs'], packed['consts'], packed['m64'], packed['m256']]
    out = pl.pallas_call(
        _fused_kernel,
        out_shape=jax.ShapeDtypeStruct((t, HEAD_PAD), jnp.float32),
        grid=(1,),                                          # single TC; whole working set in VMEM
        in_specs=[_full_spec(s.shape) for s in slabs],
        out_specs=_full_spec((t, HEAD_PAD)),
        compiler_params=pltpu.CompilerParams(dimension_semantics=("arbitrary",)),
        cost_estimate=pl.CostEstimate(flops=14_000_000, transcendentals=40_000,
                                      bytes_accessed=360_000),
    )(*slabs)
    return out[None, :, :BITRATE_LEVELS]                    # (1, T, A)


# ----------------------------- parameter construction & packing -----------------------------
def conv_as_dense(w_kf, b_f):
    """Lower Conv1d(1, F, K) over history S to a dense (S, F*P) matmul, P = S-K+1."""
    K, Fd = w_kf.shape
    P = STATE_HIST - K + 1
    Wb = jnp.zeros((STATE_HIST, Fd * P), jnp.float32)
    for pp in range(P):
        for kk in range(K):
            Wb = Wb.at[pp + kk, pp::P].set(w_kf[kk])
    bb = jnp.repeat(b_f, P)[None, :]
    return Wb, bb


def init_params(key):
    keys = jax.random.split(key, 32)
    ki = iter(keys)

    def w(shape):
        return (0.02 * jax.random.normal(next(ki), shape)).astype(jnp.float32)

    zeros = lambda s: jnp.zeros(s, jnp.float32)
    ones = lambda s: jnp.ones(s, jnp.float32)

    p = {}
    # synthetic EncoderNetwork
    p['enc_sc_w'] = w((4, F))            # Linear(1,F) weights for state rows 0,1,4,5
    p['enc_sc_b'] = zeros((4, F))
    p['enc_w3'], p['enc_b3'] = conv_as_dense(w((CONV_SIZE, F)), zeros((F,)))
    p['enc_w4'], p['enc_b4'] = conv_as_dense(w((CONV_SIZE, F)), zeros((F,)))
    # policy embeddings
    p['embed_timestep'] = w((MAX_EP_LEN + 1, E))
    p['ret_w'], p['ret_b'] = w((1, E)), zeros((1, E))
    p['act_w'], p['act_b'] = w((1, E)), zeros((1, E))
    p['st1_w'], p['st1_b'] = w((F, E)), zeros((1, E))
    p['st2_w'], p['st2_b'] = w((F, E)), zeros((1, E))
    p['st3_w'], p['st3_b'] = w((F * CONV_OUT, E)), zeros((1, E))
    p['st4_w'], p['st4_b'] = w((F * CONV_OUT, E)), zeros((1, E))
    p['st5_w'], p['st5_b'] = w((F, E)), zeros((1, E))
    p['st6_w'], p['st6_b'] = w((F, E)), zeros((1, E))
    p['ln_g'], p['ln_b'] = ones((1, E)), zeros((1, E))
    # action head, zero-padded to 128 lanes; real logits live in [:A]
    p['head_w'] = jnp.zeros((E, HEAD_PAD), jnp.float32).at[:, :BITRATE_LEVELS].set(
        w((E, BITRATE_LEVELS)))
    p['head_b'] = zeros((1, HEAD_PAD))
    # synthetic PLM: one transformer block + final LN
    p['g1'], p['b1'] = ones((1, E)), zeros((1, E))
    p['wqkv'], p['bqkv'] = w((E, 3 * E)), zeros((1, 3 * E))
    p['wo'], p['bo'] = w((E, E)), zeros((1, E))
    p['g2'], p['b2'] = ones((1, E)), zeros((1, E))
    p['wfc'], p['bfc'] = w((E, MLP_DIM)), zeros((1, MLP_DIM))
    p['wpr'], p['bpr'] = w((MLP_DIM, E)), zeros((1, E))
    p['lnf_g'], p['lnf_b'] = ones((1, E)), zeros((1, E))
    return p


def pack_params(p):
    """One-time host-side packing of the parameters into a few contiguous slabs."""
    f32, bf16 = jnp.float32, jnp.bfloat16
    scale = 1.0 / math.sqrt(HEAD_DIM)

    # fold the attention scale into the q columns of wqkv / bqkv
    wqkv = p['wqkv'].astype(f32).at[:, :E].multiply(scale)
    bqkv = p['bqkv'].astype(f32).at[:, :E].multiply(scale)

    # ---- f32 row-vector slab (biases / LN params / scalar-encoder rows) ----
    vec_src = {
        'ret_w': p['ret_w'], 'ret_b': p['ret_b'], 'act_w': p['act_w'], 'act_b': p['act_b'],
        'st1_b': p['st1_b'], 'st2_b': p['st2_b'], 'st3_b': p['st3_b'],
        'st4_b': p['st4_b'], 'st5_b': p['st5_b'], 'st6_b': p['st6_b'],
        'enc_b3': p['enc_b3'], 'enc_b4': p['enc_b4'],
        'sc_w0': p['enc_sc_w'][0], 'sc_w1': p['enc_sc_w'][1],
        'sc_w2': p['enc_sc_w'][2], 'sc_w3': p['enc_sc_w'][3],
        'sc_b0': p['enc_sc_b'][0], 'sc_b1': p['enc_sc_b'][1],
        'sc_b2': p['enc_sc_b'][2], 'sc_b3': p['enc_sc_b'][3],
        'ln_g': p['ln_g'], 'ln_b': p['ln_b'],
        'g1': p['g1'], 'b1': p['b1'], 'g2': p['g2'], 'b2': p['b2'],
        'lnf_g': p['lnf_g'], 'lnf_b': p['lnf_b'],
        'bo': p['bo'], 'bpr': p['bpr'],
        'bqkv': bqkv, 'bfc': p['bfc'], 'head_b': p['head_b'],
    }
    vecs = jnp.zeros((VEC_ROWS, VEC_W), f32)
    for name, width in VEC_LAYOUT:
        vecs = vecs.at[VROW[name], :width].set(vec_src[name].reshape(-1).astype(f32))

    # ---- f32 constants slab: padded timestep table + exact gather/permute/causal constants ----
    table = jnp.zeros((TS_PAD, E), f32).at[:MAX_EP_LEN + 1, :].set(p['embed_timestep'].astype(f32))
    ridx = jnp.arange(L)
    perm = jax.nn.one_hot((ridx % 8) * T + ridx // 8, L, dtype=f32)            # interleave
    sel = jax.nn.one_hot(jnp.arange(T) * 8 + 6, L, dtype=f32)                  # (i+1)*8-2 gather
    causal = jnp.where(ridx[None, :] <= ridx[:, None], 0.0, -1e30).astype(f32)  # additive bias
    consts = jnp.concatenate([table, perm, sel, causal], axis=0)               # (264, E)

    # ---- bf16 weight slabs (pre-cast on the host) ----
    bd_mask = (jnp.arange(N_HEAD * L)[:, None] // L ==
               jnp.arange(E)[None, :] // HEAD_DIM).astype(f32)                 # (4L, E) 0/1
    m64 = jnp.concatenate([p['st1_w'], p['st2_w'], p['st3_w'], p['st4_w'],
                           p['st5_w'], p['st6_w'], p['wo'], p['wpr'], bd_mask],
                          axis=0).astype(bf16)                                 # (736, 64)

    def pad_block(a, rows):
        out = jnp.zeros((rows, M256_W), f32)
        return out.at[:a.shape[0], :a.shape[1]].set(a.astype(f32))

    m256 = jnp.concatenate([pad_block(p['enc_w3'], 8), pad_block(p['enc_w4'], 8),
                            pad_block(wqkv, E), pad_block(p['wfc'], E),
                            pad_block(p['head_w'], E)], axis=0).astype(bf16)   # (208, 256)

    assert vecs.shape == (VEC_ROWS, VEC_W)
    assert consts.shape == (CONST_ROWS, E)
    assert m64.shape == (M64_ROWS, E)
    assert m256.shape == (M256_ROWS, M256_W)
    return {'vecs': vecs, 'consts': consts, 'm64': m64, 'm256': m256}


# ----------------------------- main -----------------------------
if __name__ == "__main__":
    key = jax.random.PRNGKey(0)
    k_p, k_s, k_a, k_r = jax.random.split(key, 4)
    params = init_params(k_p)
    packed = pack_params(params)          # host-side, one-time: 4 contiguous parameter slabs

    states = jax.random.uniform(k_s, (1, SEQ_LEN, 6, STATE_HIST), dtype=jnp.float32)
    actions = jax.random.uniform(k_a, (1, SEQ_LEN, 1), dtype=jnp.float32)
    returns = jax.random.uniform(k_r, (1, SEQ_LEN, 1), dtype=jnp.float32)
    timesteps = jnp.arange(SEQ_LEN, dtype=jnp.int32)[None, :]

    fwd = jax.jit(offline_rl_policy_forward)
    out = jax.block_until_ready(fwd(packed, states, actions, returns, timesteps))
    assert out.shape == (1, SEQ_LEN, BITRATE_LEVELS)
    assert bool(jnp.all(jnp.isfinite(out)))
    print("KERNEL_OK")
</pallas_src>

<mosaic_0001>
module attributes {stable_mosaic.version = 11 : i64} {
  func.func @_fused_kernel(%arg0: i32, %arg1: memref<8x128xf32, #tpu.memory_space<vmem>>, %arg2: memref<40x256xf32, #tpu.memory_space<vmem>>, %arg3: memref<264x64xf32, #tpu.memory_space<vmem>>, %arg4: memref<736x64xbf16, #tpu.memory_space<vmem>>, %arg5: memref<208x256xbf16, #tpu.memory_space<vmem>>, %arg6: memref<8x128xf32, #tpu.memory_space<vmem>>) attributes {dimension_semantics = [#tpu.dimension_semantics<arbitrary>], iteration_bounds = array<i64: 1>, scalar_prefetch = 0 : i64, scratch_operands = 0 : i64, tpu.core_type = #tpu.core_type<tc>, window_params = [{pipeline_mode = #tpu.pipeline_mode<synchronous>, transform_indices = @transform_0, window_bounds = array<i64: 8, 128>}, {pipeline_mode = #tpu.pipeline_mode<synchronous>, transform_indices = @transform_1, window_bounds = array<i64: 40, 256>}, {pipeline_mode = #tpu.pipeline_mode<synchronous>, transform_indices = @transform_2, window_bounds = array<i64: 264, 64>}, {pipeline_mode = #tpu.pipeline_mode<synchronous>, transform_indices = @transform_3, window_bounds = array<i64: 736, 64>}, {pipeline_mode = #tpu.pipeline_mode<synchronous>, transform_indices = @transform_4, window_bounds = array<i64: 208, 256>}, {pipeline_mode = #tpu.pipeline_mode<synchronous>, transform_indices = @transform_5, window_bounds = array<i64: 8, 128>}]} {
    %c0 = arith.constant 0 : index
    %c50 = arith.constant 50 : index
    %0 = vector.load %arg1[%c0, %c50] : memref<8x128xf32, #tpu.memory_space<vmem>>, vector<8x1xf32>
    %1 = arith.fptosi %0 : vector<8x1xf32> to vector<8x1xi32>
    %2 = tpu.iota {dimensions = array<i32: 1>} : vector<8x128xi32>
    %3 = vector.broadcast %1 : vector<8x1xi32> to vector<8x128xi32>
    %4 = arith.cmpi eq, %2, %3 : vector<8x128xi32>
    %5 = arith.extui %4 : vector<8x128xi1> to vector<8x128xi32>
    %6 = arith.sitofp %5 : vector<8x128xi32> to vector<8x128xf32>
    %c0_0 = arith.constant 0 : index
    %c0_1 = arith.constant 0 : index
    %7 = vector.load %arg3[%c0_0, %c0_1] : memref<264x64xf32, #tpu.memory_space<vmem>>, vector<128x64xf32>
    %cst = arith.constant dense<0.000000e+00> : vector<8x64xf32>
    %8 = tpu.matmul %6, %7, %cst {dimension_numbers = #tpu.dot_dimension_numbers<[1], [0], [0], [1], [0, 0, 1, 1], [], []>} : vector<8x128xf32>, vector<128x64xf32>, vector<8x64xf32> -> vector<8x64xf32>
    %c0_2 = arith.constant 0 : index
    %c48 = arith.constant 48 : index
    %9 = vector.load %arg1[%c0_2, %c48] : memref<8x128xf32, #tpu.memory_space<vmem>>, vector<8x1xf32>
    %c0_3 = arith.constant 0 : index
    %c0_4 = arith.constant 0 : index
    %10 = vector.load %arg2[%c0_3, %c0_4] : memref<40x256xf32, #tpu.memory_space<vmem>>, vector<1x64xf32>
    %11 = vector.broadcast %9 : vector<8x1xf32> to vector<8x64xf32>
    %12 = vector.broadcast %10 : vector<1x64xf32> to vector<8x64xf32>
    %13 = arith.mulf %11, %12 : vector<8x64xf32>
    %c1 = arith.constant 1 : index
    %c0_5 = arith.constant 0 : index
    %14 = vector.load %arg2[%c1, %c0_5] : memref<40x256xf32, #tpu.memory_space<vmem>>, vector<1x64xf32>
    %15 = vector.broadcast %14 : vector<1x64xf32> to vector<8x64xf32>
    %16 = arith.addf %13, %15 : vector<8x64xf32>
    %17 = arith.addf %16, %8 : vector<8x64xf32>
    %c0_6 = arith.constant 0 : index
    %c49 = arith.constant 49 : index
    %18 = vector.load %arg1[%c0_6, %c49] : memref<8x128xf32, #tpu.memory_space<vmem>>, vector<8x1xf32>
    %c2 = arith.constant 2 : index
    %c0_7 = arith.constant 0 : index
    %19 = vector.load %arg2[%c2, %c0_7] : memref<40x256xf32, #tpu.memory_space<vmem>>, vector<1x64xf32>
    %20 = vector.broadcast %18 : vector<8x1xf32> to vector<8x64xf32>
    %21 = vector.broadcast %19 : vector<1x64xf32> to vector<8x64xf32>
    %22 = arith.mulf %20, %21 : vector<8x64xf32>
    %c3 = arith.constant 3 : index
    %c0_8 = arith.constant 0 : index
    %23 = vector.load %arg2[%c3, %c0_8] : memref<40x256xf32, #tpu.memory_space<vmem>>, vector<1x64xf32>
    %24 = vector.broadcast %23 : vector<1x64xf32> to vector<8x64xf32>
    %25 = arith.addf %22, %24 : vector<8x64xf32>
    %26 = arith.addf %25, %8 : vector<8x64xf32>
    %c0_9 = arith.constant 0 : index
    %c5 = arith.constant 5 : index
    %27 = vector.load %arg1[%c0_9, %c5] : memref<8x128xf32, #tpu.memory_space<vmem>>, vector<8x1xf32>
    %c12 = arith.constant 12 : index
    %c0_10 = arith.constant 0 : index
    %28 = vector.load %arg2[%c12, %c0_10] : memref<40x256xf32, #tpu.memory_space<vmem>>, vector<1x16xf32>
    %29 = vector.broadcast %27 : vector<8x1xf32> to vector<8x16xf32>
    %30 = vector.broadcast %28 : vector<1x16xf32> to vector<8x16xf32>
    %31 = arith.mulf %29, %30 : vector<8x16xf32>
    %c16 = arith.constant 16 : index
    %c0_11 = arith.constant 0 : index
    %32 = vector.load %arg2[%c16, %c0_11] : memref<40x256xf32, #tpu.memory_space<vmem>>, vector<1x16xf32>
    %33 = vector.broadcast %32 : vector<1x16xf32> to vector<8x16xf32>
    %34 = arith.addf %31, %33 : vector<8x16xf32>
    %cst_12 = arith.constant 0.000000e+00 : f32
    %35 = vector.broadcast %cst_12 : f32 to vector<8x16xf32>
    %36 = arith.maximumf %34, %35 : vector<8x16xf32>
    %c0_13 = arith.constant 0 : index
    %c13 = arith.constant 13 : index
    %37 = vector.load %arg1[%c0_13, %c13] : memref<8x128xf32, #tpu.memory_space<vmem>>, vector<8x1xf32>
    %c13_14 = arith.constant 13 : index
    %c0_15 = arith.constant 0 : index
    %38 = vector.load %arg2[%c13_14, %c0_15] : memref<40x256xf32, #tpu.memory_space<vmem>>, vector<1x16xf32>
    %39 = vector.broadcast %37 : vector<8x1xf32> to vector<8x16xf32>
    %40 = vector.broadcast %38 : vector<1x16xf32> to vector<8x16xf32>
    %41 = arith.mulf %39, %40 : vector<8x16xf32>
    %c17 = arith.constant 17 : index
    %c0_16 = arith.constant 0 : index
    %42 = vector.load %arg2[%c17, %c0_16] : memref<40x256xf32, #tpu.memory_space<vmem>>, vector<1x16xf32>
    %43 = vector.broadcast %42 : vector<1x16xf32> to vector<8x16xf32>
    %44 = arith.addf %41, %43 : vector<8x16xf32>
    %cst_17 = arith.constant 0.000000e+00 : f32
    %45 = vector.broadcast %cst_17 : f32 to vector<8x16xf32>
    %46 = arith.maximumf %44, %45 : vector<8x16xf32>
    %c0_18 = arith.constant 0 : index
    %c16_19 = arith.constant 16 : index
    %47 = vector.load %arg1[%c0_18, %c16_19] : memref<8x128xf32, #tpu.memory_space<vmem>>, vector<8x8xf32>
    %c0_20 = arith.constant 0 : index
    %c0_21 = arith.constant 0 : index
    %48 = vector.load %arg5[%c0_20, %c0_21] : memref<208x256xbf16, #tpu.memory_space<vmem>>, vector<8x48xbf16>
    %49 = arith.truncf %47 : vector<8x8xf32> to vector<8x8xbf16>
    %cst_22 = arith.constant dense<0.000000e+00> : vector<8x48xf32>
    %50 = tpu.matmul %49, %48, %cst_22 {dimension_numbers = #tpu.dot_dimension_numbers<[1], [0], [0], [1], [0, 0, 1, 1], [], []>} : vector<8x8xbf16>, vector<8x48xbf16>, vector<8x48xf32> -> vector<8x48xf32>
    %c10 = arith.constant 10 : index
    %c0_23 = arith.constant 0 : index
    %51 = vector.load %arg2[%c10, %c0_23] : memref<40x256xf32, #tpu.memory_space<vmem>>, vector<1x48xf32>
    %52 = vector.broadcast %51 : vector<1x48xf32> to vector<8x48xf32>
    %53 = arith.addf %50, %52 : vector<8x48xf32>
    %cst_24 = arith.constant 0.000000e+00 : f32
    %54 = vector.broadcast %cst_24 : f32 to vector<8x48xf32>
    %55 = arith.maximumf %53, %54 : vector<8x48xf32>
    %c0_25 = arith.constant 0 : index
    %c24 = arith.constant 24 : index
    %56 = vector.load %arg1[%c0_25, %c24] : memref<8x128xf32, #tpu.memory_space<vmem>>, vector<8x8xf32>
    %c8 = arith.constant 8 : index
    %c0_26 = arith.constant 0 : index
    %57 = vector.load %arg5[%c8, %c0_26] : memref<208x256xbf16, #tpu.memory_space<vmem>>, vector<8x48xbf16>
    %58 = arith.truncf %56 : vector<8x8xf32> to vector<8x8xbf16>
    %cst_27 = arith.constant dense<0.000000e+00> : vector<8x48xf32>
    %59 = tpu.matmul %58, %57, %cst_27 {dimension_numbers = #tpu.dot_dimension_numbers<[1], [0], [0], [1], [0, 0, 1, 1], [], []>} : vector<8x8xbf16>, vector<8x48xbf16>, vector<8x48xf32> -> vector<8x48xf32>
    %c11 = arith.constant 11 : index
    %c0_28 = arith.constant 0 : index
    %60 = vector.load %arg2[%c11, %c0_28] : memref<40x256xf32, #tpu.memory_space<vmem>>, vector<1x48xf32>
    %61 = vector.broadcast %60 : vector<1x48xf32> to vector<8x48xf32>
    %62 = arith.addf %59, %61 : vector<8x48xf32>
    %cst_29 = arith.constant 0.000000e+00 : f32
    %63 = vector.broadcast %cst_29 : f32 to vector<8x48xf32>
    %64 = arith.maximumf %62, %63 : vector<8x48xf32>
    %c0_30 = arith.constant 0 : index
    %c37 = arith.constant 37 : index
    %65 = vector.load %arg1[%c0_30, %c37] : memref<8x128xf32, #tpu.memory_space<vmem>>, vector<8x1xf32>
    %c14 = arith.constant 14 : index
    %c0_31 = arith.constant 0 : index
    %66 = vector.load %arg2[%c14, %c0_31] : memref<40x256xf32, #tpu.memory_space<vmem>>, vector<1x16xf32>
    %67 = vector.broadcast %65 : vector<8x1xf32> to vector<8x16xf32>
    %68 = vector.broadcast %66 : vector<1x16xf32> to vector<8x16xf32>
    %69 = arith.mulf %67, %68 : vector<8x16xf32>
    %c18 = arith.constant 18 : index
    %c0_32 = arith.constant 0 : index
    %70 = vector.load %arg2[%c18, %c0_32] : memref<40x256xf32, #tpu.memory_space<vmem>>, vector<1x16xf32>
    %71 = vector.broadcast %70 : vector<1x16xf32> to vector<8x16xf32>
    %72 = arith.addf %69, %71 : vector<8x16xf32>
    %cst_33 = arith.constant 0.000000e+00 : f32
    %73 = vector.broadcast %cst_33 : f32 to vector<8x16xf32>
    %74 = arith.maximumf %72, %73 : vector<8x16xf32>
    %c0_34 = arith.constant 0 : index
    %c45 = arith.constant 45 : index
    %75 = vector.load %arg1[%c0_34, %c45] : memref<8x128xf32, #tpu.memory_space<vmem>>, vector<8x1xf32>
    %c15 = arith.constant 15 : index
    %c0_35 = arith.constant 0 : index
    %76 = vector.load %arg2[%c15, %c0_35] : memref<40x256xf32, #tpu.memory_space<vmem>>, vector<1x16xf32>
    %77 = vector.broadcast %75 : vector<8x1xf32> to vector<8x16xf32>
    %78 = vector.broadcast %76 : vector<1x16xf32> to vector<8x16xf32>
    %79 = arith.mulf %77, %78 : vector<8x16xf32>
    %c19 = arith.constant 19 : index
    %c0_36 = arith.constant 0 : index
    %80 = vector.load %arg2[%c19, %c0_36] : memref<40x256xf32, #tpu.memory_space<vmem>>, vector<1x16xf32>
    %81 = vector.broadcast %80 : vector<1x16xf32> to vector<8x16xf32>
    %82 = arith.addf %79, %81 : vector<8x16xf32>
    %cst_37 = arith.constant 0.000000e+00 : f32
    %83 = vector.broadcast %cst_37 : f32 to vector<8x16xf32>
    %84 = arith.maximumf %82, %83 : vector<8x16xf32>
    %c0_38 = arith.constant 0 : index
    %c0_39 = arith.constant 0 : index
    %85 = vector.load %arg4[%c0_38, %c0_39] : memref<736x64xbf16, #tpu.memory_space<vmem>>, vector<16x64xbf16>
    %86 = arith.truncf %36 : vector<8x16xf32> to vector<8x16xbf16>
    %cst_40 = arith.constant dense<0.000000e+00> : vector<8x64xf32>
    %87 = tpu.matmul %86, %85, %cst_40 {dimension_numbers = #tpu.dot_dimension_numbers<[1], [0], [0], [1], [0, 0, 1, 1], [], []>} : vector<8x16xbf16>, vector<16x64xbf16>, vector<8x64xf32> -> vector<8x64xf32>
    %c4 = arith.constant 4 : index
    %c0_41 = arith.constant 0 : index
    %88 = vector.load %arg2[%c4, %c0_41] : memref<40x256xf32, #tpu.memory_space<vmem>>, vector<1x64xf32>
    %89 = vector.broadcast %88 : vector<1x64xf32> to vector<8x64xf32>
    %90 = arith.addf %87, %89 : vector<8x64xf32>
    %91 = arith.addf %90, %8 : vector<8x64xf32>
    %c16_42 = arith.constant 16 : index
    %c0_43 = arith.constant 0 : index
    %92 = vector.load %arg4[%c16_42, %c0_43] : memref<736x64xbf16, #tpu.memory_space<vmem>>, vector<16x64xbf16>
    %93 = arith.truncf %46 : vector<8x16xf32> to vector<8x16xbf16>
    %cst_44 = arith.constant dense<0.000000e+00> : vector<8x64xf32>
    %94 = tpu.matmul %93, %92, %cst_44 {dimension_numbers = #tpu.dot_dimension_numbers<[1], [0], [0], [1], [0, 0, 1, 1], [], []>} : vector<8x16xbf16>, vector<16x64xbf16>, vector<8x64xf32> -> vector<8x64xf32>
    %c5_45 = arith.constant 5 : index
    %c0_46 = arith.constant 0 : index
    %95 = vector.load %arg2[%c5_45, %c0_46] : memref<40x256xf32, #tpu.memory_space<vmem>>, vector<1x64xf32>
    %96 = vector.broadcast %95 : vector<1x64xf32> to vector<8x64xf32>
    %97 = arith.addf %94, %96 : vector<8x64xf32>
    %98 = arith.addf %97, %8 : vector<8x64xf32>
    %c32 = arith.constant 32 : index
    %c0_47 = arith.constant 0 : index
    %99 = vector.load %arg4[%c32, %c0_47] : memref<736x64xbf16, #tpu.memory_space<vmem>>, vector<48x64xbf16>
    %100 = arith.truncf %55 : vector<8x48xf32> to vector<8x48xbf16>
    %cst_48 = arith.constant dense<0.000000e+00> : vector<8x64xf32>
    %101 = tpu.matmul %100, %99, %cst_48 {dimension_numbers = #tpu.dot_dimension_numbers<[1], [0], [0], [1], [0, 0, 1, 1], [], []>} : vector<8x48xbf16>, vector<48x64xbf16>, vector<8x64xf32> -> vector<8x64xf32>
    %c6 = arith.constant 6 : index
    %c0_49 = arith.constant 0 : index
    %102 = vector.load %arg2[%c6, %c0_49] : memref<40x256xf32, #tpu.memory_space<vmem>>, vector<1x64xf32>
    %103 = vector.broadcast %102 : vector<1x64xf32> to vector<8x64xf32>
    %104 = arith.addf %101, %103 : vector<8x64xf32>
    %105 = arith.addf %104, %8 : vector<8x64xf32>
    %c80 = arith.constant 80 : index
    %c0_50 = arith.constant 0 : index
    %106 = vector.load %arg4[%c80, %c0_50] : memref<736x64xbf16, #tpu.memory_space<vmem>>, vector<48x64xbf16>
    %107 = arith.truncf %64 : vector<8x48xf32> to vector<8x48xbf16>
    %cst_51 = arith.constant dense<0.000000e+00> : vector<8x64xf32>
    %108 = tpu.matmul %107, %106, %cst_51 {dimension_numbers = #tpu.dot_dimension_numbers<[1], [0], [0], [1], [0, 0, 1, 1], [], []>} : vector<8x48xbf16>, vector<48x64xbf16>, vector<8x64xf32> -> vector<8x64xf32>
    %c7 = arith.constant 7 : index
    %c0_52 = arith.constant 0 : index
    %109 = vector.load %arg2[%c7, %c0_52] : memref<40x256xf32, #tpu.memory_space<vmem>>, vector<1x64xf32>
    %110 = vector.broadcast %109 : vector<1x64xf32> to vector<8x64xf32>
    %111 = arith.addf %108, %110 : vector<8x64xf32>
    %112 = arith.addf %111, %8 : vector<8x64xf32>
    %c128 = arith.constant 128 : index
    %c0_53 = arith.constant 0 : index
    %113 = vector.load %arg4[%c128, %c0_53] : memref<736x64xbf16, #tpu.memory_space<vmem>>, vector<16x64xbf16>
    %114 = arith.truncf %74 : vector<8x16xf32> to vector<8x16xbf16>
    %cst_54 = arith.constant dense<0.000000e+00> : vector<8x64xf32>
    %115 = tpu.matmul %114, %113, %cst_54 {dimension_numbers = #tpu.dot_dimension_numbers<[1], [0], [0], [1], [0, 0, 1, 1], [], []>} : vector<8x16xbf16>, vector<16x64xbf16>, vector<8x64xf32> -> vector<8x64xf32>
    %c8_55 = arith.constant 8 : index
    %c0_56 = arith.constant 0 : index
    %116 = vector.load %arg2[%c8_55, %c0_56] : memref<40x256xf32, #tpu.memory_space<vmem>>, vector<1x64xf32>
    %117 = vector.broadcast %116 : vector<1x64xf32> to vector<8x64xf32>
    %118 = arith.addf %115, %117 : vector<8x64xf32>
    %119 = arith.addf %118, %8 : vector<8x64xf32>
    %c144 = arith.constant 144 : index
    %c0_57 = arith.constant 0 : index
    %120 = vector.load %arg4[%c144, %c0_57] : memref<736x64xbf16, #tpu.memory_space<vmem>>, vector<16x64xbf16>
    %121 = arith.truncf %84 : vector<8x16xf32> to vector<8x16xbf16>
    %cst_58 = arith.constant dense<0.000000e+00> : vector<8x64xf32>
    %122 = tpu.matmul %121, %120, %cst_58 {dimension_numbers = #tpu.dot_dimension_numbers<[1], [0], [0], [1], [0, 0, 1, 1], [], []>} : vector<8x16xbf16>, vector<16x64xbf16>, vector<8x64xf32> -> vector<8x64xf32>
    %c9 = arith.constant 9 : index
    %c0_59 = arith.constant 0 : index
    %123 = vector.load %arg2[%c9, %c0_59] : memref<40x256xf32, #tpu.memory_space<vmem>>, vector<1x64xf32>
    %124 = vector.broadcast %123 : vector<1x64xf32> to vector<8x64xf32>
    %125 = arith.addf %122, %124 : vector<8x64xf32>
    %126 = arith.addf %125, %8 : vector<8x64xf32>
    %127 = tpu.concatenate %17, %91, %98, %105, %112, %119, %126, %26 in 0 : vector<8x64xf32>, vector<8x64xf32>, vector<8x64xf32>, vector<8x64xf32>, vector<8x64xf32>, vector<8x64xf32>, vector<8x64xf32>, vector<8x64xf32> -> vector<64x64xf32>
    %c128_60 = arith.constant 128 : index
    %c0_61 = arith.constant 0 : index
    %128 = vector.load %arg3[%c128_60, %c0_61] : memref<264x64xf32, #tpu.memory_space<vmem>>, vector<64x64xf32>
    %cst_62 = arith.constant dense<0.000000e+00> : vector<64x64xf32>
    %129 = tpu.matmul %128, %127, %cst_62 {dimension_numbers = #tpu.dot_dimension_numbers<[1], [0], [0], [1], [0, 0, 1, 1], [], []>} : vector<64x64xf32>, vector<64x64xf32>, vector<64x64xf32> -> vector<64x64xf32>
    %c20 = arith.constant 20 : index
    %c0_63 = arith.constant 0 : index
    %130 = vector.load %arg2[%c20, %c0_63] : memref<40x256xf32, #tpu.memory_space<vmem>>, vector<1x64xf32>
    %c21 = arith.constant 21 : index
    %c0_64 = arith.constant 0 : index
    %131 = vector.load %arg2[%c21, %c0_64] : memref<40x256xf32, #tpu.memory_space<vmem>>, vector<1x64xf32>
    %cst_65 = arith.constant dense<0.000000e+00> : vector<64xf32>
    %132 = vector.multi_reduction <add>, %129, %cst_65 [1] : vector<64x64xf32> to vector<64xf32>
    %133 = vector.shape_cast %132 : vector<64xf32> to vector<64x1xf32>
    %cst_66 = arith.constant 6.400000e+01 : f32
    %134 = vector.broadcast %cst_66 : f32 to vector<64x1xf32>
    %135 = arith.divf %133, %134 : vector<64x1xf32>
    %136 = vector.broadcast %135 : vector<64x1xf32> to vector<64x64xf32>
    %137 = arith.subf %129, %136 : vector<64x64xf32>
    %138 = arith.mulf %137, %137 : vector<64x64xf32>
    %cst_67 = arith.constant dense<0.000000e+00> : vector<64xf32>
    %139 = vector.multi_reduction <add>, %138, %cst_67 [1] : vector<64x64xf32> to vector<64xf32>
    %140 = vector.shape_cast %139 : vector<64xf32> to vector<64x1xf32>
    %cst_68 = arith.constant 6.400000e+01 : f32
    %141 = vector.broadcast %cst_68 : f32 to vector<64x1xf32>
    %142 = arith.divf %140, %141 : vector<64x1xf32>
    %143 = vector.broadcast %135 : vector<64x1xf32> to vector<64x64xf32>
    %144 = arith.subf %129, %143 : vector<64x64xf32>
    %cst_69 = arith.constant 9.99999974E-6 : f32
    %145 = vector.broadcast %cst_69 : f32 to vector<64x1xf32>
    %146 = arith.addf %142, %145 : vector<64x1xf32>
    %147 = math.rsqrt %146 : vector<64x1xf32>
    %148 = vector.broadcast %147 : vector<64x1xf32> to vector<64x64xf32>
    %149 = arith.mulf %144, %148 : vector<64x64xf32>
    %150 = vector.broadcast %130 : vector<1x64xf32> to vector<64x64xf32>
    %151 = arith.mulf %149, %150 : vector<64x64xf32>
    %152 = vector.broadcast %131 : vector<1x64xf32> to vector<64x64xf32>
    %153 = arith.addf %151, %152 : vector<64x64xf32>
    %c22 = arith.constant 22 : index
    %c0_70 = arith.constant 0 : index
    %154 = vector.load %arg2[%c22, %c0_70] : memref<40x256xf32, #tpu.memory_space<vmem>>, vector<1x64xf32>
    %c23 = arith.constant 23 : index
    %c0_71 = arith.constant 0 : index
    %155 = vector.load %arg2[%c23, %c0_71] : memref<40x256xf32, #tpu.memory_space<vmem>>, vector<1x64xf32>
    %cst_72 = arith.constant dense<0.000000e+00> : vector<64xf32>
    %156 = vector.multi_reduction <add>, %153, %cst_72 [1] : vector<64x64xf32> to vector<64xf32>
    %157 = vector.shape_cast %156 : vector<64xf32> to vector<64x1xf32>
    %cst_73 = arith.constant 6.400000e+01 : f32
    %158 = vector.broadcast %cst_73 : f32 to vector<64x1xf32>
    %159 = arith.divf %157, %158 : vector<64x1xf32>
    %160 = vector.broadcast %159 : vector<64x1xf32> to vector<64x64xf32>
    %161 = arith.subf %153, %160 : vector<64x64xf32>
    %162 = arith.mulf %161, %161 : vector<64x64xf32>
    %cst_74 = arith.constant dense<0.000000e+00> : vector<64xf32>
    %163 = vector.multi_reduction <add>, %162, %cst_74 [1] : vector<64x64xf32> to vector<64xf32>
    %164 = vector.shape_cast %163 : vector<64xf32> to vector<64x1xf32>
    %cst_75 = arith.constant 6.400000e+01 : f32
    %165 = vector.broadcast %cst_75 : f32 to vector<64x1xf32>
    %166 = arith.divf %164, %165 : vector<64x1xf32>
    %167 = vector.broadcast %159 : vector<64x1xf32> to vector<64x64xf32>
    %168 = arith.subf %153, %167 : vector<64x64xf32>
    %cst_76 = arith.constant 9.99999974E-6 : f32
    %169 = vector.broadcast %cst_76 : f32 to vector<64x1xf32>
    %170 = arith.addf %166, %169 : vector<64x1xf32>
    %171 = math.rsqrt %170 : vector<64x1xf32>
    %172 = vector.broadcast %171 : vector<64x1xf32> to vector<64x64xf32>
    %173 = arith.mulf %168, %172 : vector<64x64xf32>
    %174 = vector.broadcast %154 : vector<1x64xf32> to vector<64x64xf32>
    %175 = arith.mulf %173, %174 : vector<64x64xf32>
    %176 = vector.broadcast %155 : vector<1x64xf32> to vector<64x64xf32>
    %177 = arith.addf %175, %176 : vector<64x64xf32>
    %c16_77 = arith.constant 16 : index
    %c0_78 = arith.constant 0 : index
    %178 = vector.load %arg5[%c16_77, %c0_78] : memref<208x256xbf16, #tpu.memory_space<vmem>>, vector<64x192xbf16>
    %179 = arith.truncf %177 : vector<64x64xf32> to vector<64x64xbf16>
    %cst_79 = arith.constant dense<0.000000e+00> : vector<64x192xf32>
    %180 = tpu.matmul %179, %178, %cst_79 {dimension_numbers = #tpu.dot_dimension_numbers<[1], [0], [0], [1], [0, 0, 1, 1], [], []>} : vector<64x64xbf16>, vector<64x192xbf16>, vector<64x192xf32> -> vector<64x192xf32>
    %c30 = arith.constant 30 : index
    %c0_80 = arith.constant 0 : index
    %181 = vector.load %arg2[%c30, %c0_80] : memref<40x256xf32, #tpu.memory_space<vmem>>, vector<1x192xf32>
    %182 = vector.broadcast %181 : vector<1x192xf32> to vector<64x192xf32>
    %183 = arith.addf %180, %182 : vector<64x192xf32>
    %184 = vector.extract_strided_slice %183 {offsets = [0, 0], sizes = [64, 64], strides = [1, 1]} : vector<64x192xf32> to vector<64x64xf32>
    %185 = vector.extract_strided_slice %183 {offsets = [0, 64], sizes = [64, 64], strides = [1, 1]} : vector<64x192xf32> to vector<64x64xf32>
    %186 = arith.truncf %185 : vector<64x64xf32> to vector<64x64xbf16>
    %187 = vector.extract_strided_slice %183 {offsets = [0, 128], sizes = [64, 64], strides = [1, 1]} : vector<64x192xf32> to vector<64x64xf32>
    %188 = arith.truncf %187 : vector<64x64xf32> to vector<64x64xbf16>
    %c480 = arith.constant 480 : index
    %c0_81 = arith.constant 0 : index
    %189 = vector.load %arg4[%c480, %c0_81] : memref<736x64xbf16, #tpu.memory_space<vmem>>, vector<256x64xbf16>
    %190 = tpu.concatenate %186, %186, %186, %186 in 0 : vector<64x64xbf16>, vector<64x64xbf16>, vector<64x64xbf16>, vector<64x64xbf16> -> vector<256x64xbf16>
    %191 = arith.mulf %190, %189 : vector<256x64xbf16>
    %192 = tpu.concatenate %188, %188, %188, %188 in 0 : vector<64x64xbf16>, vector<64x64xbf16>, vector<64x64xbf16>, vector<64x64xbf16> -> vector<256x64xbf16>
    %193 = arith.mulf %192, %189 : vector<256x64xbf16>
    %194 = arith.truncf %184 : vector<64x64xf32> to vector<64x64xbf16>
    %cst_82 = arith.constant dense<0.000000e+00> : vector<64x256xf32>
    %195 = tpu.matmul %194, %191, %cst_82 {dimension_numbers = #tpu.dot_dimension_numbers<[1], [1], [0], [0], [0, 0, 1, 0], [], []>} : vector<64x64xbf16>, vector<256x64xbf16>, vector<64x256xf32> -> vector<64x256xf32>
    %c160 = arith.constant 160 : index
    %c0_83 = arith.constant 0 : index
    %196 = vector.load %arg4[%c160, %c0_83] : memref<736x64xbf16, #tpu.memory_space<vmem>>, vector<64x64xbf16>
    %cst_84 = arith.constant dense<0.000000e+00> : vector<256x64xf32>
    %197 = tpu.matmul %193, %196, %cst_84 {dimension_numbers = #tpu.dot_dimension_numbers<[1], [0], [0], [1], [0, 0, 1, 1], [], []>} : vector<256x64xbf16>, vector<64x64xbf16>, vector<256x64xf32> -> vector<256x64xf32>
    %c200 = arith.constant 200 : index
    %c0_85 = arith.constant 0 : index
    %198 = vector.load %arg3[%c200, %c0_85] : memref<264x64xf32, #tpu.memory_space<vmem>>, vector<64x64xf32>
    %199 = vector.extract_strided_slice %195 {offsets = [0, 0], sizes = [64, 64], strides = [1, 1]} : vector<64x256xf32> to vector<64x64xf32>
    %200 = arith.addf %199, %198 : vector<64x64xf32>
    %cst_86 = arith.constant dense<0xFF800000> : vector<64xf32>
    %201 = vector.multi_reduction <maximumf>, %200, %cst_86 [1] : vector<64x64xf32> to vector<64xf32>
    %202 = vector.shape_cast %201 : vector<64xf32> to vector<64x1xf32>
    %203 = vector.broadcast %202 : vector<64x1xf32> to vector<64x64xf32>
    %204 = arith.subf %200, %203 : vector<64x64xf32>
    %205 = math.exp %204 : vector<64x64xf32>
    %cst_87 = arith.constant dense<0.000000e+00> : vector<64xf32>
    %206 = vector.multi_reduction <add>, %205, %cst_87 [1] : vector<64x64xf32> to vector<64xf32>
    %207 = vector.shape_cast %206 : vector<64xf32> to vector<64x1xf32>
    %208 = tpu.reciprocal %207 {approx = true} : vector<64x1xf32> -> vector<64x1xf32>
    %209 = vector.broadcast %208 : vector<64x1xf32> to vector<64x64xf32>
    %210 = arith.mulf %205, %209 : vector<64x64xf32>
    %211 = vector.extract_strided_slice %195 {offsets = [0, 64], sizes = [64, 64], strides = [1, 1]} : vector<64x256xf32> to vector<64x64xf32>
    %212 = arith.addf %211, %198 : vector<64x64xf32>
    %cst_88 = arith.constant dense<0xFF800000> : vector<64xf32>
    %213 = vector.multi_reduction <maximumf>, %212, %cst_88 [1] : vector<64x64xf32> to vector<64xf32>
    %214 = vector.shape_cast %213 : vector<64xf32> to vector<64x1xf32>
    %215 = vector.broadcast %214 : vector<64x1xf32> to vector<64x64xf32>
    %216 = arith.subf %212, %215 : vector<64x64xf32>
    %217 = math.exp %216 : vector<64x64xf32>
    %cst_89 = arith.constant dense<0.000000e+00> : vector<64xf32>
    %218 = vector.multi_reduction <add>, %217, %cst_89 [1] : vector<64x64xf32> to vector<64xf32>
    %219 = vector.shape_cast %218 : vector<64xf32> to vector<64x1xf32>
    %220 = tpu.reciprocal %219 {approx = true} : vector<64x1xf32> -> vector<64x1xf32>
    %221 = vector.broadcast %220 : vector<64x1xf32> to vector<64x64xf32>
    %222 = arith.mulf %217, %221 : vector<64x64xf32>
    %223 = vector.extract_strided_slice %195 {offsets = [0, 128], sizes = [64, 64], strides = [1, 1]} : vector<64x256xf32> to vector<64x64xf32>
    %224 = arith.addf %223, %198 : vector<64x64xf32>
    %cst_90 = arith.constant dense<0xFF800000> : vector<64xf32>
    %225 = vector.multi_reduction <maximumf>, %224, %cst_90 [1] : vector<64x64xf32> to vector<64xf32>
    %226 = vector.shape_cast %225 : vector<64xf32> to vector<64x1xf32>
    %227 = vector.broadcast %226 : vector<64x1xf32> to vector<64x64xf32>
    %228 = arith.subf %224, %227 : vector<64x64xf32>
    %229 = math.exp %228 : vector<64x64xf32>
    %cst_91 = arith.constant dense<0.000000e+00> : vector<64xf32>
    %230 = vector.multi_reduction <add>, %229, %cst_91 [1] : vector<64x64xf32> to vector<64xf32>
    %231 = vector.shape_cast %230 : vector<64xf32> to vector<64x1xf32>
    %232 = tpu.reciprocal %231 {approx = true} : vector<64x1xf32> -> vector<64x1xf32>
    %233 = vector.broadcast %232 : vector<64x1xf32> to vector<64x64xf32>
    %234 = arith.mulf %229, %233 : vector<64x64xf32>
    %235 = vector.extract_strided_slice %195 {offsets = [0, 192], sizes = [64, 64], strides = [1, 1]} : vector<64x256xf32> to vector<64x64xf32>
    %236 = arith.addf %235, %198 : vector<64x64xf32>
    %cst_92 = arith.constant dense<0xFF800000> : vector<64xf32>
    %237 = vector.multi_reduction <maximumf>, %236, %cst_92 [1] : vector<64x64xf32> to vector<64xf32>
    %238 = vector.shape_cast %237 : vector<64xf32> to vector<64x1xf32>
    %239 = vector.broadcast %238 : vector<64x1xf32> to vector<64x64xf32>
    %240 = arith.subf %236, %239 : vector<64x64xf32>
    %241 = math.exp %240 : vector<64x64xf32>
    %cst_93 = arith.constant dense<0.000000e+00> : vector<64xf32>
    %242 = vector.multi_reduction <add>, %241, %cst_93 [1] : vector<64x64xf32> to vector<64xf32>
    %243 = vector.shape_cast %242 : vector<64xf32> to vector<64x1xf32>
    %244 = tpu.reciprocal %243 {approx = true} : vector<64x1xf32> -> vector<64x1xf32>
    %245 = vector.broadcast %244 : vector<64x1xf32> to vector<64x64xf32>
    %246 = arith.mulf %241, %245 : vector<64x64xf32>
    %247 = tpu.concatenate %210, %222, %234, %246 in 1 : vector<64x64xf32>, vector<64x64xf32>, vector<64x64xf32>, vector<64x64xf32> -> vector<64x256xf32>
    %248 = arith.truncf %197 : vector<256x64xf32> to vector<256x64xbf16>
    %249 = arith.truncf %247 : vector<64x256xf32> to vector<64x256xbf16>
    %cst_94 = arith.constant dense<0.000000e+00> : vector<64x64xf32>
    %250 = tpu.matmul %249, %248, %cst_94 {dimension_numbers = #tpu.dot_dimension_numbers<[1], [0], [0], [1], [0, 0, 1, 1], [], []>} : vector<64x256xbf16>, vector<256x64xbf16>, vector<64x64xf32> -> vector<64x64xf32>
    %251 = arith.addf %153, %250 : vector<64x64xf32>
    %c28 = arith.constant 28 : index
    %c0_95 = arith.constant 0 : index
    %252 = vector.load %arg2[%c28, %c0_95] : memref<40x256xf32, #tpu.memory_space<vmem>>, vector<1x64xf32>
    %253 = vector.broadcast %252 : vector<1x64xf32> to vector<64x64xf32>
    %254 = arith.addf %251, %253 : vector<64x64xf32>
    %c24_96 = arith.constant 24 : index
    %c0_97 = arith.constant 0 : index
    %255 = vector.load %arg2[%c24_96, %c0_97] : memref<40x256xf32, #tpu.memory_space<vmem>>, vector<1x64xf32>
    %c25 = arith.constant 25 : index
    %c0_98 = arith.constant 0 : index
    %256 = vector.load %arg2[%c25, %c0_98] : memref<40x256xf32, #tpu.memory_space<vmem>>, vector<1x64xf32>
    %cst_99 = arith.constant dense<0.000000e+00> : vector<64xf32>
    %257 = vector.multi_reduction <add>, %254, %cst_99 [1] : vector<64x64xf32> to vector<64xf32>
    %258 = vector.shape_cast %257 : vector<64xf32> to vector<64x1xf32>
    %cst_100 = arith.constant 6.400000e+01 : f32
    %259 = vector.broadcast %cst_100 : f32 to vector<64x1xf32>
    %260 = arith.divf %258, %259 : vector<64x1xf32>
    %261 = vector.broadcast %260 : vector<64x1xf32> to vector<64x64xf32>
    %262 = arith.subf %254, %261 : vector<64x64xf32>
    %263 = arith.mulf %262, %262 : vector<64x64xf32>
    %cst_101 = arith.constant dense<0.000000e+00> : vector<64xf32>
    %264 = vector.multi_reduction <add>, %263, %cst_101 [1] : vector<64x64xf32> to vector<64xf32>
    %265 = vector.shape_cast %264 : vector<64xf32> to vector<64x1xf32>
    %cst_102 = arith.constant 6.400000e+01 : f32
    %266 = vector.broadcast %cst_102 : f32 to vector<64x1xf32>
    %267 = arith.divf %265, %266 : vector<64x1xf32>
    %268 = vector.broadcast %260 : vector<64x1xf32> to vector<64x64xf32>
    %269 = arith.subf %254, %268 : vector<64x64xf32>
    %cst_103 = arith.constant 9.99999974E-6 : f32
    %270 = vector.broadcast %cst_103 : f32 to vector<64x1xf32>
    %271 = arith.addf %267, %270 : vector<64x1xf32>
    %272 = math.rsqrt %271 : vector<64x1xf32>
    %273 = vector.broadcast %272 : vector<64x1xf32> to vector<64x64xf32>
    %274 = arith.mulf %269, %273 : vector<64x64xf32>
    %275 = vector.broadcast %255 : vector<1x64xf32> to vector<64x64xf32>
    %276 = arith.mulf %274, %275 : vector<64x64xf32>
    %277 = vector.broadcast %256 : vector<1x64xf32> to vector<64x64xf32>
    %278 = arith.addf %276, %277 : vector<64x64xf32>
    %c80_104 = arith.constant 80 : index
    %c0_105 = arith.constant 0 : index
    %279 = vector.load %arg5[%c80_104, %c0_105] : memref<208x256xbf16, #tpu.memory_space<vmem>>, vector<64x256xbf16>
    %280 = arith.truncf %278 : vector<64x64xf32> to vector<64x64xbf16>
    %cst_106 = arith.constant dense<0.000000e+00> : vector<64x256xf32>
    %281 = tpu.matmul %280, %279, %cst_106 {dimension_numbers = #tpu.dot_dimension_numbers<[1], [0], [0], [1], [0, 0, 1, 1], [], []>} : vector<64x64xbf16>, vector<64x256xbf16>, vector<64x256xf32> -> vector<64x256xf32>
    %c31 = arith.constant 31 : index
    %c0_107 = arith.constant 0 : index
    %282 = vector.load %arg2[%c31, %c0_107] : memref<40x256xf32, #tpu.memory_space<vmem>>, vector<1x256xf32>
    %283 = vector.broadcast %282 : vector<1x256xf32> to vector<64x256xf32>
    %284 = arith.addf %281, %283 : vector<64x256xf32>
    %285 = arith.mulf %284, %284 : vector<64x256xf32>
    %286 = arith.mulf %284, %285 : vector<64x256xf32>
    %cst_108 = arith.constant 4.471500e-02 : f32
    %287 = vector.broadcast %cst_108 : f32 to vector<64x256xf32>
    %288 = arith.mulf %287, %286 : vector<64x256xf32>
    %289 = arith.addf %284, %288 : vector<64x256xf32>
    %cst_109 = arith.constant 0.797884583 : f32
    %290 = vector.broadcast %cst_109 : f32 to vector<64x256xf32>
    %291 = arith.mulf %290, %289 : vector<64x256xf32>
    %292 = math.tanh %291 : vector<64x256xf32>
    %cst_110 = arith.constant 1.000000e+00 : f32
    %293 = vector.broadcast %cst_110 : f32 to vector<64x256xf32>
    %294 = arith.addf %293, %292 : vector<64x256xf32>
    %cst_111 = arith.constant 5.000000e-01 : f32
    %295 = vector.broadcast %cst_111 : f32 to vector<64x256xf32>
    %296 = arith.mulf %295, %294 : vector<64x256xf32>
    %297 = arith.mulf %284, %296 : vector<64x256xf32>
    %c224 = arith.constant 224 : index
    %c0_112 = arith.constant 0 : index
    %298 = vector.load %arg4[%c224, %c0_112] : memref<736x64xbf16, #tpu.memory_space<vmem>>, vector<256x64xbf16>
    %299 = arith.truncf %297 : vector<64x256xf32> to vector<64x256xbf16>
    %cst_113 = arith.constant dense<0.000000e+00> : vector<64x64xf32>
    %300 = tpu.matmul %299, %298, %cst_113 {dimension_numbers = #tpu.dot_dimension_numbers<[1], [0], [0], [1], [0, 0, 1, 1], [], []>} : vector<64x256xbf16>, vector<256x64xbf16>, vector<64x64xf32> -> vector<64x64xf32>
    %301 = arith.addf %254, %300 : vector<64x64xf32>
    %c29 = arith.constant 29 : index
    %c0_114 = arith.constant 0 : index
    %302 = vector.load %arg2[%c29, %c0_114] : memref<40x256xf32, #tpu.memory_space<vmem>>, vector<1x64xf32>
    %303 = vector.broadcast %302 : vector<1x64xf32> to vector<64x64xf32>
    %304 = arith.addf %301, %303 : vector<64x64xf32>
    %c26 = arith.constant 26 : index
    %c0_115 = arith.constant 0 : index
    %305 = vector.load %arg2[%c26, %c0_115] : memref<40x256xf32, #tpu.memory_space<vmem>>, vector<1x64xf32>
    %c27 = arith.constant 27 : index
    %c0_116 = arith.constant 0 : index
    %306 = vector.load %arg2[%c27, %c0_116] : memref<40x256xf32, #tpu.memory_space<vmem>>, vector<1x64xf32>
    %cst_117 = arith.constant dense<0.000000e+00> : vector<64xf32>
    %307 = vector.multi_reduction <add>, %304, %cst_117 [1] : vector<64x64xf32> to vector<64xf32>
    %308 = vector.shape_cast %307 : vector<64xf32> to vector<64x1xf32>
    %cst_118 = arith.constant 6.400000e+01 : f32
    %309 = vector.broadcast %cst_118 : f32 to vector<64x1xf32>
    %310 = arith.divf %308, %309 : vector<64x1xf32>
    %311 = vector.broadcast %310 : vector<64x1xf32> to vector<64x64xf32>
    %312 = arith.subf %304, %311 : vector<64x64xf32>
    %313 = arith.mulf %312, %312 : vector<64x64xf32>
    %cst_119 = arith.constant dense<0.000000e+00> : vector<64xf32>
    %314 = vector.multi_reduction <add>, %313, %cst_119 [1] : vector<64x64xf32> to vector<64xf32>
    %315 = vector.shape_cast %314 : vector<64xf32> to vector<64x1xf32>
    %cst_120 = arith.constant 6.400000e+01 : f32
    %316 = vector.broadcast %cst_120 : f32 to vector<64x1xf32>
    %317 = arith.divf %315, %316 : vector<64x1xf32>
    %318 = vector.broadcast %310 : vector<64x1xf32> to vector<64x64xf32>
    %319 = arith.subf %304, %318 : vector<64x64xf32>
    %cst_121 = arith.constant 9.99999974E-6 : f32
    %320 = vector.broadcast %cst_121 : f32 to vector<64x1xf32>
    %321 = arith.addf %317, %320 : vector<64x1xf32>
    %322 = math.rsqrt %321 : vector<64x1xf32>
    %323 = vector.broadcast %322 : vector<64x1xf32> to vector<64x64xf32>
    %324 = arith.mulf %319, %323 : vector<64x64xf32>
    %325 = vector.broadcast %305 : vector<1x64xf32> to vector<64x64xf32>
    %326 = arith.mulf %324, %325 : vector<64x64xf32>
    %327 = vector.broadcast %306 : vector<1x64xf32> to vector<64x64xf32>
    %328 = arith.addf %326, %327 : vector<64x64xf32>
    %c192 = arith.constant 192 : index
    %c0_122 = arith.constant 0 : index
    %329 = vector.load %arg3[%c192, %c0_122] : memref<264x64xf32, #tpu.memory_space<vmem>>, vector<8x64xf32>
    %cst_123 = arith.constant dense<0.000000e+00> : vector<8x64xf32>
    %330 = tpu.matmul %329, %328, %cst_123 {dimension_numbers = #tpu.dot_dimension_numbers<[1], [0], [0], [1], [0, 0, 1, 1], [], []>} : vector<8x64xf32>, vector<64x64xf32>, vector<8x64xf32> -> vector<8x64xf32>
    %c144_124 = arith.constant 144 : index
    %c0_125 = arith.constant 0 : index
    %331 = vector.load %arg5[%c144_124, %c0_125] : memref<208x256xbf16, #tpu.memory_space<vmem>>, vector<64x128xbf16>
    %332 = arith.truncf %330 : vector<8x64xf32> to vector<8x64xbf16>
    %cst_126 = arith.constant dense<0.000000e+00> : vector<8x128xf32>
    %333 = tpu.matmul %332, %331, %cst_126 {dimension_numbers = #tpu.dot_dimension_numbers<[1], [0], [0], [1], [0, 0, 1, 1], [], []>} : vector<8x64xbf16>, vector<64x128xbf16>, vector<8x128xf32> -> vector<8x128xf32>
    %c32_127 = arith.constant 32 : index
    %c0_128 = arith.constant 0 : index
    %334 = vector.load %arg2[%c32_127, %c0_128] : memref<40x256xf32, #tpu.memory_space<vmem>>, vector<1x128xf32>
    %335 = vector.broadcast %334 : vector<1x128xf32> to vector<8x128xf32>
    %336 = arith.addf %333, %335 : vector<8x128xf32>
    %c0_129 = arith.constant 0 : index
    %c0_130 = arith.constant 0 : index
    %337 = vector.load %arg6[%c0_129, %c0_130] : memref<8x128xf32, #tpu.memory_space<vmem>>, vector<8x128xf32>
    tpu.vector_store %arg6[%c0_129, %c0_130], %336 {strides = array<i32>} : memref<8x128xf32, #tpu.memory_space<vmem>>, vector<8x128xf32>,
    return
  }
  func.func @transform_0(%arg0: i32) -> (i32, i32) {
    %c0_i32 = arith.constant 0 : i32
    %c0_i32_0 = arith.constant 0 : i32
    %c0_i32_1 = arith.constant 0 : i32
    return %c0_i32, %c0_i32_0 : i32, i32
  }
  func.func @transform_1(%arg0: i32) -> (i32, i32) {
    %c0_i32 = arith.constant 0 : i32
    %c0_i32_0 = arith.constant 0 : i32
    %c0_i32_1 = arith.constant 0 : i32
    return %c0_i32, %c0_i32_0 : i32, i32
  }
  func.func @transform_2(%arg0: i32) -> (i32, i32) {
    %c0_i32 = arith.constant 0 : i32
    %c0_i32_0 = arith.constant 0 : i32
    %c0_i32_1 = arith.constant 0 : i32
    return %c0_i32, %c0_i32_0 : i32, i32
  }
  func.func @transform_3(%arg0: i32) -> (i32, i32) {
    %c0_i32 = arith.constant 0 : i32
    %c0_i32_0 = arith.constant 0 : i32
    %c0_i32_1 = arith.constant 0 : i32
    return %c0_i32, %c0_i32_0 : i32, i32
  }
  func.func @transform_4(%arg0: i32) -> (i32, i32) {
    %c0_i32 = arith.constant 0 : i32
    %c0_i32_0 = arith.constant 0 : i32
    %c0_i32_1 = arith.constant 0 : i32
    return %c0_i32, %c0_i32_0 : i32, i32
  }
  func.func @transform_5(%arg0: i32) -> (i32, i32) {
    %c0_i32 = arith.constant 0 : i32
    %c0_i32_0 = arith.constant 0 : i32
    %c0_i32_1 = arith.constant 0 : i32
    return %c0_i32, %c0_i32_0 : i32, i32
  }
}

</mosaic_0001>

<llo_original>
// kernel: offline_rl_policy_forward.1
$region0: #{offline_rl_policy_forward.1}
  #allocation0 [shape = 'u32[]', space=smem, size = 0x4, offset = 0x4, fixed_abs, tag = 'smem constant byte address 0x4 - core index']
  #allocation1 [shape = 'u32[72,128]{1,0:T(1,128)}', space=vmem, size = 0x9000, scoped, tag = 'internal scratch']
  %s0 = inlined_call_operand.vmem [shape: f32[8,128], index: 0, kind: input, shape index: {}]
  %s1 = inlined_call_operand.vmem [shape: f32[40,256], index: 1, kind: input, shape index: {}]
  %s2 = inlined_call_operand.vmem [shape: f32[264,64], index: 2, kind: input, shape index: {}]
  %s3 = inlined_call_operand.vmem [shape: bf16[736,64], index: 3, kind: input, shape index: {}]
  %s4 = inlined_call_operand.vmem [shape: bf16[208,256], index: 4, kind: input, shape index: {}]
  %s5 = inlined_call_operand.vmem [shape: f32[8,128], index: 5, kind: output, shape index: {}]
  %s6 = sld [smem:[#allocation0]]
  $region30: #{offline_rl_policy_forward.1} parent=0
    _
  %s8 = ssub.s32 1, %s6
  %s9 = scalar_select 0, %s8, %s6
  // Predicated region
  $region2: #{offline_rl_policy_forward.1} parent=0 // pred_check
    _
  $region3: #{offline_rl_policy_forward.1} parent=0 // pred_check_branch
    %11 = sbr.rel (0) target = $region5
  $region4: #{offline_rl_policy_forward.1} parent=0 // pred_region
    _
  $region5: #{offline_rl_policy_forward.1} parent=0 // pred_fallthru
    _
  // Predicated region
  $region6: #{offline_rl_policy_forward.1} parent=0 // pred_check
    _
  $region7: #{offline_rl_policy_forward.1} parent=0 // pred_check_branch
    %13 = sbr.rel (0) target = $region9
  $region8: #{offline_rl_policy_forward.1} parent=0 // pred_region
    _
  $region9: #{offline_rl_policy_forward.1} parent=0 // pred_fallthru
    _
  // Predicated region
  $region10: #{offline_rl_policy_forward.1} parent=0 // pred_check
    _
  $region11: #{offline_rl_policy_forward.1} parent=0 // pred_check_branch
    %15 = sbr.rel (0) target = $region13
  $region12: #{offline_rl_policy_forward.1} parent=0 // pred_region
    _
  $region13: #{offline_rl_policy_forward.1} parent=0 // pred_fallthru
    _
  // Predicated region
  $region14: #{offline_rl_policy_forward.1} parent=0 // pred_check
    _
  $region15: #{offline_rl_policy_forward.1} parent=0 // pred_check_branch
    %17 = sbr.rel (0) target = $region17
  $region16: #{offline_rl_policy_forward.1} parent=0 // pred_region
    _
  $region17: #{offline_rl_policy_forward.1} parent=0 // pred_fallthru
    _
  // Predicated region
  $region18: #{offline_rl_policy_forward.1} parent=0 // pred_check
    _
  $region19: #{offline_rl_policy_forward.1} parent=0 // pred_check_branch
    %19 = sbr.rel (0) target = $region21
  $region20: #{offline_rl_policy_forward.1} parent=0 // pred_region
    _
  $region21: #{offline_rl_policy_forward.1} parent=0 // pred_fallthru
    _
  %v21 = vld [vmem:[%s0] sm:$0xff]
  %v22 = vcvt.f32.s32.to.zero.pseudo %v21
  %v23 = vlaneseq
  %v24 = vand.u32 %v23, 127
  %25 = vset.pattern.permute.xlu0 50
  %26 = vperm.xlu0 %25, %v22
  %v27 = vpop.permute.xlu0 %26
  %vm28 = vcmp.eq.s32.totalorder %v24, %v27
  %v29 = vsel %vm28, 1, 0
  %v30 = vcvt.s32.f32 %v29
  %v31 = vld [vmem:[%s2] sm:$0xff]
  %v32 = vld [vmem:[%s2 + $0x8] sm:$0xff]
  %v33 = vld [vmem:[%s2 + $0x10] sm:$0xff]
  %v34 = vld [vmem:[%s2 + $0x18] sm:$0xff]
  %v35 = vld [vmem:[%s2 + $0x20] sm:$0xff]
  %v36 = vld [vmem:[%s2 + $0x28] sm:$0xff]
  %v37 = vld [vmem:[%s2 + $0x30] sm:$0xff]
  %v38 = vld [vmem:[%s2 + $0x38] sm:$0xff]
  %v39 = vld [vmem:[%s2 + $0x40] sm:$0xff]
  %v40 = vld [vmem:[%s2 + $0x48] sm:$0xff]
  %v41 = vld [vmem:[%s2 + $0x50] sm:$0xff]
  %v42 = vld [vmem:[%s2 + $0x58] sm:$0xff]
  %v43 = vld [vmem:[%s2 + $0x60] sm:$0xff]
  %v44 = vld [vmem:[%s2 + $0x68] sm:$0xff]
  %v45 = vld [vmem:[%s2 + $0x70] sm:$0xff]
  %v46 = vld [vmem:[%s2 + $0x78] sm:$0xff]
  %47 = vmatpush.msra.mxu0 %v46
  %48 = vmatpush.msra.mxu0 %v45
  %49 = vmatpush.msra.mxu0 %v44
  %50 = vmatpush.msra.mxu0 %v43
  %51 = vmatpush.msra.mxu0 %v42
  %52 = vmatpush.msra.mxu0 %v41
  %53 = vmatpush.msra.mxu0 %v40
  %54 = vmatpush.msra.mxu0 %v39
  %55 = vmatpush.msra.mxu0 %v38
  %56 = vmatpush.msra.mxu0 %v37
  %57 = vmatpush.msra.mxu0 %v36
  %58 = vmatpush.msra.mxu0 %v35
  %59 = vmatpush.msra.mxu0 %v34
  %60 = vmatpush.msra.mxu0 %v33
  %61 = vmatpush.msra.mxu0 %v32
  %62 = vmatpush.msra.mxu0 %v31
  %63 = vmatmul.f32.gmra.mxu0 %v30
  %v64 = vpop.f32.mrf.mxu0
  %v65 = vadd.f32 0.0, %v64
  %66 = vdwg.mxu0
  %v67 = vld [vmem:[%s1] ss:$0 sm:$0xff]
  %69 = vset.pattern.permute.xlu0 48
  %70 = vperm.xlu0 %69, %v21
  %v71 = vpop.permute.xlu0 %70
  %v73 = vmul.f32 %v71, %v67
  %v74 = vld [vmem:[%s1 + $0x1] ss:$0 sm:$0xff]
  %v75 = vadd.f32 %v73, %v74
  %v76 = vadd.f32 %v75, %v65
  %v77 = vld [vmem:[%s1 + $0x2] ss:$0 sm:$0xff]
  %78 = vset.pattern.permute.xlu0 49
  %79 = vperm.xlu0 %78, %v21
  %v80 = vpop.permute.xlu0 %79
  %v82 = vmul.f32 %v80, %v77
  %v83 = vld [vmem:[%s1 + $0x3] ss:$0 sm:$0xff]
  %v84 = vadd.f32 %v82, %v83
  %v85 = vadd.f32 %v84, %v65
  %v86 = vld [vmem:[%s1 + $0x14] ss:$0 sm:$0xff]
  %87 = vset.pattern.permute.xlu0 5
  %88 = vperm.xlu0 %87, %v21
  %v89 = vpop.permute.xlu0 %88
  %v91 = vmul.f32 %v89, %v86
  %v92 = vld [vmem:[%s1 + $0x20] ss:$0 sm:$0xff]
  %v93 = vadd.f32 %v91, %v92
  %v94 = vmax.f32 %v93, 0.0
  %v95 = vld [vmem:[%s1 + $0x15] ss:$0 sm:$0xff]
  %96 = vset.pattern.permute.xlu0 13
  %97 = vperm.xlu0 %96, %v21
  %v98 = vpop.permute.xlu0 %97
  %v100 = vmul.f32 %v98, %v95
  %v101 = vld [vmem:[%s1 + $0x21] ss:$0 sm:$0xff]
  %v102 = vadd.f32 %v100, %v101
  %v103 = vmax.f32 %v102, 0.0
  %v104 = vld [vmem:[%s4] sm:$0xf]
  %v105 = vpack.c.bf16 %v21, %v21
  %v106 = vld [vmem:[%s1 + $0x12] ss:$0 sm:$0xff]
  %108 = vrot.lane.b32.xlu0 %v105, 112
  %v109 = vpop.permute.xlu0 %108
  %vm110 = vcmask 64512
  %v112 = vsel %vm110, %v109, 0
  %vm114 = vcmask 1043456
  %v116 = vsel %vm114, %v104, 0
  %118 = vmatpush.bf16.msra.mxu0 0
  %119 = vmatpush.bf16.msra.mxu0 0
  %120 = vmatpush.bf16.msra.mxu0 0
  %121 = vmatpush.bf16.msra.mxu0 0
  %122 = vmatpush.bf16.msra.mxu0 0
  %123 = vmatpush.bf16.msra.mxu0 0
  %124 = vmatpush.bf16.msra.mxu0 0
  %125 = vmatpush.bf16.msra.mxu0 %v116
  %126 = vmatmul.bf16.gmra.mxu0 %v112
  %v127 = vpop.f32.mrf.mxu0
  %v128 = vadd.f32 %v106, %v127
  %v129 = vpop.f32.mrf.mxu0
  %130 = vdwg.mxu0
  %v131 = vmax.f32 %v128, 0.0
  %v132 = vld [vmem:[%s4 + $0x8] sm:$0xf]
  %v133 = vld [vmem:[%s1 + $0x13] ss:$0 sm:$0xff]
  %134 = vrot.lane.b32.xlu0 %v105, 104
  %v135 = vpop.permute.xlu0 %134
  %v137 = vsel %vm110, %v135, 0
  %v140 = vsel %vm114, %v132, 0
  %142 = vmatpush.bf16.msra.mxu0 0
  %143 = vmatpush.bf16.msra.mxu0 0
  %144 = vmatpush.bf16.msra.mxu0 0
  %145 = vmatpush.bf16.msra.mxu0 0
  %146 = vmatpush.bf16.msra.mxu0 0
  %147 = vmatpush.bf16.msra.mxu0 0
  %148 = vmatpush.bf16.msra.mxu0 0
  %149 = vmatpush.bf16.msra.mxu0 %v140
  %150 = vmatmul.bf16.gmra.mxu0 %v137
  %v151 = vpop.f32.mrf.mxu0
  %v152 = vadd.f32 %v133, %v151
  %v153 = vpop.f32.mrf.mxu0
  %154 = vdwg.mxu0
  %v155 = vmax.f32 %v152, 0.0
  %v156 = vld [vmem:[%s1 + $0x16] ss:$0 sm:$0xff]
  %157 = vset.pattern.permute.xlu0 37
  %158 = vperm.xlu0 %157, %v21
  %v159 = vpop.permute.xlu0 %158
  %v161 = vmul.f32 %v159, %v156
  %v162 = vld [vmem:[%s1 + $0x22] ss:$0 sm:$0xff]
  %v163 = vadd.f32 %v161, %v162
  %v164 = vmax.f32 %v163, 0.0
  %v165 = vld [vmem:[%s1 + $0x17] ss:$0 sm:$0xff]
  %166 = vset.pattern.permute.xlu0 45
  %167 = vperm.xlu0 %166, %v21
  %v168 = vpop.permute.xlu0 %167
  %v170 = vmul.f32 %v168, %v165
  %v171 = vld [vmem:[%s1 + $0x23] ss:$0 sm:$0xff]
  %v172 = vadd.f32 %v170, %v171
  %v173 = vmax.f32 %v172, 0.0
  %v174 = vld [vmem:[%s3] sm:$0xf]
  %v175 = vld [vmem:[%s3 + $0x4] sm:$0xf]
  %v176 = vpack.c.bf16 %v94, %v94
  %v177 = vld [vmem:[%s1 + $0x4] ss:$0 sm:$0xff]
  %v180 = vunpack.c.l.b16 %v174
  %v181 = vunpack.c.l.b16 %v175
  %v182 = vpack.c.b16 %v181, %v180
  %vm184 = vcmask 130048
  %v186 = vsel %vm184, %v176, 0
  %188 = vmatpush.bf16.msra.mxu0 0
  %189 = vmatpush.bf16.msra.mxu0 0
  %190 = vmatpush.bf16.msra.mxu0 0
  %191 = vmatpush.bf16.msra.mxu0 0
  %192 = vmatpush.bf16.msra.mxu0 0
  %193 = vmatpush.bf16.msra.mxu0 0
  %194 = vmatpush.bf16.msra.mxu0 0
  %195 = vmatpush.bf16.msra.mxu0 %v182
  %196 = vmatmul.bf16.gmra.mxu0 %v186
  %v197 = vpop.f32.mrf.mxu0
  %v198 = vadd.f32 %v177, %v197
  %v199 = vpop.f32.mrf.mxu0
  %200 = vdwg.mxu0
  %v201 = vadd.f32 %v198, %v65
  %v202 = vld [vmem:[%s3 + $0x8] sm:$0xf]
  %v203 = vld [vmem:[%s3 + $0xc] sm:$0xf]
  %v204 = vpack.c.bf16 %v103, %v103
  %v205 = vld [vmem:[%s1 + $0x5] ss:$0 sm:$0xff]
  %v208 = vunpack.c.l.b16 %v202
  %v209 = vunpack.c.l.b16 %v203
  %v210 = vpack.c.b16 %v209, %v208
  %v213 = vsel %vm184, %v204, 0
  %215 = vmatpush.bf16.msra.mxu0 0
  %216 = vmatpush.bf16.msra.mxu0 0
  %217 = vmatpush.bf16.msra.mxu0 0
  %218 = vmatpush.bf16.msra.mxu0 0
  %219 = vmatpush.bf16.msra.mxu0 0
  %220 = vmatpush.bf16.msra.mxu0 0
  %221 = vmatpush.bf16.msra.mxu0 0
  %222 = vmatpush.bf16.msra.mxu0 %v210
  %223 = vmatmul.bf16.gmra.mxu0 %v213
  %v224 = vpop.f32.mrf.mxu0
  %v225 = vadd.f32 %v205, %v224
  %v226 = vpop.f32.mrf.mxu0
  %227 = vdwg.mxu0
  %v228 = vadd.f32 %v225, %v65
  %v229 = vld [vmem:[%s3 + $0x10] sm:$0xf]
  %v230 = vld [vmem:[%s3 + $0x14] sm:$0xf]
  %v231 = vld [vmem:[%s3 + $0x18] sm:$0xf]
  %v232 = vld [vmem:[%s3 + $0x1c] sm:$0xf]
  %v233 = vld [vmem:[%s3 + $0x20] sm:$0xf]
  %v234 = vld [vmem:[%s3 + $0x24] sm:$0xf]
  %v235 = vpack.c.bf16 %v131, %v131
  %v236 = vld [vmem:[%s1 + $0x6] ss:$0 sm:$0xff]
  %v243 = vunpack.c.l.b16 %v229
  %v244 = vunpack.c.l.b16 %v230
  %v245 = vunpack.c.l.b16 %v231
  %v246 = vunpack.c.l.b16 %v232
  %v247 = vunpack.c.l.b16 %v233
  %v248 = vunpack.c.l.b16 %v234
  %v249 = vpack.c.b16 %v244, %v243
  %v250 = vpack.c.b16 %v246, %v245
  %v251 = vpack.c.b16 %v248, %v247
  %vm255 = vcmask 392192
  %v257 = vsel %vm255, %v235, 0
  %259 = vmatpush.bf16.msra.mxu0 0
  %260 = vmatpush.bf16.msra.mxu0 0
  %261 = vmatpush.bf16.msra.mxu0 0
  %262 = vmatpush.bf16.msra.mxu0 0
  %263 = vmatpush.bf16.msra.mxu0 0
  %264 = vmatpush.bf16.msra.mxu0 %v251
  %265 = vmatpush.bf16.msra.mxu0 %v250
  %266 = vmatpush.bf16.msra.mxu0 %v249
  %267 = vmatmul.bf16.gmra.mxu0 %v257
  %v268 = vpop.f32.mrf.mxu0
  %v269 = vadd.f32 %v236, %v268
  %v270 = vpop.f32.mrf.mxu0
  %271 = vdwg.mxu0
  %v272 = vadd.f32 %v269, %v65
  %v273 = vld [vmem:[%s3 + $0x28] sm:$0xf]
  %v274 = vld [vmem:[%s3 + $0x2c] sm:$0xf]
  %v275 = vld [vmem:[%s3 + $0x30] sm:$0xf]
  %v276 = vld [vmem:[%s3 + $0x34] sm:$0xf]
  %v277 = vld [vmem:[%s3 + $0x38] sm:$0xf]
  %v278 = vld [vmem:[%s3 + $0x3c] sm:$0xf]
  %v279 = vpack.c.bf16 %v155, %v155
  %v280 = vld [vmem:[%s1 + $0x7] ss:$0 sm:$0xff]
  %v287 = vunpack.c.l.b16 %v273
  %v288 = vunpack.c.l.b16 %v274
  %v289 = vunpack.c.l.b16 %v275
  %v290 = vunpack.c.l.b16 %v276
  %v291 = vunpack.c.l.b16 %v277
  %v292 = vunpack.c.l.b16 %v278
  %v293 = vpack.c.b16 %v288, %v287
  %v294 = vpack.c.b16 %v290, %v289
  %v295 = vpack.c.b16 %v292, %v291
  %v300 = vsel %vm255, %v279, 0
  %302 = vmatpush.bf16.msra.mxu0 0
  %303 = vmatpush.bf16.msra.mxu0 0
  %304 = vmatpush.bf16.msra.mxu0 0
  %305 = vmatpush.bf16.msra.mxu0 0
  %306 = vmatpush.bf16.msra.mxu0 0
  %307 = vmatpush.bf16.msra.mxu0 %v295
  %308 = vmatpush.bf16.msra.mxu0 %v294
  %309 = vmatpush.bf16.msra.mxu0 %v293
  %310 = vmatmul.bf16.gmra.mxu0 %v300
  %v311 = vpop.f32.mrf.mxu0
  %v312 = vadd.f32 %v280, %v311
  %v313 = vpop.f32.mrf.mxu0
  %314 = vdwg.mxu0
  %v315 = vadd.f32 %v312, %v65
  %v316 = vld [vmem:[%s3 + $0x40] sm:$0xf]
  %v317 = vld [vmem:[%s3 + $0x44] sm:$0xf]
  %v318 = vpack.c.bf16 %v164, %v164
  %v319 = vld [vmem:[%s1 + $0x10] ss:$0 sm:$0xff]
  %v322 = vunpack.c.l.b16 %v316
  %v323 = vunpack.c.l.b16 %v317
  %v324 = vpack.c.b16 %v323, %v322
  %v327 = vsel %vm184, %v318, 0
  %329 = vmatpush.bf16.msra.mxu0 0
  %330 = vmatpush.bf16.msra.mxu0 0
  %331 = vmatpush.bf16.msra.mxu0 0
  %332 = vmatpush.bf16.msra.mxu0 0
  %333 = vmatpush.bf16.msra.mxu0 0
  %334 = vmatpush.bf16.msra.mxu0 0
  %335 = vmatpush.bf16.msra.mxu0 0
  %336 = vmatpush.bf16.msra.mxu0 %v324
  %337 = vmatmul.bf16.gmra.mxu0 %v327
  %v338 = vpop.f32.mrf.mxu0
  %v339 = vadd.f32 %v319, %v338
  %v340 = vpop.f32.mrf.mxu0
  %341 = vdwg.mxu0
  %v342 = vadd.f32 %v339, %v65
  %v343 = vld [vmem:[%s3 + $0x48] sm:$0xf]
  %v344 = vld [vmem:[%s3 + $0x4c] sm:$0xf]
  %v345 = vpack.c.bf16 %v173, %v173
  %v346 = vld [vmem:[%s1 + $0x11] ss:$0 sm:$0xff]
  %v349 = vunpack.c.l.b16 %v343
  %v350 = vunpack.c.l.b16 %v344
  %v351 = vpack.c.b16 %v350, %v349
  %v354 = vsel %vm184, %v345, 0
  %356 = vmatpush.bf16.msra.mxu0 0
  %357 = vmatpush.bf16.msra.mxu0 0
  %358 = vmatpush.bf16.msra.mxu0 0
  %359 = vmatpush.bf16.msra.mxu0 0
  %360 = vmatpush.bf16.msra.mxu0 0
  %361 = vmatpush.bf16.msra.mxu0 0
  %362 = vmatpush.bf16.msra.mxu0 0
  %363 = vmatpush.bf16.msra.mxu0 %v351
  %364 = vmatmul.bf16.gmra.mxu0 %v354
  %v365 = vpop.f32.mrf.mxu0
  %v366 = vadd.f32 %v346, %v365
  %v367 = vpop.f32.mrf.mxu0
  %368 = vdwg.mxu0
  %v369 = vadd.f32 %v366, %v65
  %v370 = vld [vmem:[%s2 + $0x80] sm:$0xff]
  %v371 = vld [vmem:[%s2 + $0x88] sm:$0xff]
  %v372 = vld [vmem:[%s2 + $0x90] sm:$0xff]
  %v373 = vld [vmem:[%s2 + $0x98] sm:$0xff]
  %v374 = vld [vmem:[%s2 + $0xa0] sm:$0xff]
  %v375 = vld [vmem:[%s2 + $0xa8] sm:$0xff]
  %v376 = vld [vmem:[%s2 + $0xb0] sm:$0xff]
  %v377 = vld [vmem:[%s2 + $0xb8] sm:$0xff]
  %vm378 = vcmask 523264
  %v380 = vsel %vm378, %v370, 0
  %v383 = vsel %vm378, %v371, 0
  %v386 = vsel %vm378, %v372, 0
  %v389 = vsel %vm378, %v373, 0
  %v392 = vsel %vm378, %v374, 0
  %v395 = vsel %vm378, %v375, 0
  %v398 = vsel %vm378, %v376, 0
  %v401 = vsel %vm378, %v377, 0
  %403 = vmatpush.msra.mxu0 0.0
  %404 = vmatpush.msra.mxu0 0.0
  %405 = vmatpush.msra.mxu0 0.0
  %406 = vmatpush.msra.mxu0 0.0
  %407 = vmatpush.msra.mxu0 0.0
  %408 = vmatpush.msra.mxu0 0.0
  %409 = vmatpush.msra.mxu0 0.0
  %410 = vmatpush.msra.mxu0 0.0
  %411 = vmatpush.msra.mxu0 %v85
  %412 = vmatpush.msra.mxu0 %v369
  %413 = vmatpush.msra.mxu0 %v342
  %414 = vmatpush.msra.mxu0 %v315
  %415 = vmatpush.msra.mxu0 %v272
  %416 = vmatpush.msra.mxu0 %v228
  %417 = vmatpush.msra.mxu0 %v201
  %418 = vmatpush.msra.mxu0 %v76
  %419 = vmatmul.f32.gmra.mxu0 %v380
  %v420 = vpop.f32.mrf.mxu0
  %v421 = vadd.f32 0.0, %v420
  %422 = vmatmul.f32.gmra.mxu0 %v383
  %v423 = vpop.f32.mrf.mxu0
  %v424 = vadd.f32 0.0, %v423
  %425 = vmatmul.f32.gmra.mxu0 %v386
  %v426 = vpop.f32.mrf.mxu0
  %v427 = vadd.f32 0.0, %v426
  %428 = vmatmul.f32.gmra.mxu0 %v389
  %v429 = vpop.f32.mrf.mxu0
  %v430 = vadd.f32 0.0, %v429
  %431 = vmatmul.f32.gmra.mxu0 %v392
  %v432 = vpop.f32.mrf.mxu0
  %v433 = vadd.f32 0.0, %v432
  %434 = vmatmul.f32.gmra.mxu0 %v395
  %v435 = vpop.f32.mrf.mxu0
  %v436 = vadd.f32 0.0, %v435
  %437 = vmatmul.f32.gmra.mxu0 %v398
  %v438 = vpop.f32.mrf.mxu0
  %v439 = vadd.f32 0.0, %v438
  %440 = vmatmul.f32.gmra.mxu0 %v401
  %v441 = vpop.f32.mrf.mxu0
  %v442 = vadd.f32 0.0, %v441
  %443 = vdwg.mxu0
  %v444 = vld [vmem:[%s1 + $0x24] ss:$0 sm:$0xff]
  %v445 = vld [vmem:[%s1 + $0x25] ss:$0 sm:$0xff]
  %v446 = vsel %vm378, %v421, 0.0
  %447 = vadd.xlane.f32.xlu0 %v446
  %v448 = vpop.xlane.xlu0 %447
  %v449 = vsel %vm378, %v424, 0.0
  %450 = vadd.xlane.f32.xlu0 %v449
  %v451 = vpop.xlane.xlu0 %450
  %v452 = vsel %vm378, %v427, 0.0
  %453 = vadd.xlane.f32.xlu0 %v452
  %v454 = vpop.xlane.xlu0 %453
  %v455 = vsel %vm378, %v430, 0.0
  %456 = vadd.xlane.f32.xlu0 %v455
  %v457 = vpop.xlane.xlu0 %456
  %v458 = vsel %vm378, %v433, 0.0
  %459 = vadd.xlane.f32.xlu0 %v458
  %v460 = vpop.xlane.xlu0 %459
  %v461 = vsel %vm378, %v436, 0.0
  %462 = vadd.xlane.f32.xlu0 %v461
  %v463 = vpop.xlane.xlu0 %462
  %v464 = vsel %vm378, %v439, 0.0
  %465 = vadd.xlane.f32.xlu0 %v464
  %v466 = vpop.xlane.xlu0 %465
  %v467 = vsel %vm378, %v442, 0.0
  %468 = vadd.xlane.f32.xlu0 %v467
  %v469 = vpop.xlane.xlu0 %468
  %v470 = vrcp.pop 64.0
  %v471 = vmul.f32 64.0, %v470
  %v472 = vsub.f32 1.0, %v471
  %v473 = vmul.f32 %v470, %v472
  %v474 = vadd.f32 %v470, %v473
  %vm475 = vweird.f32 %v470
  %v476 = vsel %vm475, %v470, %v474
  %v477 = vmul.f32 %v448, %v476
  %v478 = vmul.f32 %v451, %v476
  %v479 = vmul.f32 %v454, %v476
  %v480 = vmul.f32 %v457, %v476
  %v481 = vmul.f32 %v460, %v476
  %v482 = vmul.f32 %v463, %v476
  %v483 = vmul.f32 %v466, %v476
  %v484 = vmul.f32 %v469, %v476
  %v485 = vsub.f32 %v421, %v477
  %v486 = vsub.f32 %v424, %v478
  %v487 = vsub.f32 %v427, %v479
  %v488 = vsub.f32 %v430, %v480
  %v489 = vsub.f32 %v433, %v481
  %v490 = vsub.f32 %v436, %v482
  %v491 = vsub.f32 %v439, %v483
  %v492 = vsub.f32 %v442, %v484
  %v493 = vmul.f32 %v485, %v485
  %v494 = vmul.f32 %v486, %v486
  %v495 = vmul.f32 %v487, %v487
  %v496 = vmul.f32 %v488, %v488
  %v497 = vmul.f32 %v489, %v489
  %v498 = vmul.f32 %v490, %v490
  %v499 = vmul.f32 %v491, %v491
  %v500 = vmul.f32 %v492, %v492
  %v501 = vsel %vm378, %v493, 0.0
  %502 = vadd.xlane.f32.xlu0 %v501
  %v503 = vpop.xlane.xlu0 %502
  %v504 = vsel %vm378, %v494, 0.0
  %505 = vadd.xlane.f32.xlu0 %v504
  %v506 = vpop.xlane.xlu0 %505
  %v507 = vsel %vm378, %v495, 0.0
  %508 = vadd.xlane.f32.xlu0 %v507
  %v509 = vpop.xlane.xlu0 %508
  %v510 = vsel %vm378, %v496, 0.0
  %511 = vadd.xlane.f32.xlu0 %v510
  %v512 = vpop.xlane.xlu0 %511
  %v513 = vsel %vm378, %v497, 0.0
  %514 = vadd.xlane.f32.xlu0 %v513
  %v515 = vpop.xlane.xlu0 %514
  %v516 = vsel %vm378, %v498, 0.0
  %517 = vadd.xlane.f32.xlu0 %v516
  %v518 = vpop.xlane.xlu0 %517
  %v519 = vsel %vm378, %v499, 0.0
  %520 = vadd.xlane.f32.xlu0 %v519
  %v521 = vpop.xlane.xlu0 %520
  %v522 = vsel %vm378, %v500, 0.0
  %523 = vadd.xlane.f32.xlu0 %v522
  %v524 = vpop.xlane.xlu0 %523
  %v525 = vmul.f32 %v503, %v476
  %v526 = vmul.f32 %v506, %v476
  %v527 = vmul.f32 %v509, %v476
  %v528 = vmul.f32 %v512, %v476
  %v529 = vmul.f32 %v515, %v476
  %v530 = vmul.f32 %v518, %v476
  %v531 = vmul.f32 %v521, %v476
  %v532 = vmul.f32 %v524, %v476
  %v533 = vadd.f32 %v525, 1e-05
  %v534 = vadd.f32 %v526, 1e-05
  %v535 = vadd.f32 %v527, 1e-05
  %v536 = vadd.f32 %v528, 1e-05
  %v537 = vadd.f32 %v529, 1e-05
  %v538 = vadd.f32 %v530, 1e-05
  %v539 = vadd.f32 %v531, 1e-05
  %v540 = vadd.f32 %v532, 1e-05
  %v541 = vrsqrt.pop %v533
  %v542 = vmul.f32 %v541, %v533
  %v543 = vmul.f32 %v542, %v541
  %v544 = vmul.f32 0.5, %v543
  %v545 = vsub.f32 1.5, %v544
  %v546 = vmul.f32 %v541, %v545
  %vm547 = vweird.f32 %v533
  %vm548 = vweird.f32 %v541
  %vm549 = vmor %vm547, %vm548
  %v550 = vsel %vm549, %v541, %v546
  %v551 = vrsqrt.pop %v534
  %v552 = vmul.f32 %v551, %v534
  %v553 = vmul.f32 %v552, %v551
  %v554 = vmul.f32 0.5, %v553
  %v555 = vsub.f32 1.5, %v554
  %v556 = vmul.f32 %v551, %v555
  %vm557 = vweird.f32 %v534
  %vm558 = vweird.f32 %v551
  %vm559 = vmor %vm557, %vm558
  %v560 = vsel %vm559, %v551, %v556
  %v561 = vrsqrt.pop %v535
  %v562 = vmul.f32 %v561, %v535
  %v563 = vmul.f32 %v562, %v561
  %v564 = vmul.f32 0.5, %v563
  %v565 = vsub.f32 1.5, %v564
  %v566 = vmul.f32 %v561, %v565
  %vm567 = vweird.f32 %v535
  %vm568 = vweird.f32 %v561
  %vm569 = vmor %vm567, %vm568
  %v570 = vsel %vm569, %v561, %v566
  %v571 = vrsqrt.pop %v536
  %v572 = vmul.f32 %v571, %v536
  %v573 = vmul.f32 %v572, %v571
  %v574 = vmul.f32 0.5, %v573
  %v575 = vsub.f32 1.5, %v574
  %v576 = vmul.f32 %v571, %v575
  %vm577 = vweird.f32 %v536
  %vm578 = vweird.f32 %v571
  %vm579 = vmor %vm577, %vm578
  %v580 = vsel %vm579, %v571, %v576
  %v581 = vrsqrt.pop %v537
  %v582 = vmul.f32 %v581, %v537
  %v583 = vmul.f32 %v582, %v581
  %v584 = vmul.f32 0.5, %v583
  %v585 = vsub.f32 1.5, %v584
  %v586 = vmul.f32 %v581, %v585
  %vm587 = vweird.f32 %v537
  %vm588 = vweird.f32 %v581
  %vm589 = vmor %vm587, %vm588
  %v590 = vsel %vm589, %v581, %v586
  %v591 = vrsqrt.pop %v538
  %v592 = vmul.f32 %v591, %v538
  %v593 = vmul.f32 %v592, %v591
  %v594 = vmul.f32 0.5, %v593
  %v595 = vsub.f32 1.5, %v594
  %v596 = vmul.f32 %v591, %v595
  %vm597 = vweird.f32 %v538
  %vm598 = vweird.f32 %v591
  %vm599 = vmor %vm597, %vm598
  %v600 = vsel %vm599, %v591, %v596
  %v601 = vrsqrt.pop %v539
  %v602 = vmul.f32 %v601, %v539
  %v603 = vmul.f32 %v602, %v601
  %v604 = vmul.f32 0.5, %v603
  %v605 = vsub.f32 1.5, %v604
  %v606 = vmul.f32 %v601, %v605
  %vm607 = vweird.f32 %v539
  %vm608 = vweird.f32 %v601
  %vm609 = vmor %vm607, %vm608
  %v610 = vsel %vm609, %v601, %v606
  %v611 = vrsqrt.pop %v540
  %v612 = vmul.f32 %v611, %v540
  %v613 = vmul.f32 %v612, %v611
  %v614 = vmul.f32 0.5, %v613
  %v615 = vsub.f32 1.5, %v614
  %v616 = vmul.f32 %v611, %v615
  %vm617 = vweird.f32 %v540
  %vm618 = vweird.f32 %v611
  %vm619 = vmor %vm617, %vm618
  %v620 = vsel %vm619, %v611, %v616
  %v621 = vmul.f32 %v485, %v550
  %v622 = vmul.f32 %v486, %v560
  %v623 = vmul.f32 %v487, %v570
  %v624 = vmul.f32 %v488, %v580
  %v625 = vmul.f32 %v489, %v590
  %v626 = vmul.f32 %v490, %v600
  %v627 = vmul.f32 %v491, %v610
  %v628 = vmul.f32 %v492, %v620
  %v629 = vmul.f32 %v621, %v444
  %v630 = vmul.f32 %v622, %v444
  %v631 = vmul.f32 %v623, %v444
  %v632 = vmul.f32 %v624, %v444
  %v633 = vmul.f32 %v625, %v444
  %v634 = vmul.f32 %v626, %v444
  %v635 = vmul.f32 %v627, %v444
  %v636 = vmul.f32 %v628, %v444
  %v637 = vadd.f32 %v629, %v445
  %v638 = vadd.f32 %v630, %v445
  %v639 = vadd.f32 %v631, %v445
  %v640 = vadd.f32 %v632, %v445
  %v641 = vadd.f32 %v633, %v445
  %v642 = vadd.f32 %v634, %v445
  %v643 = vadd.f32 %v635, %v445
  %v644 = vadd.f32 %v636, %v445
  %v645 = vld [vmem:[%s1 + $0x26] ss:$0 sm:$0xff]
  %v646 = vld [vmem:[%s1 + $0x27] ss:$0 sm:$0xff]
  %v647 = vsel %vm378, %v637, 0.0
  %648 = vadd.xlane.f32.xlu0 %v647
  %v649 = vpop.xlane.xlu0 %648
  %v650 = vsel %vm378, %v638, 0.0
  %651 = vadd.xlane.f32.xlu0 %v650
  %v652 = vpop.xlane.xlu0 %651
  %v653 = vsel %vm378, %v639, 0.0
  %654 = vadd.xlane.f32.xlu0 %v653
  %v655 = vpop.xlane.xlu0 %654
  %v656 = vsel %vm378, %v640, 0.0
  %657 = vadd.xlane.f32.xlu0 %v656
  %v658 = vpop.xlane.xlu0 %657
  %v659 = vsel %vm378, %v641, 0.0
  %660 = vadd.xlane.f32.xlu0 %v659
  %v661 = vpop.xlane.xlu0 %660
  %v662 = vsel %vm378, %v642, 0.0
  %663 = vadd.xlane.f32.xlu0 %v662
  %v664 = vpop.xlane.xlu0 %663
  %v665 = vsel %vm378, %v643, 0.0
  %666 = vadd.xlane.f32.xlu0 %v665
  %v667 = vpop.xlane.xlu0 %666
  %v668 = vsel %vm378, %v644, 0.0
  %669 = vadd.xlane.f32.xlu0 %v668
  %v670 = vpop.xlane.xlu0 %669
  %v671 = vmul.f32 %v649, %v476
  %v672 = vmul.f32 %v652, %v476
  %v673 = vmul.f32 %v655, %v476
  %v674 = vmul.f32 %v658, %v476
  %v675 = vmul.f32 %v661, %v476
  %v676 = vmul.f32 %v664, %v476
  %v677 = vmul.f32 %v667, %v476
  %v678 = vmul.f32 %v670, %v476
  %v679 = vsub.f32 %v637, %v671
  %v680 = vsub.f32 %v638, %v672
  %v681 = vsub.f32 %v639, %v673
  %v682 = vsub.f32 %v640, %v674
  %v683 = vsub.f32 %v641, %v675
  %v684 = vsub.f32 %v642, %v676
  %v685 = vsub.f32 %v643, %v677
  %v686 = vsub.f32 %v644, %v678
  %v687 = vmul.f32 %v679, %v679
  %v688 = vmul.f32 %v680, %v680
  %v689 = vmul.f32 %v681, %v681
  %v690 = vmul.f32 %v682, %v682
  %v691 = vmul.f32 %v683, %v683
  %v692 = vmul.f32 %v684, %v684
  %v693 = vmul.f32 %v685, %v685
  %v694 = vmul.f32 %v686, %v686
  %v695 = vsel %vm378, %v687, 0.0
  %696 = vadd.xlane.f32.xlu0 %v695
  %v697 = vpop.xlane.xlu0 %696
  %v698 = vsel %vm378, %v688, 0.0
  %699 = vadd.xlane.f32.xlu0 %v698
  %v700 = vpop.xlane.xlu0 %699
  %v701 = vsel %vm378, %v689, 0.0
  %702 = vadd.xlane.f32.xlu0 %v701
  %v703 = vpop.xlane.xlu0 %702
  %v704 = vsel %vm378, %v690, 0.0
  %705 = vadd.xlane.f32.xlu0 %v704
  %v706 = vpop.xlane.xlu0 %705
  %v707 = vsel %vm378, %v691, 0.0
  %708 = vadd.xlane.f32.xlu0 %v707
  %v709 = vpop.xlane.xlu0 %708
  %v710 = vsel %vm378, %v692, 0.0
  %711 = vadd.xlane.f32.xlu0 %v710
  %v712 = vpop.xlane.xlu0 %711
  %v713 = vsel %vm378, %v693, 0.0
  %714 = vadd.xlane.f32.xlu0 %v713
  %v715 = vpop.xlane.xlu0 %714
  %v716 = vsel %vm378, %v694, 0.0
  %717 = vadd.xlane.f32.xlu0 %v716
  %v718 = vpop.xlane.xlu0 %717
  %v719 = vmul.f32 %v697, %v476
  %v720 = vmul.f32 %v700, %v476
  %v721 = vmul.f32 %v703, %v476
  %v722 = vmul.f32 %v706, %v476
  %v723 = vmul.f32 %v709, %v476
  %v724 = vmul.f32 %v712, %v476
  %v725 = vmul.f32 %v715, %v476
  %v726 = vmul.f32 %v718, %v476
  %v727 = vadd.f32 %v719, 1e-05
  %v728 = vadd.f32 %v720, 1e-05
  %v729 = vadd.f32 %v721, 1e-05
  %v730 = vadd.f32 %v722, 1e-05
  %v731 = vadd.f32 %v723, 1e-05
  %v732 = vadd.f32 %v724, 1e-05
  %v733 = vadd.f32 %v725, 1e-05
  %v734 = vadd.f32 %v726, 1e-05
  %v735 = vrsqrt.pop %v727
  %v736 = vmul.f32 %v735, %v727
  %v737 = vmul.f32 %v736, %v735
  %v738 = vmul.f32 0.5, %v737
  %v739 = vsub.f32 1.5, %v738
  %v740 = vmul.f32 %v735, %v739
  %vm741 = vweird.f32 %v727
  %vm742 = vweird.f32 %v735
  %vm743 = vmor %vm741, %vm742
  %v744 = vsel %vm743, %v735, %v740
  %v745 = vrsqrt.pop %v728
  %v746 = vmul.f32 %v745, %v728
  %v747 = vmul.f32 %v746, %v745
  %v748 = vmul.f32 0.5, %v747
  %v749 = vsub.f32 1.5, %v748
  %v750 = vmul.f32 %v745, %v749
  %vm751 = vweird.f32 %v728
  %vm752 = vweird.f32 %v745
  %vm753 = vmor %vm751, %vm752
  %v754 = vsel %vm753, %v745, %v750
  %v755 = vrsqrt.pop %v729
  %v756 = vmul.f32 %v755, %v729
  %v757 = vmul.f32 %v756, %v755
  %v758 = vmul.f32 0.5, %v757
  %v759 = vsub.f32 1.5, %v758
  %v760 = vmul.f32 %v755, %v759
  %vm761 = vweird.f32 %v729
  %vm762 = vweird.f32 %v755
  %vm763 = vmor %vm761, %vm762
  %v764 = vsel %vm763, %v755, %v760
  %v765 = vrsqrt.pop %v730
  %v766 = vmul.f32 %v765, %v730
  %v767 = vmul.f32 %v766, %v765
  %v768 = vmul.f32 0.5, %v767
  %v769 = vsub.f32 1.5, %v768
  %v770 = vmul.f32 %v765, %v769
  %vm771 = vweird.f32 %v730
  %vm772 = vweird.f32 %v765
  %vm773 = vmor %vm771, %vm772
  %v774 = vsel %vm773, %v765, %v770
  %v775 = vrsqrt.pop %v731
  %v776 = vmul.f32 %v775, %v731
  %v777 = vmul.f32 %v776, %v775
  %v778 = vmul.f32 0.5, %v777
  %v779 = vsub.f32 1.5, %v778
  %v780 = vmul.f32 %v775, %v779
  %vm781 = vweird.f32 %v731
  %vm782 = vweird.f32 %v775
  %vm783 = vmor %vm781, %vm782
  %v784 = vsel %vm783, %v775, %v780
  %v785 = vrsqrt.pop %v732
  %v786 = vmul.f32 %v785, %v732
  %v787 = vmul.f32 %v786, %v785
  %v788 = vmul.f32 0.5, %v787
  %v789 = vsub.f32 1.5, %v788
  %v790 = vmul.f32 %v785, %v789
  %vm791 = vweird.f32 %v732
  %vm792 = vweird.f32 %v785
  %vm793 = vmor %vm791, %vm792
  %v794 = vsel %vm793, %v785, %v790
  %v795 = vrsqrt.pop %v733
  %v796 = vmul.f32 %v795, %v733
  %v797 = vmul.f32 %v796, %v795
  %v798 = vmul.f32 0.5, %v797
  %v799 = vsub.f32 1.5, %v798
  %v800 = vmul.f32 %v795, %v799
  %vm801 = vweird.f32 %v733
  %vm802 = vweird.f32 %v795
  %vm803 = vmor %vm801, %vm802
  %v804 = vsel %vm803, %v795, %v800
  %v805 = vrsqrt.pop %v734
  %v806 = vmul.f32 %v805, %v734
  %v807 = vmul.f32 %v806, %v805
  %v808 = vmul.f32 0.5, %v807
  %v809 = vsub.f32 1.5, %v808
  %v810 = vmul.f32 %v805, %v809
  %vm811 = vweird.f32 %v734
  %vm812 = vweird.f32 %v805
  %vm813 = vmor %vm811, %vm812
  %v814 = vsel %vm813, %v805, %v810
  %v815 = vmul.f32 %v679, %v744
  %v816 = vmul.f32 %v680, %v754
  %v817 = vmul.f32 %v681, %v764
  %v818 = vmul.f32 %v682, %v774
  %v819 = vmul.f32 %v683, %v784
  %v820 = vmul.f32 %v684, %v794
  %v821 = vmul.f32 %v685, %v804
  %v822 = vmul.f32 %v686, %v814
  %v823 = vmul.f32 %v815, %v645
  %v824 = vmul.f32 %v816, %v645
  %v825 = vmul.f32 %v817, %v645
  %v826 = vmul.f32 %v818, %v645
  %v827 = vmul.f32 %v819, %v645
  %v828 = vmul.f32 %v820, %v645
  %v829 = vmul.f32 %v821, %v645
  %v830 = vmul.f32 %v822, %v645
  %v831 = vadd.f32 %v823, %v646
  %v832 = vadd.f32 %v824, %v646
  %v833 = vadd.f32 %v825, %v646
  %v834 = vadd.f32 %v826, %v646
  %v835 = vadd.f32 %v827, %v646
  %v836 = vadd.f32 %v828, %v646
  %v837 = vadd.f32 %v829, %v646
  %v838 = vadd.f32 %v830, %v646
  %v839 = vld [vmem:[%s4 + $0x10] sm:$0xff]
  %v840 = vld [vmem:[%s4 + $0x18] sm:$0xff]
  %v841 = vld [vmem:[%s4 + $0x20] sm:$0xff]
  %v842 = vld [vmem:[%s4 + $0x28] sm:$0xff]
  %v843 = vld [vmem:[%s4 + $0x30] sm:$0xff]
  %v844 = vld [vmem:[%s4 + $0x38] sm:$0xff]
  %v845 = vld [vmem:[%s4 + $0x40] sm:$0xff]
  %v846 = vld [vmem:[%s4 + $0x48] sm:$0xff]
  %v847 = vpack.c.bf16 %v832, %v831
  %v848 = vpack.c.bf16 %v834, %v833
  %v849 = vpack.c.bf16 %v836, %v835
  %v850 = vpack.c.bf16 %v838, %v837
  %s851 = scalar_lea.vmem %s1, 54
  %v852 = vld [vmem:[%s851] ss:$8 sm:$0x3]
  %v854 = vperm.slane %v852, 0
  %v855 = vperm.slane %v852, 1
  %v866 = vunpack.c.l.b16 %v839
  %v867 = vunpack.c.h.b16 %v839
  %v868 = vunpack.c.l.b16 %v840
  %v869 = vunpack.c.h.b16 %v840
  %v870 = vunpack.c.l.b16 %v841
  %v871 = vunpack.c.h.b16 %v841
  %v872 = vunpack.c.l.b16 %v842
  %v873 = vunpack.c.h.b16 %v842
  %v874 = vunpack.c.l.b16 %v843
  %v875 = vunpack.c.h.b16 %v843
  %v876 = vunpack.c.l.b16 %v844
  %v877 = vunpack.c.h.b16 %v844
  %v878 = vunpack.c.l.b16 %v845
  %v879 = vunpack.c.h.b16 %v845
  %v880 = vunpack.c.l.b16 %v846
  %v881 = vunpack.c.h.b16 %v846
  %v882 = vpack.c.b16 %v868, %v866
  %v883 = vpack.c.b16 %v869, %v867
  %v884 = vpack.c.b16 %v872, %v870
  %v885 = vpack.c.b16 %v873, %v871
  %v886 = vpack.c.b16 %v876, %v874
  %v887 = vpack.c.b16 %v877, %v875
  %v888 = vpack.c.b16 %v880, %v878
  %v889 = vpack.c.b16 %v881, %v879
  %v899 = vsel %vm378, %v847, 0
  %v902 = vsel %vm378, %v848, 0
  %v905 = vsel %vm378, %v849, 0
  %v908 = vsel %vm378, %v850, 0
  %910 = vmatpush.bf16.msra.mxu0 0
  %911 = vmatpush.bf16.msra.mxu0 0
  %912 = vmatpush.bf16.msra.mxu0 0
  %913 = vmatpush.bf16.msra.mxu0 0
  %914 = vmatpush.bf16.msra.mxu0 %v888
  %915 = vmatpush.bf16.msra.mxu0 %v886
  %916 = vmatpush.bf16.msra.mxu0 %v884
  %917 = vmatpush.bf16.msra.mxu0 %v882
  %918 = vmatmul.bf16.gmra.mxu0 %v899
  %v919 = vpop.f32.mrf.mxu0
  %v920 = vadd.f32 %v854, %v919
  %v921 = vpop.f32.mrf.mxu0
  %v922 = vadd.f32 %v854, %v921
  %923 = vmatmul.bf16.gmra.mxu0 %v902
  %v924 = vpop.f32.mrf.mxu0
  %v925 = vadd.f32 %v854, %v924
  %v926 = vpop.f32.mrf.mxu0
  %v927 = vadd.f32 %v854, %v926
  %928 = vmatmul.bf16.gmra.mxu0 %v905
  %v929 = vpop.f32.mrf.mxu0
  %v930 = vadd.f32 %v854, %v929
  %v931 = vpop.f32.mrf.mxu0
  %v932 = vadd.f32 %v854, %v931
  %933 = vmatmul.bf16.gmra.mxu0 %v908
  %v934 = vpop.f32.mrf.mxu0
  %v935 = vadd.f32 %v854, %v934
  %v936 = vpop.f32.mrf.mxu0
  %v937 = vadd.f32 %v854, %v936
  %938 = vdwg.mxu0
  %939 = vmatpush.bf16.msra.mxu0 0
  %940 = vmatpush.bf16.msra.mxu0 0
  %941 = vmatpush.bf16.msra.mxu0 0
  %942 = vmatpush.bf16.msra.mxu0 0
  %943 = vmatpush.bf16.msra.mxu0 %v889
  %944 = vmatpush.bf16.msra.mxu0 %v887
  %945 = vmatpush.bf16.msra.mxu0 %v885
  %946 = vmatpush.bf16.msra.mxu0 %v883
  %947 = vmatmul.bf16.gmra.mxu0 %v899
  %v948 = vpop.f32.mrf.mxu0
  %v949 = vadd.f32 %v855, %v948
  %v950 = vpop.f32.mrf.mxu0
  %v951 = vadd.f32 %v855, %v950
  %952 = vmatmul.bf16.gmra.mxu0 %v902
  %v953 = vpop.f32.mrf.mxu0
  %v954 = vadd.f32 %v855, %v953
  %v955 = vpop.f32.mrf.mxu0
  %v956 = vadd.f32 %v855, %v955
  %957 = vmatmul.bf16.gmra.mxu0 %v905
  %v958 = vpop.f32.mrf.mxu0
  %v959 = vadd.f32 %v855, %v958
  %v960 = vpop.f32.mrf.mxu0
  %v961 = vadd.f32 %v855, %v960
  %962 = vmatmul.bf16.gmra.mxu0 %v908
  %v963 = vpop.f32.mrf.mxu0
  %v964 = vadd.f32 %v855, %v963
  %v965 = vpop.f32.mrf.mxu0
  %v966 = vadd.f32 %v855, %v965
  %967 = vdwg.mxu0
  %v968 = vpack.c.bf16 %v920, %v920
  %v969 = vpack.c.bf16 %v922, %v922
  %v970 = vpack.c.bf16 %v925, %v925
  %v971 = vpack.c.bf16 %v927, %v927
  %v972 = vpack.c.bf16 %v930, %v930
  %v973 = vpack.c.bf16 %v932, %v932
  %v974 = vpack.c.bf16 %v935, %v935
  %v975 = vpack.c.bf16 %v937, %v937
  %v976 = vpack.c.bf16 %v949, %v949
  %v977 = vpack.c.bf16 %v951, %v951
  %v978 = vpack.c.bf16 %v954, %v954
  %v979 = vpack.c.bf16 %v956, %v956
  %v980 = vpack.c.bf16 %v959, %v959
  %v981 = vpack.c.bf16 %v961, %v961
  %v982 = vpack.c.bf16 %v964, %v964
  %v983 = vpack.c.bf16 %v966, %v966
  %v984 = vld [vmem:[%s3 + $0xf0] sm:$0xf]
  %v985 = vld [vmem:[%s3 + $0xf4] sm:$0xf]
  %v986 = vld [vmem:[%s3 + $0xf8] sm:$0xf]
  %v987 = vld [vmem:[%s3 + $0xfc] sm:$0xf]
  %v988 = vld [vmem:[%s3 + $0x100] sm:$0xf]
  %v989 = vld [vmem:[%s3 + $0x104] sm:$0xf]
  %v990 = vld [vmem:[%s3 + $0x108] sm:$0xf]
  %v991 = vld [vmem:[%s3 + $0x10c] sm:$0xf]
  %v992 = vld [vmem:[%s3 + $0x110] sm:$0xf]
  %v993 = vld [vmem:[%s3 + $0x114] sm:$0xf]
  %v994 = vld [vmem:[%s3 + $0x118] sm:$0xf]
  %v995 = vld [vmem:[%s3 + $0x11c] sm:$0xf]
  %v996 = vld [vmem:[%s3 + $0x120] sm:$0xf]
  %v997 = vld [vmem:[%s3 + $0x124] sm:$0xf]
  %v998 = vld [vmem:[%s3 + $0x128] sm:$0xf]
  %v999 = vld [vmem:[%s3 + $0x12c] sm:$0xf]
  %v1000 = vld [vmem:[%s3 + $0x130] sm:$0xf]
  %v1001 = vld [vmem:[%s3 + $0x134] sm:$0xf]
  %v1002 = vld [vmem:[%s3 + $0x138] sm:$0xf]
  %v1003 = vld [vmem:[%s3 + $0x13c] sm:$0xf]
  %v1004 = vld [vmem:[%s3 + $0x140] sm:$0xf]
  %v1005 = vld [vmem:[%s3 + $0x144] sm:$0xf]
  %v1006 = vld [vmem:[%s3 + $0x148] sm:$0xf]
  %v1007 = vld [vmem:[%s3 + $0x14c] sm:$0xf]
  %v1008 = vld [vmem:[%s3 + $0x150] sm:$0xf]
  %v1009 = vld [vmem:[%s3 + $0x154] sm:$0xf]
  %v1010 = vld [vmem:[%s3 + $0x158] sm:$0xf]
  %v1011 = vld [vmem:[%s3 + $0x15c] sm:$0xf]
  %v1012 = vld [vmem:[%s3 + $0x160] sm:$0xf]
  %v1013 = vld [vmem:[%s3 + $0x164] sm:$0xf]
  %v1014 = vld [vmem:[%s3 + $0x168] sm:$0xf]
  %v1015 = vld [vmem:[%s3 + $0x16c] sm:$0xf]
  %v1024 = vunpack.c.l.b16 %v968
  %v1025 = vunpack.c.l.b16 %v969
  %v1026 = vunpack.c.l.b16 %v970
  %v1027 = vunpack.c.l.b16 %v971
  %v1028 = vunpack.c.l.b16 %v972
  %v1029 = vunpack.c.l.b16 %v973
  %v1030 = vunpack.c.l.b16 %v974
  %v1031 = vunpack.c.l.b16 %v975
  %v1032 = vpack.c.b16 %v1025, %v1024
  %v1033 = vpack.c.b16 %v1027, %v1026
  %v1034 = vpack.c.b16 %v1029, %v1028
  %v1035 = vpack.c.b16 %v1031, %v1030
  %v1040 = vunpack.c.l.bf16 %v1032
  %v1041 = vunpack.c.h.bf16 %v1032
  %v1042 = vunpack.c.l.bf16 %v1033
  %v1043 = vunpack.c.h.bf16 %v1033
  %v1044 = vunpack.c.l.bf16 %v1034
  %v1045 = vunpack.c.h.bf16 %v1034
  %v1046 = vunpack.c.l.bf16 %v1035
  %v1047 = vunpack.c.h.bf16 %v1035
  %v1048 = vunpack.c.l.bf16 %v984
  %v1049 = vunpack.c.l.bf16 %v985
  %v1050 = vunpack.c.l.bf16 %v986
  %v1051 = vunpack.c.l.bf16 %v987
  %v1052 = vunpack.c.l.bf16 %v988
  %v1053 = vunpack.c.l.bf16 %v989
  %v1054 = vunpack.c.l.bf16 %v990
  %v1055 = vunpack.c.l.bf16 %v991
  %v1056 = vunpack.c.l.bf16 %v992
  %v1057 = vunpack.c.l.bf16 %v993
  %v1058 = vunpack.c.l.bf16 %v994
  %v1059 = vunpack.c.l.bf16 %v995
  %v1060 = vunpack.c.l.bf16 %v996
  %v1061 = vunpack.c.l.bf16 %v997
  %v1062 = vunpack.c.l.bf16 %v998
  %v1063 = vunpack.c.l.bf16 %v999
  %v1064 = vunpack.c.l.bf16 %v1000
  %v1065 = vunpack.c.l.bf16 %v1001
  %v1066 = vunpack.c.l.bf16 %v1002
  %v1067 = vunpack.c.l.bf16 %v1003
  %v1068 = vunpack.c.l.bf16 %v1004
  %v1069 = vunpack.c.l.bf16 %v1005
  %v1070 = vunpack.c.l.bf16 %v1006
  %v1071 = vunpack.c.l.bf16 %v1007
  %v1072 = vunpack.c.l.bf16 %v1008
  %v1073 = vunpack.c.l.bf16 %v1009
  %v1074 = vunpack.c.l.bf16 %v1010
  %v1075 = vunpack.c.l.bf16 %v1011
  %v1076 = vunpack.c.l.bf16 %v1012
  %v1077 = vunpack.c.l.bf16 %v1013
  %v1078 = vunpack.c.l.bf16 %v1014
  %v1079 = vunpack.c.l.bf16 %v1015
  %1112 = vrot.lane.b32.xlu0 %v1048, 64
  %v1113 = vpop.permute.xlu0 %1112
  %1114 = vrot.lane.b32.xlu0 %v1049, 64
  %v1115 = vpop.permute.xlu0 %1114
  %1116 = vrot.lane.b32.xlu0 %v1050, 64
  %v1117 = vpop.permute.xlu0 %1116
  %1118 = vrot.lane.b32.xlu0 %v1051, 64
  %v1119 = vpop.permute.xlu0 %1118
  %1120 = vrot.lane.b32.xlu0 %v1052, 64
  %v1121 = vpop.permute.xlu0 %1120
  %1122 = vrot.lane.b32.xlu0 %v1053, 64
  %v1123 = vpop.permute.xlu0 %1122
  %1124 = vrot.lane.b32.xlu0 %v1054, 64
  %v1125 = vpop.permute.xlu0 %1124
  %1126 = vrot.lane.b32.xlu0 %v1055, 64
  %v1127 = vpop.permute.xlu0 %1126
  %1128 = vrot.lane.b32.xlu0 %v1056, 64
  %v1129 = vpop.permute.xlu0 %1128
  %1130 = vrot.lane.b32.xlu0 %v1057, 64
  %v1131 = vpop.permute.xlu0 %1130
  %1132 = vrot.lane.b32.xlu0 %v1058, 64
  %v1133 = vpop.permute.xlu0 %1132
  %1134 = vrot.lane.b32.xlu0 %v1059, 64
  %v1135 = vpop.permute.xlu0 %1134
  %1136 = vrot.lane.b32.xlu0 %v1060, 64
  %v1137 = vpop.permute.xlu0 %1136
  %1138 = vrot.lane.b32.xlu0 %v1061, 64
  %v1139 = vpop.permute.xlu0 %1138
  %1140 = vrot.lane.b32.xlu0 %v1062, 64
  %v1141 = vpop.permute.xlu0 %1140
  %1142 = vrot.lane.b32.xlu0 %v1063, 64
  %v1143 = vpop.permute.xlu0 %1142
  %1144 = vrot.lane.b32.xlu0 %v1064, 64
  %v1145 = vpop.permute.xlu0 %1144
  %1146 = vrot.lane.b32.xlu0 %v1065, 64
  %v1147 = vpop.permute.xlu0 %1146
  %1148 = vrot.lane.b32.xlu0 %v1066, 64
  %v1149 = vpop.permute.xlu0 %1148
  %1150 = vrot.lane.b32.xlu0 %v1067, 64
  %v1151 = vpop.permute.xlu0 %1150
  %1152 = vrot.lane.b32.xlu0 %v1068, 64
  %v1153 = vpop.permute.xlu0 %1152
  %1154 = vrot.lane.b32.xlu0 %v1069, 64
  %v1155 = vpop.permute.xlu0 %1154
  %1156 = vrot.lane.b32.xlu0 %v1070, 64
  %v1157 = vpop.permute.xlu0 %1156
  %1158 = vrot.lane.b32.xlu0 %v1071, 64
  %v1159 = vpop.permute.xlu0 %1158
  %1160 = vrot.lane.b32.xlu0 %v1072, 64
  %v1161 = vpop.permute.xlu0 %1160
  %1162 = vrot.lane.b32.xlu0 %v1073, 64
  %v1163 = vpop.permute.xlu0 %1162
  %1164 = vrot.lane.b32.xlu0 %v1074, 64
  %v1165 = vpop.permute.xlu0 %1164
  %1166 = vrot.lane.b32.xlu0 %v1075, 64
  %v1167 = vpop.permute.xlu0 %1166
  %1168 = vrot.lane.b32.xlu0 %v1076, 64
  %v1169 = vpop.permute.xlu0 %1168
  %1170 = vrot.lane.b32.xlu0 %v1077, 64
  %v1171 = vpop.permute.xlu0 %1170
  %1172 = vrot.lane.b32.xlu0 %v1078, 64
  %v1173 = vpop.permute.xlu0 %1172
  %1174 = vrot.lane.b32.xlu0 %v1079, 64
  %v1175 = vpop.permute.xlu0 %1174
  %v1208 = vmul.f32 %v1040, %v1113
  %v1209 = vmul.f32 %v1041, %v1115
  %v1210 = vmul.f32 %v1042, %v1117
  %v1211 = vmul.f32 %v1043, %v1119
  %v1212 = vmul.f32 %v1044, %v1121
  %v1213 = vmul.f32 %v1045, %v1123
  %v1214 = vmul.f32 %v1046, %v1125
  %v1215 = vmul.f32 %v1047, %v1127
  %v1216 = vmul.f32 %v1040, %v1129
  %v1217 = vmul.f32 %v1041, %v1131
  %v1218 = vmul.f32 %v1042, %v1133
  %v1219 = vmul.f32 %v1043, %v1135
  %v1220 = vmul.f32 %v1044, %v1137
  %v1221 = vmul.f32 %v1045, %v1139
  %v1222 = vmul.f32 %v1046, %v1141
  %v1223 = vmul.f32 %v1047, %v1143
  %v1224 = vmul.f32 %v1040, %v1145
  %v1225 = vmul.f32 %v1041, %v1147
  %v1226 = vmul.f32 %v1042, %v1149
  %v1227 = vmul.f32 %v1043, %v1151
  %v1228 = vmul.f32 %v1044, %v1153
  %v1229 = vmul.f32 %v1045, %v1155
  %v1230 = vmul.f32 %v1046, %v1157
  %v1231 = vmul.f32 %v1047, %v1159
  %v1232 = vmul.f32 %v1040, %v1161
  %v1233 = vmul.f32 %v1041, %v1163
  %v1234 = vmul.f32 %v1042, %v1165
  %v1235 = vmul.f32 %v1043, %v1167
  %v1236 = vmul.f32 %v1044, %v1169
  %v1237 = vmul.f32 %v1045, %v1171
  %v1238 = vmul.f32 %v1046, %v1173
  %v1239 = vmul.f32 %v1047, %v1175
  %v1240 = vpack.c.bf16 %v1209, %v1208
  %v1241 = vpack.c.bf16 %v1211, %v1210
  %v1242 = vpack.c.bf16 %v1213, %v1212
  %v1243 = vpack.c.bf16 %v1215, %v1214
  %v1244 = vpack.c.bf16 %v1217, %v1216
  %v1245 = vpack.c.bf16 %v1219, %v1218
  %v1246 = vpack.c.bf16 %v1221, %v1220
  %v1247 = vpack.c.bf16 %v1223, %v1222
  %v1248 = vpack.c.bf16 %v1225, %v1224
  %v1249 = vpack.c.bf16 %v1227, %v1226
  %v1250 = vpack.c.bf16 %v1229, %v1228
  %v1251 = vpack.c.bf16 %v1231, %v1230
  %v1252 = vpack.c.bf16 %v1233, %v1232
  %v1253 = vpack.c.bf16 %v1235, %v1234
  %v1254 = vpack.c.bf16 %v1237, %v1236
  %v1255 = vpack.c.bf16 %v1239, %v1238
  %v1264 = vunpack.c.l.b16 %v976
  %v1265 = vunpack.c.l.b16 %v977
  %v1266 = vunpack.c.l.b16 %v978
  %v1267 = vunpack.c.l.b16 %v979
  %v1268 = vunpack.c.l.b16 %v980
  %v1269 = vunpack.c.l.b16 %v981
  %v1270 = vunpack.c.l.b16 %v982
  %v1271 = vunpack.c.l.b16 %v983
  %v1272 = vpack.c.b16 %v1265, %v1264
  %v1273 = vpack.c.b16 %v1267, %v1266
  %v1274 = vpack.c.b16 %v1269, %v1268
  %v1275 = vpack.c.b16 %v1271, %v1270
  %v1280 = vunpack.c.l.bf16 %v1272
  %v1281 = vunpack.c.h.bf16 %v1272
  %v1282 = vunpack.c.l.bf16 %v1273
  %v1283 = vunpack.c.h.bf16 %v1273
  %v1284 = vunpack.c.l.bf16 %v1274
  %v1285 = vunpack.c.h.bf16 %v1274
  %v1286 = vunpack.c.l.bf16 %v1275
  %v1287 = vunpack.c.h.bf16 %v1275
  %v1288 = vmul.f32 %v1280, %v1048
  %v1289 = vmul.f32 %v1281, %v1049
  %v1290 = vmul.f32 %v1282, %v1050
  %v1291 = vmul.f32 %v1283, %v1051
  %v1292 = vmul.f32 %v1284, %v1052
  %v1293 = vmul.f32 %v1285, %v1053
  %v1294 = vmul.f32 %v1286, %v1054
  %v1295 = vmul.f32 %v1287, %v1055
  %v1296 = vmul.f32 %v1280, %v1056
  %v1297 = vmul.f32 %v1281, %v1057
  %v1298 = vmul.f32 %v1282, %v1058
  %v1299 = vmul.f32 %v1283, %v1059
  %v1300 = vmul.f32 %v1284, %v1060
  %v1301 = vmul.f32 %v1285, %v1061
  %v1302 = vmul.f32 %v1286, %v1062
  %v1303 = vmul.f32 %v1287, %v1063
  %v1304 = vmul.f32 %v1280, %v1064
  %v1305 = vmul.f32 %v1281, %v1065
  %v1306 = vmul.f32 %v1282, %v1066
  %v1307 = vmul.f32 %v1283, %v1067
  %v1308 = vmul.f32 %v1284, %v1068
  %v1309 = vmul.f32 %v1285, %v1069
  %v1310 = vmul.f32 %v1286, %v1070
  %v1311 = vmul.f32 %v1287, %v1071
  %v1312 = vmul.f32 %v1280, %v1072
  %v1313 = vmul.f32 %v1281, %v1073
  %v1314 = vmul.f32 %v1282, %v1074
  %v1315 = vmul.f32 %v1283, %v1075
  %v1316 = vmul.f32 %v1284, %v1076
  %v1317 = vmul.f32 %v1285, %v1077
  %v1318 = vmul.f32 %v1286, %v1078
  %v1319 = vmul.f32 %v1287, %v1079
  %v1320 = vpack.c.bf16 %v1289, %v1288
  %v1321 = vpack.c.bf16 %v1291, %v1290
  %v1322 = vpack.c.bf16 %v1293, %v1292
  %v1323 = vpack.c.bf16 %v1295, %v1294
  %v1324 = vpack.c.bf16 %v1297, %v1296
  %v1325 = vpack.c.bf16 %v1299, %v1298
  %v1326 = vpack.c.bf16 %v1301, %v1300
  %v1327 = vpack.c.bf16 %v1303, %v1302
  %v1328 = vpack.c.bf16 %v1305, %v1304
  %v1329 = vpack.c.bf16 %v1307, %v1306
  %v1330 = vpack.c.bf16 %v1309, %v1308
  %v1331 = vpack.c.bf16 %v1311, %v1310
  %v1332 = vpack.c.bf16 %v1313, %v1312
  %v1333 = vpack.c.bf16 %v1315, %v1314
  %v1334 = vpack.c.bf16 %v1317, %v1316
  %v1335 = vpack.c.bf16 %v1319, %v1318
  %v1336 = vpack.c.bf16 %v922, %v920
  %v1337 = vpack.c.bf16 %v927, %v925
  %v1338 = vpack.c.bf16 %v932, %v930
  %v1339 = vpack.c.bf16 %v937, %v935
  %1356 = vrot.lane.b32.xlu0 %v1240, 64
  %v1357 = vpop.permute.xlu0 %1356
  %1358 = vrot.lane.b32.xlu0 %v1241, 64
  %v1359 = vpop.permute.xlu0 %1358
  %1360 = vrot.lane.b32.xlu0 %v1242, 64
  %v1361 = vpop.permute.xlu0 %1360
  %1362 = vrot.lane.b32.xlu0 %v1243, 64
  %v1363 = vpop.permute.xlu0 %1362
  %1364 = vrot.lane.b32.xlu0 %v1244, 64
  %v1365 = vpop.permute.xlu0 %1364
  %1366 = vrot.lane.b32.xlu0 %v1245, 64
  %v1367 = vpop.permute.xlu0 %1366
  %1368 = vrot.lane.b32.xlu0 %v1246, 64
  %v1369 = vpop.permute.xlu0 %1368
  %1370 = vrot.lane.b32.xlu0 %v1247, 64
  %v1371 = vpop.permute.xlu0 %1370
  %1372 = vrot.lane.b32.xlu0 %v1248, 64
  %v1373 = vpop.permute.xlu0 %1372
  %1374 = vrot.lane.b32.xlu0 %v1249, 64
  %v1375 = vpop.permute.xlu0 %1374
  %1376 = vrot.lane.b32.xlu0 %v1250, 64
  %v1377 = vpop.permute.xlu0 %1376
  %1378 = vrot.lane.b32.xlu0 %v1251, 64
  %v1379 = vpop.permute.xlu0 %1378
  %1380 = vrot.lane.b32.xlu0 %v1252, 64
  %v1381 = vpop.permute.xlu0 %1380
  %1382 = vrot.lane.b32.xlu0 %v1253, 64
  %v1383 = vpop.permute.xlu0 %1382
  %1384 = vrot.lane.b32.xlu0 %v1254, 64
  %v1385 = vpop.permute.xlu0 %1384
  %1386 = vrot.lane.b32.xlu0 %v1255, 64
  %v1387 = vpop.permute.xlu0 %1386
  %v1389 = vsel %vm378, %v1336, 0
  %v1392 = vsel %vm378, %v1337, 0
  %v1395 = vsel %vm378, %v1338, 0
  %v1398 = vsel %vm378, %v1339, 0
  %v1401 = vsel %vm378, %v1357, 0
  %v1404 = vsel %vm378, %v1359, 0
  %v1407 = vsel %vm378, %v1361, 0
  %v1410 = vsel %vm378, %v1363, 0
  %v1413 = vsel %vm378, %v1365, 0
  %v1416 = vsel %vm378, %v1367, 0
  %v1419 = vsel %vm378, %v1369, 0
  %v1422 = vsel %vm378, %v1371, 0
  %v1425 = vsel %vm378, %v1373, 0
  %v1428 = vsel %vm378, %v1375, 0
  %v1431 = vsel %vm378, %v1377, 0
  %v1434 = vsel %vm378, %v1379, 0
  %v1437 = vsel %vm378, %v1381, 0
  %v1440 = vsel %vm378, %v1383, 0
  %v1443 = vsel %vm378, %v1385, 0
  %v1446 = vsel %vm378, %v1387, 0
  %1448 = vmatpush.bf16.xpose.msra.mxu0 %v1422
  %1449 = vmatpush.bf16.xpose.msra.mxu0 %v1419
  %1450 = vmatpush.bf16.xpose.msra.mxu0 %v1416
  %1451 = vmatpush.bf16.xpose.msra.mxu0 %v1413
  %1452 = vmatpush.bf16.xpose.msra.mxu0 %v1410
  %1453 = vmatpush.bf16.xpose.msra.mxu0 %v1407
  %1454 = vmatpush.bf16.xpose.msra.mxu0 %v1404
  %1455 = vmatpush.bf16.xpose.msra.mxu0 %v1401
  %1456 = vmatmul.bf16.gmra.mxu0 %v1389
  %v1457 = vpop.f32.mrf.mxu0
  %v1458 = vadd.f32 0.0, %v1457
  %v1459 = vpop.f32.mrf.mxu0
  %v1460 = vadd.f32 0.0, %v1459
  %1461 = vmatmul.bf16.gmra.mxu0 %v1392
  %v1462 = vpop.f32.mrf.mxu0
  %v1463 = vadd.f32 0.0, %v1462
  %v1464 = vpop.f32.mrf.mxu0
  %v1465 = vadd.f32 0.0, %v1464
  %1466 = vmatmul.bf16.gmra.mxu0 %v1395
  %v1467 = vpop.f32.mrf.mxu0
  %v1468 = vadd.f32 0.0, %v1467
  %v1469 = vpop.f32.mrf.mxu0
  %v1470 = vadd.f32 0.0, %v1469
  %1471 = vmatmul.bf16.gmra.mxu0 %v1398
  %v1472 = vpop.f32.mrf.mxu0
  %v1473 = vadd.f32 0.0, %v1472
  %v1474 = vpop.f32.mrf.mxu0
  %v1475 = vadd.f32 0.0, %v1474
  %1476 = vdwg.mxu0
  %1477 = vmatpush.bf16.xpose.msra.mxu0 %v1446
  %1478 = vmatpush.bf16.xpose.msra.mxu0 %v1443
  %1479 = vmatpush.bf16.xpose.msra.mxu0 %v1440
  %1480 = vmatpush.bf16.xpose.msra.mxu0 %v1437
  %1481 = vmatpush.bf16.xpose.msra.mxu0 %v1434
  %1482 = vmatpush.bf16.xpose.msra.mxu0 %v1431
  %1483 = vmatpush.bf16.xpose.msra.mxu0 %v1428
  %1484 = vmatpush.bf16.xpose.msra.mxu0 %v1425
  %1485 = vmatmul.bf16.gmra.mxu0 %v1389
  %v1486 = vpop.f32.mrf.mxu0
  %v1487 = vadd.f32 0.0, %v1486
  %v1488 = vpop.f32.mrf.mxu0
  %v1489 = vadd.f32 0.0, %v1488
  %1490 = vmatmul.bf16.gmra.mxu0 %v1392
  %v1491 = vpop.f32.mrf.mxu0
  %v1492 = vadd.f32 0.0, %v1491
  %v1493 = vpop.f32.mrf.mxu0
  %v1494 = vadd.f32 0.0, %v1493
  %1495 = vmatmul.bf16.gmra.mxu0 %v1395
  %v1496 = vpop.f32.mrf.mxu0
  %v1497 = vadd.f32 0.0, %v1496
  %v1498 = vpop.f32.mrf.mxu0
  %v1499 = vadd.f32 0.0, %v1498
  %1500 = vmatmul.bf16.gmra.mxu0 %v1398
  %v1501 = vpop.f32.mrf.mxu0
  %v1502 = vadd.f32 0.0, %v1501
  %v1503 = vpop.f32.mrf.mxu0
  %v1504 = vadd.f32 0.0, %v1503
  %1505 = vdwg.mxu0
  %v1506 = vld [vmem:[%s3 + $0x50] sm:$0xf]
  %v1507 = vld [vmem:[%s3 + $0x54] sm:$0xf]
  %v1508 = vld [vmem:[%s3 + $0x58] sm:$0xf]
  %v1509 = vld [vmem:[%s3 + $0x5c] sm:$0xf]
  %v1510 = vld [vmem:[%s3 + $0x60] sm:$0xf]
  %v1511 = vld [vmem:[%s3 + $0x64] sm:$0xf]
  %v1512 = vld [vmem:[%s3 + $0x68] sm:$0xf]
  %v1513 = vld [vmem:[%s3 + $0x6c] sm:$0xf]
  %v1522 = vunpack.c.l.b16 %v1506
  %v1523 = vunpack.c.l.b16 %v1507
  %v1524 = vunpack.c.l.b16 %v1508
  %v1525 = vunpack.c.l.b16 %v1509
  %v1526 = vunpack.c.l.b16 %v1510
  %v1527 = vunpack.c.l.b16 %v1511
  %v1528 = vunpack.c.l.b16 %v1512
  %v1529 = vunpack.c.l.b16 %v1513
  %v1530 = vpack.c.b16 %v1523, %v1522
  %v1531 = vpack.c.b16 %v1525, %v1524
  %v1532 = vpack.c.b16 %v1527, %v1526
  %v1533 = vpack.c.b16 %v1529, %v1528
  %v1539 = vsel %vm378, %v1320, 0
  %v1542 = vsel %vm378, %v1321, 0
  %v1545 = vsel %vm378, %v1322, 0
  %v1548 = vsel %vm378, %v1323, 0
  %v1551 = vsel %vm378, %v1324, 0
  %v1554 = vsel %vm378, %v1325, 0
  %v1557 = vsel %vm378, %v1326, 0
  %v1560 = vsel %vm378, %v1327, 0
  %v1563 = vsel %vm378, %v1328, 0
  %v1566 = vsel %vm378, %v1329, 0
  %v1569 = vsel %vm378, %v1330, 0
  %v1572 = vsel %vm378, %v1331, 0
  %v1575 = vsel %vm378, %v1332, 0
  %v1578 = vsel %vm378, %v1333, 0
  %v1581 = vsel %vm378, %v1334, 0
  %v1584 = vsel %vm378, %v1335, 0
  %1586 = vmatpush.bf16.msra.mxu0 0
  %1587 = vmatpush.bf16.msra.mxu0 0
  %1588 = vmatpush.bf16.msra.mxu0 0
  %1589 = vmatpush.bf16.msra.mxu0 0
  %1590 = vmatpush.bf16.msra.mxu0 %v1533
  %1591 = vmatpush.bf16.msra.mxu0 %v1532
  %1592 = vmatpush.bf16.msra.mxu0 %v1531
  %1593 = vmatpush.bf16.msra.mxu0 %v1530
  %1594 = vmatmul.bf16.gmra.mxu0 %v1539
  %v1595 = vpop.f32.mrf.mxu0
  %v1596 = vadd.f32 0.0, %v1595
  %v1597 = vpop.f32.mrf.mxu0
  %v1598 = vadd.f32 0.0, %v1597
  %1599 = vmatmul.bf16.gmra.mxu0 %v1542
  %v1600 = vpop.f32.mrf.mxu0
  %v1601 = vadd.f32 0.0, %v1600
  %v1602 = vpop.f32.mrf.mxu0
  %v1603 = vadd.f32 0.0, %v1602
  %1604 = vmatmul.bf16.gmra.mxu0 %v1545
  %v1605 = vpop.f32.mrf.mxu0
  %v1606 = vadd.f32 0.0, %v1605
  %v1607 = vpop.f32.mrf.mxu0
  %v1608 = vadd.f32 0.0, %v1607
  %1609 = vmatmul.bf16.gmra.mxu0 %v1548
  %v1610 = vpop.f32.mrf.mxu0
  %v1611 = vadd.f32 0.0, %v1610
  %v1612 = vpop.f32.mrf.mxu0
  %v1613 = vadd.f32 0.0, %v1612
  %1614 = vmatmul.bf16.gmra.mxu0 %v1551
  %v1615 = vpop.f32.mrf.mxu0
  %v1616 = vadd.f32 0.0, %v1615
  %v1617 = vpop.f32.mrf.mxu0
  %v1618 = vadd.f32 0.0, %v1617
  %1619 = vmatmul.bf16.gmra.mxu0 %v1554
  %v1620 = vpop.f32.mrf.mxu0
  %v1621 = vadd.f32 0.0, %v1620
  %v1622 = vpop.f32.mrf.mxu0
  %v1623 = vadd.f32 0.0, %v1622
  %1624 = vmatmul.bf16.gmra.mxu0 %v1557
  %v1625 = vpop.f32.mrf.mxu0
  %v1626 = vadd.f32 0.0, %v1625
  %v1627 = vpop.f32.mrf.mxu0
  %v1628 = vadd.f32 0.0, %v1627
  %1629 = vmatmul.bf16.gmra.mxu0 %v1560
  %v1630 = vpop.f32.mrf.mxu0
  %v1631 = vadd.f32 0.0, %v1630
  %v1632 = vpop.f32.mrf.mxu0
  %v1633 = vadd.f32 0.0, %v1632
  %1634 = vmatmul.bf16.gmra.mxu0 %v1563
  %v1635 = vpop.f32.mrf.mxu0
  %v1636 = vadd.f32 0.0, %v1635
  %v1637 = vpop.f32.mrf.mxu0
  %v1638 = vadd.f32 0.0, %v1637
  %1639 = vmatmul.bf16.gmra.mxu0 %v1566
  %v1640 = vpop.f32.mrf.mxu0
  %v1641 = vadd.f32 0.0, %v1640
  %v1642 = vpop.f32.mrf.mxu0
  %v1643 = vadd.f32 0.0, %v1642
  %1644 = vmatmul.bf16.gmra.mxu0 %v1569
  %v1645 = vpop.f32.mrf.mxu0
  %v1646 = vadd.f32 0.0, %v1645
  %v1647 = vpop.f32.mrf.mxu0
  %v1648 = vadd.f32 0.0, %v1647
  %1649 = vmatmul.bf16.gmra.mxu0 %v1572
  %v1650 = vpop.f32.mrf.mxu0
  %v1651 = vadd.f32 0.0, %v1650
  %v1652 = vpop.f32.mrf.mxu0
  %v1653 = vadd.f32 0.0, %v1652
  %1654 = vmatmul.bf16.gmra.mxu0 %v1575
  %v1655 = vpop.f32.mrf.mxu0
  %v1656 = vadd.f32 0.0, %v1655
  %v1657 = vpop.f32.mrf.mxu0
  %v1658 = vadd.f32 0.0, %v1657
  %1659 = vmatmul.bf16.gmra.mxu0 %v1578
  %v1660 = vpop.f32.mrf.mxu0
  %v1661 = vadd.f32 0.0, %v1660
  %v1662 = vpop.f32.mrf.mxu0
  %v1663 = vadd.f32 0.0, %v1662
  %1664 = vmatmul.bf16.gmra.mxu0 %v1581
  %v1665 = vpop.f32.mrf.mxu0
  %v1666 = vadd.f32 0.0, %v1665
  %v1667 = vpop.f32.mrf.mxu0
  %v1668 = vadd.f32 0.0, %v1667
  %1669 = vmatmul.bf16.gmra.mxu0 %v1584
  %v1670 = vpop.f32.mrf.mxu0
  %v1671 = vadd.f32 0.0, %v1670
  %v1672 = vpop.f32.mrf.mxu0
  %v1673 = vadd.f32 0.0, %v1672
  %1674 = vdwg.mxu0
  %v1675 = vld [vmem:[%s2 + $0xc8] sm:$0xff]
  %v1676 = vld [vmem:[%s2 + $0xd0] sm:$0xff]
  %v1677 = vld [vmem:[%s2 + $0xd8] sm:$0xff]
  %v1678 = vld [vmem:[%s2 + $0xe0] sm:$0xff]
  %v1679 = vld [vmem:[%s2 + $0xe8] sm:$0xff]
  %v1680 = vld [vmem:[%s2 + $0xf0] sm:$0xff]
  %v1681 = vld [vmem:[%s2 + $0xf8] sm:$0xff]
  %v1682 = vld [vmem:[%s2 + $0x100] sm:$0xff]
  %v1683 = vadd.f32 %v1458, %v1675
  %v1684 = vadd.f32 %v1460, %v1676
  %v1685 = vadd.f32 %v1463, %v1677
  %v1686 = vadd.f32 %v1465, %v1678
  %v1687 = vadd.f32 %v1468, %v1679
  %v1688 = vadd.f32 %v1470, %v1680
  %v1689 = vadd.f32 %v1473, %v1681
  %v1690 = vadd.f32 %v1475, %v1682
  %v1691 = vsel %vm378, %v1683, -inf
  %1692 = vmax.xlane.f32.xlu0 %v1691
  %v1693 = vpop.xlane.xlu0 %1692
  %v1694 = vsel %vm378, %v1684, -inf
  %1695 = vmax.xlane.f32.xlu0 %v1694
  %v1696 = vpop.xlane.xlu0 %1695
  %v1697 = vsel %vm378, %v1685, -inf
  %1698 = vmax.xlane.f32.xlu0 %v1697
  %v1699 = vpop.xlane.xlu0 %1698
  %v1700 = vsel %vm378, %v1686, -inf
  %1701 = vmax.xlane.f32.xlu0 %v1700
  %v1702 = vpop.xlane.xlu0 %1701
  %v1703 = vsel %vm378, %v1687, -inf
  %1704 = vmax.xlane.f32.xlu0 %v1703
  %v1705 = vpop.xlane.xlu0 %1704
  %v1706 = vsel %vm378, %v1688, -inf
  %1707 = vmax.xlane.f32.xlu0 %v1706
  %v1708 = vpop.xlane.xlu0 %1707
  %v1709 = vsel %vm378, %v1689, -inf
  %1710 = vmax.xlane.f32.xlu0 %v1709
  %v1711 = vpop.xlane.xlu0 %1710
  %v1712 = vsel %vm378, %v1690, -inf
  %1713 = vmax.xlane.f32.xlu0 %v1712
  %v1714 = vpop.xlane.xlu0 %1713
  %v1715 = vsub.f32 %v1683, %v1693
  %v1716 = vsub.f32 %v1684, %v1696
  %v1717 = vsub.f32 %v1685, %v1699
  %v1718 = vsub.f32 %v1686, %v1702
  %v1719 = vsub.f32 %v1687, %v1705
  %v1720 = vsub.f32 %v1688, %v1708
  %v1721 = vsub.f32 %v1689, %v1711
  %v1722 = vsub.f32 %v1690, %v1714
  %v1723 = vmul.f32 %v1715, 1.442695
  %v1724 = vpow.pop %v1723
  %v1725 = vmul.f32 %v1716, 1.442695
  %v1726 = vpow.pop %v1725
  %v1727 = vmul.f32 %v1717, 1.442695
  %v1728 = vpow.pop %v1727
  %v1729 = vmul.f32 %v1718, 1.442695
  %v1730 = vpow.pop %v1729
  %v1731 = vmul.f32 %v1719, 1.442695
  %v1732 = vpow.pop %v1731
  %v1733 = vmul.f32 %v1720, 1.442695
  %v1734 = vpow.pop %v1733
  %v1735 = vmul.f32 %v1721, 1.442695
  %v1736 = vpow.pop %v1735
  %v1737 = vmul.f32 %v1722, 1.442695
  %v1738 = vpow.pop %v1737
  %v1739 = vsel %vm378, %v1724, 0.0
  %1740 = vadd.xlane.f32.xlu0 %v1739
  %v1741 = vpop.xlane.xlu0 %1740
  %v1742 = vsel %vm378, %v1726, 0.0
  %1743 = vadd.xlane.f32.xlu0 %v1742
  %v1744 = vpop.xlane.xlu0 %1743
  %v1745 = vsel %vm378, %v1728, 0.0
  %1746 = vadd.xlane.f32.xlu0 %v1745
  %v1747 = vpop.xlane.xlu0 %1746
  %v1748 = vsel %vm378, %v1730, 0.0
  %1749 = vadd.xlane.f32.xlu0 %v1748
  %v1750 = vpop.xlane.xlu0 %1749
  %v1751 = vsel %vm378, %v1732, 0.0
  %1752 = vadd.xlane.f32.xlu0 %v1751
  %v1753 = vpop.xlane.xlu0 %1752
  %v1754 = vsel %vm378, %v1734, 0.0
  %1755 = vadd.xlane.f32.xlu0 %v1754
  %v1756 = vpop.xlane.xlu0 %1755
  %v1757 = vsel %vm378, %v1736, 0.0
  %1758 = vadd.xlane.f32.xlu0 %v1757
  %v1759 = vpop.xlane.xlu0 %1758
  %v1760 = vsel %vm378, %v1738, 0.0
  %1761 = vadd.xlane.f32.xlu0 %v1760
  %v1762 = vpop.xlane.xlu0 %1761
  %v1763 = vrcp.pop %v1741
  %v1764 = vrcp.pop %v1744
  %v1765 = vrcp.pop %v1747
  %v1766 = vrcp.pop %v1750
  %v1767 = vrcp.pop %v1753
  %v1768 = vrcp.pop %v1756
  %v1769 = vrcp.pop %v1759
  %v1770 = vrcp.pop %v1762
  %v1771 = vmul.f32 %v1724, %v1763
  %v1772 = vmul.f32 %v1726, %v1764
  %v1773 = vmul.f32 %v1728, %v1765
  %v1774 = vmul.f32 %v1730, %v1766
  %v1775 = vmul.f32 %v1732, %v1767
  %v1776 = vmul.f32 %v1734, %v1768
  %v1777 = vmul.f32 %v1736, %v1769
  %v1778 = vmul.f32 %v1738, %v1770
  %1787 = vrot.lane.b32.xlu0 %v1675, 64
  %v1788 = vpop.permute.xlu0 %1787
  %1789 = vrot.lane.b32.xlu0 %v1676, 64
  %v1790 = vpop.permute.xlu0 %1789
  %1791 = vrot.lane.b32.xlu0 %v1677, 64
  %v1792 = vpop.permute.xlu0 %1791
  %1793 = vrot.lane.b32.xlu0 %v1678, 64
  %v1794 = vpop.permute.xlu0 %1793
  %1795 = vrot.lane.b32.xlu0 %v1679, 64
  %v1796 = vpop.permute.xlu0 %1795
  %1797 = vrot.lane.b32.xlu0 %v1680, 64
  %v1798 = vpop.permute.xlu0 %1797
  %1799 = vrot.lane.b32.xlu0 %v1681, 64
  %v1800 = vpop.permute.xlu0 %1799
  %1801 = vrot.lane.b32.xlu0 %v1682, 64
  %v1802 = vpop.permute.xlu0 %1801
  %v1811 = vadd.f32 %v1458, %v1788
  %v1812 = vadd.f32 %v1460, %v1790
  %v1813 = vadd.f32 %v1463, %v1792
  %v1814 = vadd.f32 %v1465, %v1794
  %v1815 = vadd.f32 %v1468, %v1796
  %v1816 = vadd.f32 %v1470, %v1798
  %v1817 = vadd.f32 %v1473, %v1800
  %v1818 = vadd.f32 %v1475, %v1802
  %vm1819 = vcmask 1048064
  %v1820 = vsel %vm1819, %v1811, -inf
  %1821 = vmax.xlane.f32.xlu0 %v1820
  %v1822 = vpop.xlane.xlu0 %1821
  %v1823 = vsel %vm1819, %v1812, -inf
  %1824 = vmax.xlane.f32.xlu0 %v1823
  %v1825 = vpop.xlane.xlu0 %1824
  %v1826 = vsel %vm1819, %v1813, -inf
  %1827 = vmax.xlane.f32.xlu0 %v1826
  %v1828 = vpop.xlane.xlu0 %1827
  %v1829 = vsel %vm1819, %v1814, -inf
  %1830 = vmax.xlane.f32.xlu0 %v1829
  %v1831 = vpop.xlane.xlu0 %1830
  %v1832 = vsel %vm1819, %v1815, -inf
  %1833 = vmax.xlane.f32.xlu0 %v1832
  %v1834 = vpop.xlane.xlu0 %1833
  %v1835 = vsel %vm1819, %v1816, -inf
  %1836 = vmax.xlane.f32.xlu0 %v1835
  %v1837 = vpop.xlane.xlu0 %1836
  %v1838 = vsel %vm1819, %v1817, -inf
  %1839 = vmax.xlane.f32.xlu0 %v1838
  %v1840 = vpop.xlane.xlu0 %1839
  %v1841 = vsel %vm1819, %v1818, -inf
  %1842 = vmax.xlane.f32.xlu0 %v1841
  %v1843 = vpop.xlane.xlu0 %1842
  %v1844 = vsub.f32 %v1811, %v1822
  %v1845 = vsub.f32 %v1812, %v1825
  %v1846 = vsub.f32 %v1813, %v1828
  %v1847 = vsub.f32 %v1814, %v1831
  %v1848 = vsub.f32 %v1815, %v1834
  %v1849 = vsub.f32 %v1816, %v1837
  %v1850 = vsub.f32 %v1817, %v1840
  %v1851 = vsub.f32 %v1818, %v1843
  %v1852 = vmul.f32 %v1844, 1.442695
  %v1853 = vpow.pop %v1852
  %v1854 = vmul.f32 %v1845, 1.442695
  %v1855 = vpow.pop %v1854
  %v1856 = vmul.f32 %v1846, 1.442695
  %v1857 = vpow.pop %v1856
  %v1858 = vmul.f32 %v1847, 1.442695
  %v1859 = vpow.pop %v1858
  %v1860 = vmul.f32 %v1848, 1.442695
  %v1861 = vpow.pop %v1860
  %v1862 = vmul.f32 %v1849, 1.442695
  %v1863 = vpow.pop %v1862
  %v1864 = vmul.f32 %v1850, 1.442695
  %v1865 = vpow.pop %v1864
  %v1866 = vmul.f32 %v1851, 1.442695
  %v1867 = vpow.pop %v1866
  %1876 = vrot.lane.b32.xlu0 %v1853, 64
  %v1877 = vpop.permute.xlu0 %1876
  %1878 = vrot.lane.b32.xlu0 %v1855, 64
  %v1879 = vpop.permute.xlu0 %1878
  %1880 = vrot.lane.b32.xlu0 %v1857, 64
  %v1881 = vpop.permute.xlu0 %1880
  %1882 = vrot.lane.b32.xlu0 %v1859, 64
  %v1883 = vpop.permute.xlu0 %1882
  %1884 = vrot.lane.b32.xlu0 %v1861, 64
  %v1885 = vpop.permute.xlu0 %1884
  %1886 = vrot.lane.b32.xlu0 %v1863, 64
  %v1887 = vpop.permute.xlu0 %1886
  %1888 = vrot.lane.b32.xlu0 %v1865, 64
  %v1889 = vpop.permute.xlu0 %1888
  %1890 = vrot.lane.b32.xlu0 %v1867, 64
  %v1891 = vpop.permute.xlu0 %1890
  %v1900 = vsel %vm378, %v1877, 0.0
  %1901 = vadd.xlane.f32.xlu0 %v1900
  %v1902 = vpop.xlane.xlu0 %1901
  %v1903 = vsel %vm378, %v1879, 0.0
  %1904 = vadd.xlane.f32.xlu0 %v1903
  %v1905 = vpop.xlane.xlu0 %1904
  %v1906 = vsel %vm378, %v1881, 0.0
  %1907 = vadd.xlane.f32.xlu0 %v1906
  %v1908 = vpop.xlane.xlu0 %1907
  %v1909 = vsel %vm378, %v1883, 0.0
  %1910 = vadd.xlane.f32.xlu0 %v1909
  %v1911 = vpop.xlane.xlu0 %1910
  %v1912 = vsel %vm378, %v1885, 0.0
  %1913 = vadd.xlane.f32.xlu0 %v1912
  %v1914 = vpop.xlane.xlu0 %1913
  %v1915 = vsel %vm378, %v1887, 0.0
  %1916 = vadd.xlane.f32.xlu0 %v1915
  %v1917 = vpop.xlane.xlu0 %1916
  %v1918 = vsel %vm378, %v1889, 0.0
  %1919 = vadd.xlane.f32.xlu0 %v1918
  %v1920 = vpop.xlane.xlu0 %1919
  %v1921 = vsel %vm378, %v1891, 0.0
  %1922 = vadd.xlane.f32.xlu0 %v1921
  %v1923 = vpop.xlane.xlu0 %1922
  %v1924 = vrcp.pop %v1902
  %v1925 = vrcp.pop %v1905
  %v1926 = vrcp.pop %v1908
  %v1927 = vrcp.pop %v1911
  %v1928 = vrcp.pop %v1914
  %v1929 = vrcp.pop %v1917
  %v1930 = vrcp.pop %v1920
  %v1931 = vrcp.pop %v1923
  %v1932 = vmul.f32 %v1853, %v1924
  %v1933 = vmul.f32 %v1855, %v1925
  %v1934 = vmul.f32 %v1857, %v1926
  %v1935 = vmul.f32 %v1859, %v1927
  %v1936 = vmul.f32 %v1861, %v1928
  %v1937 = vmul.f32 %v1863, %v1929
  %v1938 = vmul.f32 %v1865, %v1930
  %v1939 = vmul.f32 %v1867, %v1931
  %v1940 = vadd.f32 %v1487, %v1675
  %v1941 = vadd.f32 %v1489, %v1676
  %v1942 = vadd.f32 %v1492, %v1677
  %v1943 = vadd.f32 %v1494, %v1678
  %v1944 = vadd.f32 %v1497, %v1679
  %v1945 = vadd.f32 %v1499, %v1680
  %v1946 = vadd.f32 %v1502, %v1681
  %v1947 = vadd.f32 %v1504, %v1682
  %v1948 = vsel %vm378, %v1940, -inf
  %1949 = vmax.xlane.f32.xlu0 %v1948
  %v1950 = vpop.xlane.xlu0 %1949
  %v1951 = vsel %vm378, %v1941, -inf
  %1952 = vmax.xlane.f32.xlu0 %v1951
  %v1953 = vpop.xlane.xlu0 %1952
  %v1954 = vsel %vm378, %v1942, -inf
  %1955 = vmax.xlane.f32.xlu0 %v1954
  %v1956 = vpop.xlane.xlu0 %1955
  %v1957 = vsel %vm378, %v1943, -inf
  %1958 = vmax.xlane.f32.xlu0 %v1957
  %v1959 = vpop.xlane.xlu0 %1958
  %v1960 = vsel %vm378, %v1944, -inf
  %1961 = vmax.xlane.f32.xlu0 %v1960
  %v1962 = vpop.xlane.xlu0 %1961
  %v1963 = vsel %vm378, %v1945, -inf
  %1964 = vmax.xlane.f32.xlu0 %v1963
  %v1965 = vpop.xlane.xlu0 %1964
  %v1966 = vsel %vm378, %v1946, -inf
  %1967 = vmax.xlane.f32.xlu0 %v1966
  %v1968 = vpop.xlane.xlu0 %1967
  %v1969 = vsel %vm378, %v1947, -inf
  %1970 = vmax.xlane.f32.xlu0 %v1969
  %v1971 = vpop.xlane.xlu0 %1970
  %v1972 = vsub.f32 %v1940, %v1950
  %v1973 = vsub.f32 %v1941, %v1953
  %v1974 = vsub.f32 %v1942, %v1956
  %v1975 = vsub.f32 %v1943, %v1959
  %v1976 = vsub.f32 %v1944, %v1962
  %v1977 = vsub.f32 %v1945, %v1965
  %v1978 = vsub.f32 %v1946, %v1968
  %v1979 = vsub.f32 %v1947, %v1971
  %v1980 = vmul.f32 %v1972, 1.442695
  %v1981 = vpow.pop %v1980
  %v1982 = vmul.f32 %v1973, 1.442695
  %v1983 = vpow.pop %v1982
  %v1984 = vmul.f32 %v1974, 1.442695
  %v1985 = vpow.pop %v1984
  %v1986 = vmul.f32 %v1975, 1.442695
  %v1987 = vpow.pop %v1986
  %v1988 = vmul.f32 %v1976, 1.442695
  %v1989 = vpow.pop %v1988
  %v1990 = vmul.f32 %v1977, 1.442695
  %v1991 = vpow.pop %v1990
  %v1992 = vmul.f32 %v1978, 1.442695
  %v1993 = vpow.pop %v1992
  %v1994 = vmul.f32 %v1979, 1.442695
  %v1995 = vpow.pop %v1994
  %v1996 = vsel %vm378, %v1981, 0.0
  %1997 = vadd.xlane.f32.xlu0 %v1996
  %v1998 = vpop.xlane.xlu0 %1997
  %v1999 = vsel %vm378, %v1983, 0.0
  %2000 = vadd.xlane.f32.xlu0 %v1999
  %v2001 = vpop.xlane.xlu0 %2000
  %v2002 = vsel %vm378, %v1985, 0.0
  %2003 = vadd.xlane.f32.xlu0 %v2002
  %v2004 = vpop.xlane.xlu0 %2003
  %v2005 = vsel %vm378, %v1987, 0.0
  %2006 = vadd.xlane.f32.xlu0 %v2005
  %v2007 = vpop.xlane.xlu0 %2006
  %v2008 = vsel %vm378, %v1989, 0.0
  %2009 = vadd.xlane.f32.xlu0 %v2008
  %v2010 = vpop.xlane.xlu0 %2009
  %v2011 = vsel %vm378, %v1991, 0.0
  %2012 = vadd.xlane.f32.xlu0 %v2011
  %v2013 = vpop.xlane.xlu0 %2012
  %v2014 = vsel %vm378, %v1993, 0.0
  %2015 = vadd.xlane.f32.xlu0 %v2014
  %v2016 = vpop.xlane.xlu0 %2015
  %v2017 = vsel %vm378, %v1995, 0.0
  %2018 = vadd.xlane.f32.xlu0 %v2017
  %v2019 = vpop.xlane.xlu0 %2018
  %v2020 = vrcp.pop %v1998
  %v2021 = vrcp.pop %v2001
  %v2022 = vrcp.pop %v2004
  %v2023 = vrcp.pop %v2007
  %v2024 = vrcp.pop %v2010
  %v2025 = vrcp.pop %v2013
  %v2026 = vrcp.pop %v2016
  %v2027 = vrcp.pop %v2019
  %v2028 = vmul.f32 %v1981, %v2020
  %v2029 = vmul.f32 %v1983, %v2021
  %v2030 = vmul.f32 %v1985, %v2022
  %v2031 = vmul.f32 %v1987, %v2023
  %v2032 = vmul.f32 %v1989, %v2024
  %v2033 = vmul.f32 %v1991, %v2025
  %v2034 = vmul.f32 %v1993, %v2026
  %v2035 = vmul.f32 %v1995, %v2027
  %v2036 = vadd.f32 %v1487, %v1788
  %v2037 = vadd.f32 %v1489, %v1790
  %v2038 = vadd.f32 %v1492, %v1792
  %v2039 = vadd.f32 %v1494, %v1794
  %v2040 = vadd.f32 %v1497, %v1796
  %v2041 = vadd.f32 %v1499, %v1798
  %v2042 = vadd.f32 %v1502, %v1800
  %v2043 = vadd.f32 %v1504, %v1802
  %v2044 = vsel %vm1819, %v2036, -inf
  %2045 = vmax.xlane.f32.xlu0 %v2044
  %v2046 = vpop.xlane.xlu0 %2045
  %v2047 = vsel %vm1819, %v2037, -inf
  %2048 = vmax.xlane.f32.xlu0 %v2047
  %v2049 = vpop.xlane.xlu0 %2048
  %v2050 = vsel %vm1819, %v2038, -inf
  %2051 = vmax.xlane.f32.xlu0 %v2050
  %v2052 = vpop.xlane.xlu0 %2051
  %v2053 = vsel %vm1819, %v2039, -inf
  %2054 = vmax.xlane.f32.xlu0 %v2053
  %v2055 = vpop.xlane.xlu0 %2054
  %v2056 = vsel %vm1819, %v2040, -inf
  %2057 = vmax.xlane.f32.xlu0 %v2056
  %v2058 = vpop.xlane.xlu0 %2057
  %v2059 = vsel %vm1819, %v2041, -inf
  %2060 = vmax.xlane.f32.xlu0 %v2059
  %v2061 = vpop.xlane.xlu0 %2060
  %v2062 = vsel %vm1819, %v2042, -inf
  %2063 = vmax.xlane.f32.xlu0 %v2062
  %v2064 = vpop.xlane.xlu0 %2063
  %v2065 = vsel %vm1819, %v2043, -inf
  %2066 = vmax.xlane.f32.xlu0 %v2065
  %v2067 = vpop.xlane.xlu0 %2066
  %v2068 = vsub.f32 %v2036, %v2046
  %v2069 = vsub.f32 %v2037, %v2049
  %v2070 = vsub.f32 %v2038, %v2052
  %v2071 = vsub.f32 %v2039, %v2055
  %v2072 = vsub.f32 %v2040, %v2058
  %v2073 = vsub.f32 %v2041, %v2061
  %v2074 = vsub.f32 %v2042, %v2064
  %v2075 = vsub.f32 %v2043, %v2067
  %v2076 = vmul.f32 %v2068, 1.442695
  %v2077 = vpow.pop %v2076
  %v2078 = vmul.f32 %v2069, 1.442695
  %v2079 = vpow.pop %v2078
  %v2080 = vmul.f32 %v2070, 1.442695
  %v2081 = vpow.pop %v2080
  %v2082 = vmul.f32 %v2071, 1.442695
  %v2083 = vpow.pop %v2082
  %v2084 = vmul.f32 %v2072, 1.442695
  %v2085 = vpow.pop %v2084
  %v2086 = vmul.f32 %v2073, 1.442695
  %v2087 = vpow.pop %v2086
  %v2088 = vmul.f32 %v2074, 1.442695
  %v2089 = vpow.pop %v2088
  %v2090 = vmul.f32 %v2075, 1.442695
  %v2091 = vpow.pop %v2090
  %2100 = vrot.lane.b32.xlu0 %v2077, 64
  %v2101 = vpop.permute.xlu0 %2100
  %2102 = vrot.lane.b32.xlu0 %v2079, 64
  %v2103 = vpop.permute.xlu0 %2102
  %2104 = vrot.lane.b32.xlu0 %v2081, 64
  %v2105 = vpop.permute.xlu0 %2104
  %2106 = vrot.lane.b32.xlu0 %v2083, 64
  %v2107 = vpop.permute.xlu0 %2106
  %2108 = vrot.lane.b32.xlu0 %v2085, 64
  %v2109 = vpop.permute.xlu0 %2108
  %2110 = vrot.lane.b32.xlu0 %v2087, 64
  %v2111 = vpop.permute.xlu0 %2110
  %2112 = vrot.lane.b32.xlu0 %v2089, 64
  %v2113 = vpop.permute.xlu0 %2112
  %2114 = vrot.lane.b32.xlu0 %v2091, 64
  %v2115 = vpop.permute.xlu0 %2114
  %v2124 = vsel %vm378, %v2101, 0.0
  %2125 = vadd.xlane.f32.xlu0 %v2124
  %v2126 = vpop.xlane.xlu0 %2125
  %v2127 = vsel %vm378, %v2103, 0.0
  %2128 = vadd.xlane.f32.xlu0 %v2127
  %v2129 = vpop.xlane.xlu0 %2128
  %v2130 = vsel %vm378, %v2105, 0.0
  %2131 = vadd.xlane.f32.xlu0 %v2130
  %v2132 = vpop.xlane.xlu0 %2131
  %v2133 = vsel %vm378, %v2107, 0.0
  %2134 = vadd.xlane.f32.xlu0 %v2133
  %v2135 = vpop.xlane.xlu0 %2134
  %v2136 = vsel %vm378, %v2109, 0.0
  %2137 = vadd.xlane.f32.xlu0 %v2136
  %v2138 = vpop.xlane.xlu0 %2137
  %v2139 = vsel %vm378, %v2111, 0.0
  %2140 = vadd.xlane.f32.xlu0 %v2139
  %v2141 = vpop.xlane.xlu0 %2140
  %v2142 = vsel %vm378, %v2113, 0.0
  %2143 = vadd.xlane.f32.xlu0 %v2142
  %v2144 = vpop.xlane.xlu0 %2143
  %v2145 = vsel %vm378, %v2115, 0.0
  %2146 = vadd.xlane.f32.xlu0 %v2145
  %v2147 = vpop.xlane.xlu0 %2146
  %v2148 = vrcp.pop %v2126
  %v2149 = vrcp.pop %v2129
  %v2150 = vrcp.pop %v2132
  %v2151 = vrcp.pop %v2135
  %v2152 = vrcp.pop %v2138
  %v2153 = vrcp.pop %v2141
  %v2154 = vrcp.pop %v2144
  %v2155 = vrcp.pop %v2147
  %v2156 = vmul.f32 %v2077, %v2148
  %v2157 = vmul.f32 %v2079, %v2149
  %v2158 = vmul.f32 %v2081, %v2150
  %v2159 = vmul.f32 %v2083, %v2151
  %v2160 = vmul.f32 %v2085, %v2152
  %v2161 = vmul.f32 %v2087, %v2153
  %v2162 = vmul.f32 %v2089, %v2154
  %v2163 = vmul.f32 %v2091, %v2155
  %v2164 = vsel %vm378, %v1771, %v1932
  %v2165 = vsel %vm378, %v1772, %v1933
  %v2166 = vsel %vm378, %v1773, %v1934
  %v2167 = vsel %vm378, %v1774, %v1935
  %v2168 = vsel %vm378, %v1775, %v1936
  %v2169 = vsel %vm378, %v1776, %v1937
  %v2170 = vsel %vm378, %v1777, %v1938
  %v2171 = vsel %vm378, %v1778, %v1939
  %v2172 = vsel %vm378, %v2028, %v2156
  %v2173 = vsel %vm378, %v2029, %v2157
  %v2174 = vsel %vm378, %v2030, %v2158
  %v2175 = vsel %vm378, %v2031, %v2159
  %v2176 = vsel %vm378, %v2032, %v2160
  %v2177 = vsel %vm378, %v2033, %v2161
  %v2178 = vsel %vm378, %v2034, %v2162
  %v2179 = vsel %vm378, %v2035, %v2163
  %v2180 = vpack.c.bf16 %v1598, %v1596
  %v2181 = vpack.c.bf16 %v1603, %v1601
  %v2182 = vpack.c.bf16 %v1608, %v1606
  %v2183 = vpack.c.bf16 %v1613, %v1611
  %v2184 = vpack.c.bf16 %v1618, %v1616
  %v2185 = vpack.c.bf16 %v1623, %v1621
  %v2186 = vpack.c.bf16 %v1628, %v1626
  %v2187 = vpack.c.bf16 %v1633, %v1631
  %v2188 = vpack.c.bf16 %v1638, %v1636
  %v2189 = vpack.c.bf16 %v1643, %v1641
  %v2190 = vpack.c.bf16 %v1648, %v1646
  %v2191 = vpack.c.bf16 %v1653, %v1651
  %v2192 = vpack.c.bf16 %v1658, %v1656
  %v2193 = vpack.c.bf16 %v1663, %v1661
  %v2194 = vpack.c.bf16 %v1668, %v1666
  %v2195 = vpack.c.bf16 %v1673, %v1671
  %v2196 = vpack.c.bf16 %v2165, %v2164
  %v2197 = vpack.c.bf16 %v2173, %v2172
  %v2198 = vpack.c.bf16 %v2167, %v2166
  %v2199 = vpack.c.bf16 %v2175, %v2174
  %v2200 = vpack.c.bf16 %v2169, %v2168
  %v2201 = vpack.c.bf16 %v2177, %v2176
  %v2202 = vpack.c.bf16 %v2171, %v2170
  %v2203 = vpack.c.bf16 %v2179, %v2178
  %2204 = vmatpush.bf16.msra.mxu0 %v2187
  %2205 = vmatpush.bf16.msra.mxu0 %v2186
  %2206 = vmatpush.bf16.msra.mxu0 %v2185
  %2207 = vmatpush.bf16.msra.mxu0 %v2184
  %2208 = vmatpush.bf16.msra.mxu0 %v2183
  %2209 = vmatpush.bf16.msra.mxu0 %v2182
  %2210 = vmatpush.bf16.msra.mxu0 %v2181
  %2211 = vmatpush.bf16.msra.mxu0 %v2180
  %2212 = vmatmul.bf16.gmra.mxu0 %v2196
  %v2213 = vpop.f32.mrf.mxu0
  %v2214 = vadd.f32 0.0, %v2213
  %v2215 = vpop.f32.mrf.mxu0
  %v2216 = vadd.f32 0.0, %v2215
  %2217 = vmatmul.bf16.gmra.mxu0 %v2198
  %v2218 = vpop.f32.mrf.mxu0
  %v2219 = vadd.f32 0.0, %v2218
  %v2220 = vpop.f32.mrf.mxu0
  %v2221 = vadd.f32 0.0, %v2220
  %2222 = vmatmul.bf16.gmra.mxu0 %v2200
  %v2223 = vpop.f32.mrf.mxu0
  %v2224 = vadd.f32 0.0, %v2223
  %v2225 = vpop.f32.mrf.mxu0
  %v2226 = vadd.f32 0.0, %v2225
  %2227 = vmatmul.bf16.gmra.mxu0 %v2202
  %v2228 = vpop.f32.mrf.mxu0
  %v2229 = vadd.f32 0.0, %v2228
  %v2230 = vpop.f32.mrf.mxu0
  %v2231 = vadd.f32 0.0, %v2230
  %2232 = vdwg.mxu0
  %2233 = vmatpush.bf16.msra.mxu0 %v2195
  %2234 = vmatpush.bf16.msra.mxu0 %v2194
  %2235 = vmatpush.bf16.msra.mxu0 %v2193
  %2236 = vmatpush.bf16.msra.mxu0 %v2192
  %2237 = vmatpush.bf16.msra.mxu0 %v2191
  %2238 = vmatpush.bf16.msra.mxu0 %v2190
  %2239 = vmatpush.bf16.msra.mxu0 %v2189
  %2240 = vmatpush.bf16.msra.mxu0 %v2188
  %2241 = vmatmul.bf16.gmra.mxu0 %v2197
  %v2242 = vpop.f32.mrf.mxu0
  %v2243 = vadd.f32 %v2214, %v2242
  %v2244 = vpop.f32.mrf.mxu0
  %v2245 = vadd.f32 %v2216, %v2244
  %2246 = vmatmul.bf16.gmra.mxu0 %v2199
  %v2247 = vpop.f32.mrf.mxu0
  %v2248 = vadd.f32 %v2219, %v2247
  %v2249 = vpop.f32.mrf.mxu0
  %v2250 = vadd.f32 %v2221, %v2249
  %2251 = vmatmul.bf16.gmra.mxu0 %v2201
  %v2252 = vpop.f32.mrf.mxu0
  %v2253 = vadd.f32 %v2224, %v2252
  %v2254 = vpop.f32.mrf.mxu0
  %v2255 = vadd.f32 %v2226, %v2254
  %2256 = vmatmul.bf16.gmra.mxu0 %v2203
  %v2257 = vpop.f32.mrf.mxu0
  %v2258 = vadd.f32 %v2229, %v2257
  %v2259 = vpop.f32.mrf.mxu0
  %v2260 = vadd.f32 %v2231, %v2259
  %2261 = vdwg.mxu0
  %v2262 = vadd.f32 %v637, %v2243
  %v2263 = vadd.f32 %v638, %v2245
  %v2264 = vadd.f32 %v639, %v2248
  %v2265 = vadd.f32 %v640, %v2250
  %v2266 = vadd.f32 %v641, %v2253
  %v2267 = vadd.f32 %v642, %v2255
  %v2268 = vadd.f32 %v643, %v2258
  %v2269 = vadd.f32 %v644, %v2260
  %v2270 = vld [vmem:[%s1 + $0x34] ss:$0 sm:$0xff]
  %v2271 = vadd.f32 %v2262, %v2270
  %v2272 = vadd.f32 %v2263, %v2270
  %v2273 = vadd.f32 %v2264, %v2270
  %v2274 = vadd.f32 %v2265, %v2270
  %v2275 = vadd.f32 %v2266, %v2270
  %v2276 = vadd.f32 %v2267, %v2270
  %v2277 = vadd.f32 %v2268, %v2270
  %v2278 = vadd.f32 %v2269, %v2270
  %v2279 = vld [vmem:[%s1 + $0x30] ss:$0 sm:$0xff]
  %v2280 = vld [vmem:[%s1 + $0x31] ss:$0 sm:$0xff]
  %v2281 = vsel %vm378, %v2271, 0.0
  %2282 = vadd.xlane.f32.xlu0 %v2281
  %v2283 = vpop.xlane.xlu0 %2282
  %v2284 = vsel %vm378, %v2272, 0.0
  %2285 = vadd.xlane.f32.xlu0 %v2284
  %v2286 = vpop.xlane.xlu0 %2285
  %v2287 = vsel %vm378, %v2273, 0.0
  %2288 = vadd.xlane.f32.xlu0 %v2287
  %v2289 = vpop.xlane.xlu0 %2288
  %v2290 = vsel %vm378, %v2274, 0.0
  %2291 = vadd.xlane.f32.xlu0 %v2290
  %v2292 = vpop.xlane.xlu0 %2291
  %v2293 = vsel %vm378, %v2275, 0.0
  %2294 = vadd.xlane.f32.xlu0 %v2293
  %v2295 = vpop.xlane.xlu0 %2294
  %v2296 = vsel %vm378, %v2276, 0.0
  %2297 = vadd.xlane.f32.xlu0 %v2296
  %v2298 = vpop.xlane.xlu0 %2297
  %v2299 = vsel %vm378, %v2277, 0.0
  %2300 = vadd.xlane.f32.xlu0 %v2299
  %v2301 = vpop.xlane.xlu0 %2300
  %v2302 = vsel %vm378, %v2278, 0.0
  %2303 = vadd.xlane.f32.xlu0 %v2302
  %v2304 = vpop.xlane.xlu0 %2303
  %v2305 = vmul.f32 %v2283, %v476
  %v2306 = vmul.f32 %v2286, %v476
  %v2307 = vmul.f32 %v2289, %v476
  %v2308 = vmul.f32 %v2292, %v476
  %v2309 = vmul.f32 %v2295, %v476
  %v2310 = vmul.f32 %v2298, %v476
  %v2311 = vmul.f32 %v2301, %v476
  %v2312 = vmul.f32 %v2304, %v476
  %v2313 = vsub.f32 %v2271, %v2305
  %v2314 = vsub.f32 %v2272, %v2306
  %v2315 = vsub.f32 %v2273, %v2307
  %v2316 = vsub.f32 %v2274, %v2308
  %v2317 = vsub.f32 %v2275, %v2309
  %v2318 = vsub.f32 %v2276, %v2310
  %v2319 = vsub.f32 %v2277, %v2311
  %v2320 = vsub.f32 %v2278, %v2312
  %v2321 = vmul.f32 %v2313, %v2313
  %v2322 = vmul.f32 %v2314, %v2314
  %v2323 = vmul.f32 %v2315, %v2315
  %v2324 = vmul.f32 %v2316, %v2316
  %v2325 = vmul.f32 %v2317, %v2317
  %v2326 = vmul.f32 %v2318, %v2318
  %v2327 = vmul.f32 %v2319, %v2319
  %v2328 = vmul.f32 %v2320, %v2320
  %v2329 = vsel %vm378, %v2321, 0.0
  %2330 = vadd.xlane.f32.xlu0 %v2329
  %v2331 = vpop.xlane.xlu0 %2330
  %v2332 = vsel %vm378, %v2322, 0.0
  %2333 = vadd.xlane.f32.xlu0 %v2332
  %v2334 = vpop.xlane.xlu0 %2333
  %v2335 = vsel %vm378, %v2323, 0.0
  %2336 = vadd.xlane.f32.xlu0 %v2335
  %v2337 = vpop.xlane.xlu0 %2336
  %v2338 = vsel %vm378, %v2324, 0.0
  %2339 = vadd.xlane.f32.xlu0 %v2338
  %v2340 = vpop.xlane.xlu0 %2339
  %v2341 = vsel %vm378, %v2325, 0.0
  %2342 = vadd.xlane.f32.xlu0 %v2341
  %v2343 = vpop.xlane.xlu0 %2342
  %v2344 = vsel %vm378, %v2326, 0.0
  %2345 = vadd.xlane.f32.xlu0 %v2344
  %v2346 = vpop.xlane.xlu0 %2345
  %v2347 = vsel %vm378, %v2327, 0.0
  %2348 = vadd.xlane.f32.xlu0 %v2347
  %v2349 = vpop.xlane.xlu0 %2348
  %v2350 = vsel %vm378, %v2328, 0.0
  %2351 = vadd.xlane.f32.xlu0 %v2350
  %v2352 = vpop.xlane.xlu0 %2351
  %v2353 = vmul.f32 %v2331, %v476
  %v2354 = vmul.f32 %v2334, %v476
  %v2355 = vmul.f32 %v2337, %v476
  %v2356 = vmul.f32 %v2340, %v476
  %v2357 = vmul.f32 %v2343, %v476
  %v2358 = vmul.f32 %v2346, %v476
  %v2359 = vmul.f32 %v2349, %v476
  %v2360 = vmul.f32 %v2352, %v476
  %v2361 = vadd.f32 %v2353, 1e-05
  %v2362 = vadd.f32 %v2354, 1e-05
  %v2363 = vadd.f32 %v2355, 1e-05
  %v2364 = vadd.f32 %v2356, 1e-05
  %v2365 = vadd.f32 %v2357, 1e-05
  %v2366 = vadd.f32 %v2358, 1e-05
  %v2367 = vadd.f32 %v2359, 1e-05
  %v2368 = vadd.f32 %v2360, 1e-05
  %v2369 = vrsqrt.pop %v2361
  %v2370 = vmul.f32 %v2369, %v2361
  %v2371 = vmul.f32 %v2370, %v2369
  %v2372 = vmul.f32 0.5, %v2371
  %v2373 = vsub.f32 1.5, %v2372
  %v2374 = vmul.f32 %v2369, %v2373
  %vm2375 = vweird.f32 %v2361
  %vm2376 = vweird.f32 %v2369
  %vm2377 = vmor %vm2375, %vm2376
  %v2378 = vsel %vm2377, %v2369, %v2374
  %v2379 = vrsqrt.pop %v2362
  %v2380 = vmul.f32 %v2379, %v2362
  %v2381 = vmul.f32 %v2380, %v2379
  %v2382 = vmul.f32 0.5, %v2381
  %v2383 = vsub.f32 1.5, %v2382
  %v2384 = vmul.f32 %v2379, %v2383
  %vm2385 = vweird.f32 %v2362
  %vm2386 = vweird.f32 %v2379
  %vm2387 = vmor %vm2385, %vm2386
  %v2388 = vsel %vm2387, %v2379, %v2384
  %v2389 = vrsqrt.pop %v2363
  %v2390 = vmul.f32 %v2389, %v2363
  %v2391 = vmul.f32 %v2390, %v2389
  %v2392 = vmul.f32 0.5, %v2391
  %v2393 = vsub.f32 1.5, %v2392
  %v2394 = vmul.f32 %v2389, %v2393
  %vm2395 = vweird.f32 %v2363
  %vm2396 = vweird.f32 %v2389
  %vm2397 = vmor %vm2395, %vm2396
  %v2398 = vsel %vm2397, %v2389, %v2394
  %v2399 = vrsqrt.pop %v2364
  %v2400 = vmul.f32 %v2399, %v2364
  %v2401 = vmul.f32 %v2400, %v2399
  %v2402 = vmul.f32 0.5, %v2401
  %v2403 = vsub.f32 1.5, %v2402
  %v2404 = vmul.f32 %v2399, %v2403
  %vm2405 = vweird.f32 %v2364
  %vm2406 = vweird.f32 %v2399
  %vm2407 = vmor %vm2405, %vm2406
  %v2408 = vsel %vm2407, %v2399, %v2404
  %v2409 = vrsqrt.pop %v2365
  %v2410 = vmul.f32 %v2409, %v2365
  %v2411 = vmul.f32 %v2410, %v2409
  %v2412 = vmul.f32 0.5, %v2411
  %v2413 = vsub.f32 1.5, %v2412
  %v2414 = vmul.f32 %v2409, %v2413
  %vm2415 = vweird.f32 %v2365
  %vm2416 = vweird.f32 %v2409
  %vm2417 = vmor %vm2415, %vm2416
  %v2418 = vsel %vm2417, %v2409, %v2414
  %v2419 = vrsqrt.pop %v2366
  %v2420 = vmul.f32 %v2419, %v2366
  %v2421 = vmul.f32 %v2420, %v2419
  %v2422 = vmul.f32 0.5, %v2421
  %v2423 = vsub.f32 1.5, %v2422
  %v2424 = vmul.f32 %v2419, %v2423
  %vm2425 = vweird.f32 %v2366
  %vm2426 = vweird.f32 %v2419
  %vm2427 = vmor %vm2425, %vm2426
  %v2428 = vsel %vm2427, %v2419, %v2424
  %v2429 = vrsqrt.pop %v2367
  %v2430 = vmul.f32 %v2429, %v2367
  %v2431 = vmul.f32 %v2430, %v2429
  %v2432 = vmul.f32 0.5, %v2431
  %v2433 = vsub.f32 1.5, %v2432
  %v2434 = vmul.f32 %v2429, %v2433
  %vm2435 = vweird.f32 %v2367
  %vm2436 = vweird.f32 %v2429
  %vm2437 = vmor %vm2435, %vm2436
  %v2438 = vsel %vm2437, %v2429, %v2434
  %v2439 = vrsqrt.pop %v2368
  %v2440 = vmul.f32 %v2439, %v2368
  %v2441 = vmul.f32 %v2440, %v2439
  %v2442 = vmul.f32 0.5, %v2441
  %v2443 = vsub.f32 1.5, %v2442
  %v2444 = vmul.f32 %v2439, %v2443
  %vm2445 = vweird.f32 %v2368
  %vm2446 = vweird.f32 %v2439
  %vm2447 = vmor %vm2445, %vm2446
  %v2448 = vsel %vm2447, %v2439, %v2444
  %v2449 = vmul.f32 %v2313, %v2378
  %v2450 = vmul.f32 %v2314, %v2388
  %v2451 = vmul.f32 %v2315, %v2398
  %v2452 = vmul.f32 %v2316, %v2408
  %v2453 = vmul.f32 %v2317, %v2418
  %v2454 = vmul.f32 %v2318, %v2428
  %v2455 = vmul.f32 %v2319, %v2438
  %v2456 = vmul.f32 %v2320, %v2448
  %v2457 = vmul.f32 %v2449, %v2279
  %v2458 = vmul.f32 %v2450, %v2279
  %v2459 = vmul.f32 %v2451, %v2279
  %v2460 = vmul.f32 %v2452, %v2279
  %v2461 = vmul.f32 %v2453, %v2279
  %v2462 = vmul.f32 %v2454, %v2279
  %v2463 = vmul.f32 %v2455, %v2279
  %v2464 = vmul.f32 %v2456, %v2279
  %v2465 = vadd.f32 %v2457, %v2280
  %v2466 = vadd.f32 %v2458, %v2280
  %v2467 = vadd.f32 %v2459, %v2280
  %v2468 = vadd.f32 %v2460, %v2280
  %v2469 = vadd.f32 %v2461, %v2280
  %v2470 = vadd.f32 %v2462, %v2280
  %v2471 = vadd.f32 %v2463, %v2280
  %v2472 = vadd.f32 %v2464, %v2280
  %v2473 = vld [vmem:[%s4 + $0x50] sm:$0xff]
  %v2474 = vld [vmem:[%s4 + $0x58] sm:$0xff]
  %v2475 = vld [vmem:[%s4 + $0x60] sm:$0xff]
  %v2476 = vld [vmem:[%s4 + $0x68] sm:$0xff]
  %v2477 = vld [vmem:[%s4 + $0x70] sm:$0xff]
  %v2478 = vld [vmem:[%s4 + $0x78] sm:$0xff]
  %v2479 = vld [vmem:[%s4 + $0x80] sm:$0xff]
  %v2480 = vld [vmem:[%s4 + $0x88] sm:$0xff]
  %v2481 = vpack.c.bf16 %v2466, %v2465
  %v2482 = vpack.c.bf16 %v2468, %v2467
  %v2483 = vpack.c.bf16 %v2470, %v2469
  %v2484 = vpack.c.bf16 %v2472, %v2471
  %s2485 = scalar_lea.vmem %s1, 55
  %v2486 = vld [vmem:[%s2485] ss:$8 sm:$0x3]
  %v2488 = vperm.slane %v2486, 0
  %v2489 = vperm.slane %v2486, 1
  %v2500 = vunpack.c.l.b16 %v2473
  %v2501 = vunpack.c.h.b16 %v2473
  %v2502 = vunpack.c.l.b16 %v2474
  %v2503 = vunpack.c.h.b16 %v2474
  %v2504 = vunpack.c.l.b16 %v2475
  %v2505 = vunpack.c.h.b16 %v2475
  %v2506 = vunpack.c.l.b16 %v2476
  %v2507 = vunpack.c.h.b16 %v2476
  %v2508 = vunpack.c.l.b16 %v2477
  %v2509 = vunpack.c.h.b16 %v2477
  %v2510 = vunpack.c.l.b16 %v2478
  %v2511 = vunpack.c.h.b16 %v2478
  %v2512 = vunpack.c.l.b16 %v2479
  %v2513 = vunpack.c.h.b16 %v2479
  %v2514 = vunpack.c.l.b16 %v2480
  %v2515 = vunpack.c.h.b16 %v2480
  %v2516 = vpack.c.b16 %v2502, %v2500
  %v2517 = vpack.c.b16 %v2503, %v2501
  %v2518 = vpack.c.b16 %v2506, %v2504
  %v2519 = vpack.c.b16 %v2507, %v2505
  %v2520 = vpack.c.b16 %v2510, %v2508
  %v2521 = vpack.c.b16 %v2511, %v2509
  %v2522 = vpack.c.b16 %v2514, %v2512
  %v2523 = vpack.c.b16 %v2515, %v2513
  %v2533 = vsel %vm378, %v2481, 0
  %v2536 = vsel %vm378, %v2482, 0
  %v2539 = vsel %vm378, %v2483, 0
  %v2542 = vsel %vm378, %v2484, 0
  %2544 = vmatpush.bf16.msra.mxu0 0
  %2545 = vmatpush.bf16.msra.mxu0 0
  %2546 = vmatpush.bf16.msra.mxu0 0
  %2547 = vmatpush.bf16.msra.mxu0 0
  %2548 = vmatpush.bf16.msra.mxu0 %v2522
  %2549 = vmatpush.bf16.msra.mxu0 %v2520
  %2550 = vmatpush.bf16.msra.mxu0 %v2518
  %2551 = vmatpush.bf16.msra.mxu0 %v2516
  %2552 = vmatmul.bf16.gmra.mxu0 %v2533
  %v2553 = vpop.f32.mrf.mxu0
  %v2554 = vadd.f32 %v2488, %v2553
  %v2555 = vpop.f32.mrf.mxu0
  %v2556 = vadd.f32 %v2488, %v2555
  %2557 = vmatmul.bf16.gmra.mxu0 %v2536
  %v2558 = vpop.f32.mrf.mxu0
  %v2559 = vadd.f32 %v2488, %v2558
  %v2560 = vpop.f32.mrf.mxu0
  %v2561 = vadd.f32 %v2488, %v2560
  %2562 = vmatmul.bf16.gmra.mxu0 %v2539
  %v2563 = vpop.f32.mrf.mxu0
  %v2564 = vadd.f32 %v2488, %v2563
  %v2565 = vpop.f32.mrf.mxu0
  %v2566 = vadd.f32 %v2488, %v2565
  %2567 = vmatmul.bf16.gmra.mxu0 %v2542
  %v2568 = vpop.f32.mrf.mxu0
  %v2569 = vadd.f32 %v2488, %v2568
  %v2570 = vpop.f32.mrf.mxu0
  %v2571 = vadd.f32 %v2488, %v2570
  %2572 = vdwg.mxu0
  %2573 = vmatpush.bf16.msra.mxu0 0
  %2574 = vmatpush.bf16.msra.mxu0 0
  %2575 = vmatpush.bf16.msra.mxu0 0
  %2576 = vmatpush.bf16.msra.mxu0 0
  %2577 = vmatpush.bf16.msra.mxu0 %v2523
  %2578 = vmatpush.bf16.msra.mxu0 %v2521
  %2579 = vmatpush.bf16.msra.mxu0 %v2519
  %2580 = vmatpush.bf16.msra.mxu0 %v2517
  %2581 = vmatmul.bf16.gmra.mxu0 %v2533
  %v2582 = vpop.f32.mrf.mxu0
  %v2583 = vadd.f32 %v2489, %v2582
  %v2584 = vpop.f32.mrf.mxu0
  %v2585 = vadd.f32 %v2489, %v2584
  %2586 = vmatmul.bf16.gmra.mxu0 %v2536
  %v2587 = vpop.f32.mrf.mxu0
  %v2588 = vadd.f32 %v2489, %v2587
  %v2589 = vpop.f32.mrf.mxu0
  %v2590 = vadd.f32 %v2489, %v2589
  %2591 = vmatmul.bf16.gmra.mxu0 %v2539
  %v2592 = vpop.f32.mrf.mxu0
  %v2593 = vadd.f32 %v2489, %v2592
  %v2594 = vpop.f32.mrf.mxu0
  %v2595 = vadd.f32 %v2489, %v2594
  %2596 = vmatmul.bf16.gmra.mxu0 %v2542
  %v2597 = vpop.f32.mrf.mxu0
  %v2598 = vadd.f32 %v2489, %v2597
  %v2599 = vpop.f32.mrf.mxu0
  %v2600 = vadd.f32 %v2489, %v2599
  %2601 = vdwg.mxu0
  %v2602 = vmul.f32 %v2554, %v2554
  %v2603 = vmul.f32 %v2583, %v2583
  %v2604 = vmul.f32 %v2556, %v2556
  %v2605 = vmul.f32 %v2585, %v2585
  %v2606 = vmul.f32 %v2559, %v2559
  %v2607 = vmul.f32 %v2588, %v2588
  %v2608 = vmul.f32 %v2561, %v2561
  %v2609 = vmul.f32 %v2590, %v2590
  %v2610 = vmul.f32 %v2564, %v2564
  %v2611 = vmul.f32 %v2593, %v2593
  %v2612 = vmul.f32 %v2566, %v2566
  %v2613 = vmul.f32 %v2595, %v2595
  %v2614 = vmul.f32 %v2569, %v2569
  %v2615 = vmul.f32 %v2598, %v2598
  %v2616 = vmul.f32 %v2571, %v2571
  %v2617 = vmul.f32 %v2600, %v2600
  %v2618 = vmul.f32 %v2554, %v2602
  %v2619 = vmul.f32 %v2583, %v2603
  %v2620 = vmul.f32 %v2556, %v2604
  %v2621 = vmul.f32 %v2585, %v2605
  %v2622 = vmul.f32 %v2559, %v2606
  %v2623 = vmul.f32 %v2588, %v2607
  %v2624 = vmul.f32 %v2561, %v2608
  %v2625 = vmul.f32 %v2590, %v2609
  %v2626 = vmul.f32 %v2564, %v2610
  %v2627 = vmul.f32 %v2593, %v2611
  %v2628 = vmul.f32 %v2566, %v2612
  %v2629 = vmul.f32 %v2595, %v2613
  %v2630 = vmul.f32 %v2569, %v2614
  %v2631 = vmul.f32 %v2598, %v2615
  %v2632 = vmul.f32 %v2571, %v2616
  %v2633 = vmul.f32 %v2600, %v2617
  %v2634 = vmul.f32 %v2618, 0.044715
  %v2635 = vmul.f32 %v2619, 0.044715
  %v2636 = vmul.f32 %v2620, 0.044715
  %v2637 = vmul.f32 %v2621, 0.044715
  %v2638 = vmul.f32 %v2622, 0.044715
  %v2639 = vmul.f32 %v2623, 0.044715
  %v2640 = vmul.f32 %v2624, 0.044715
  %v2641 = vmul.f32 %v2625, 0.044715
  %v2642 = vmul.f32 %v2626, 0.044715
  %v2643 = vmul.f32 %v2627, 0.044715
  %v2644 = vmul.f32 %v2628, 0.044715
  %v2645 = vmul.f32 %v2629, 0.044715
  %v2646 = vmul.f32 %v2630, 0.044715
  %v2647 = vmul.f32 %v2631, 0.044715
  %v2648 = vmul.f32 %v2632, 0.044715
  %v2649 = vmul.f32 %v2633, 0.044715
  %v2650 = vadd.f32 %v2554, %v2634
  %v2651 = vadd.f32 %v2583, %v2635
  %v2652 = vadd.f32 %v2556, %v2636
  %v2653 = vadd.f32 %v2585, %v2637
  %v2654 = vadd.f32 %v2559, %v2638
  %v2655 = vadd.f32 %v2588, %v2639
  %v2656 = vadd.f32 %v2561, %v2640
  %v2657 = vadd.f32 %v2590, %v2641
  %v2658 = vadd.f32 %v2564, %v2642
  %v2659 = vadd.f32 %v2593, %v2643
  %v2660 = vadd.f32 %v2566, %v2644
  %v2661 = vadd.f32 %v2595, %v2645
  %v2662 = vadd.f32 %v2569, %v2646
  %v2663 = vadd.f32 %v2598, %v2647
  %v2664 = vadd.f32 %v2571, %v2648
  %v2665 = vadd.f32 %v2600, %v2649
  %v2666 = vmul.f32 %v2650, 0.7978846
  %v2667 = vmul.f32 %v2651, 0.7978846
  %v2668 = vmul.f32 %v2652, 0.7978846
  %v2669 = vmul.f32 %v2653, 0.7978846
  %v2670 = vmul.f32 %v2654, 0.7978846
  %v2671 = vmul.f32 %v2655, 0.7978846
  %v2672 = vmul.f32 %v2656, 0.7978846
  %v2673 = vmul.f32 %v2657, 0.7978846
  %v2674 = vmul.f32 %v2658, 0.7978846
  %v2675 = vmul.f32 %v2659, 0.7978846
  %v2676 = vmul.f32 %v2660, 0.7978846
  %v2677 = vmul.f32 %v2661, 0.7978846
  %v2678 = vmul.f32 %v2662, 0.7978846
  %v2679 = vmul.f32 %v2663, 0.7978846
  %v2680 = vmul.f32 %v2664, 0.7978846
  %v2681 = vmul.f32 %v2665, 0.7978846
  %v2682 = vtanh.pop %v2666
  %v2683 = vtanh.pop %v2667
  %v2684 = vtanh.pop %v2668
  %v2685 = vtanh.pop %v2669
  %v2686 = vtanh.pop %v2670
  %v2687 = vtanh.pop %v2671
  %v2688 = vtanh.pop %v2672
  %v2689 = vtanh.pop %v2673
  %v2690 = vtanh.pop %v2674
  %v2691 = vtanh.pop %v2675
  %v2692 = vtanh.pop %v2676
  %v2693 = vtanh.pop %v2677
  %v2694 = vtanh.pop %v2678
  %v2695 = vtanh.pop %v2679
  %v2696 = vtanh.pop %v2680
  %v2697 = vtanh.pop %v2681
  %v2698 = vadd.f32 %v2682, 1.0
  %v2699 = vadd.f32 %v2683, 1.0
  %v2700 = vadd.f32 %v2684, 1.0
  %v2701 = vadd.f32 %v2685, 1.0
  %v2702 = vadd.f32 %v2686, 1.0
  %v2703 = vadd.f32 %v2687, 1.0
  %v2704 = vadd.f32 %v2688, 1.0
  %v2705 = vadd.f32 %v2689, 1.0
  %v2706 = vadd.f32 %v2690, 1.0
  %v2707 = vadd.f32 %v2691, 1.0
  %v2708 = vadd.f32 %v2692, 1.0
  %v2709 = vadd.f32 %v2693, 1.0
  %v2710 = vadd.f32 %v2694, 1.0
  %v2711 = vadd.f32 %v2695, 1.0
  %v2712 = vadd.f32 %v2696, 1.0
  %v2713 = vadd.f32 %v2697, 1.0
  %v2714 = vmul.f32 %v2698, 0.5
  %v2715 = vmul.f32 %v2699, 0.5
  %v2716 = vmul.f32 %v2700, 0.5
  %v2717 = vmul.f32 %v2701, 0.5
  %v2718 = vmul.f32 %v2702, 0.5
  %v2719 = vmul.f32 %v2703, 0.5
  %v2720 = vmul.f32 %v2704, 0.5
  %v2721 = vmul.f32 %v2705, 0.5
  %v2722 = vmul.f32 %v2706, 0.5
  %v2723 = vmul.f32 %v2707, 0.5
  %v2724 = vmul.f32 %v2708, 0.5
  %v2725 = vmul.f32 %v2709, 0.5
  %v2726 = vmul.f32 %v2710, 0.5
  %v2727 = vmul.f32 %v2711, 0.5
  %v2728 = vmul.f32 %v2712, 0.5
  %v2729 = vmul.f32 %v2713, 0.5
  %v2730 = vmul.f32 %v2554, %v2714
  %v2731 = vmul.f32 %v2583, %v2715
  %v2732 = vmul.f32 %v2556, %v2716
  %v2733 = vmul.f32 %v2585, %v2717
  %v2734 = vmul.f32 %v2559, %v2718
  %v2735 = vmul.f32 %v2588, %v2719
  %v2736 = vmul.f32 %v2561, %v2720
  %v2737 = vmul.f32 %v2590, %v2721
  %v2738 = vmul.f32 %v2564, %v2722
  %v2739 = vmul.f32 %v2593, %v2723
  %v2740 = vmul.f32 %v2566, %v2724
  %v2741 = vmul.f32 %v2595, %v2725
  %v2742 = vmul.f32 %v2569, %v2726
  %v2743 = vmul.f32 %v2598, %v2727
  %v2744 = vmul.f32 %v2571, %v2728
  %v2745 = vmul.f32 %v2600, %v2729
  %v2746 = vld [vmem:[%s3 + $0x70] sm:$0xf]
  %v2747 = vld [vmem:[%s3 + $0x74] sm:$0xf]
  %v2748 = vld [vmem:[%s3 + $0x78] sm:$0xf]
  %v2749 = vld [vmem:[%s3 + $0x7c] sm:$0xf]
  %v2750 = vld [vmem:[%s3 + $0x80] sm:$0xf]
  %v2751 = vld [vmem:[%s3 + $0x84] sm:$0xf]
  %v2752 = vld [vmem:[%s3 + $0x88] sm:$0xf]
  %v2753 = vld [vmem:[%s3 + $0x8c] sm:$0xf]
  %v2754 = vld [vmem:[%s3 + $0x90] sm:$0xf]
  %v2755 = vld [vmem:[%s3 + $0x94] sm:$0xf]
  %v2756 = vld [vmem:[%s3 + $0x98] sm:$0xf]
  %v2757 = vld [vmem:[%s3 + $0x9c] sm:$0xf]
  %v2758 = vld [vmem:[%s3 + $0xa0] sm:$0xf]
  %v2759 = vld [vmem:[%s3 + $0xa4] sm:$0xf]
  %v2760 = vld [vmem:[%s3 + $0xa8] sm:$0xf]
  %v2761 = vld [vmem:[%s3 + $0xac] sm:$0xf]
  %v2762 = vld [vmem:[%s3 + $0xb0] sm:$0xf]
  %v2763 = vld [vmem:[%s3 + $0xb4] sm:$0xf]
  %v2764 = vld [vmem:[%s3 + $0xb8] sm:$0xf]
  %v2765 = vld [vmem:[%s3 + $0xbc] sm:$0xf]
  %v2766 = vld [vmem:[%s3 + $0xc0] sm:$0xf]
  %v2767 = vld [vmem:[%s3 + $0xc4] sm:$0xf]
  %v2768 = vld [vmem:[%s3 + $0xc8] sm:$0xf]
  %v2769 = vld [vmem:[%s3 + $0xcc] sm:$0xf]
  %v2770 = vld [vmem:[%s3 + $0xd0] sm:$0xf]
  %v2771 = vld [vmem:[%s3 + $0xd4] sm:$0xf]
  %v2772 = vld [vmem:[%s3 + $0xd8] sm:$0xf]
  %v2773 = vld [vmem:[%s3 + $0xdc] sm:$0xf]
  %v2774 = vld [vmem:[%s3 + $0xe0] sm:$0xf]
  %v2775 = vld [vmem:[%s3 + $0xe4] sm:$0xf]
  %v2776 = vld [vmem:[%s3 + $0xe8] sm:$0xf]
  %v2777 = vld [vmem:[%s3 + $0xec] sm:$0xf]
  %v2778 = vpack.c.bf16 %v2732, %v2730
  %v2779 = vpack.c.bf16 %v2733, %v2731
  %v2780 = vpack.c.bf16 %v2736, %v2734
  %v2781 = vpack.c.bf16 %v2737, %v2735
  %v2782 = vpack.c.bf16 %v2740, %v2738
  %v2783 = vpack.c.bf16 %v2741, %v2739
  %v2784 = vpack.c.bf16 %v2744, %v2742
  %v2785 = vpack.c.bf16 %v2745, %v2743
  %v2818 = vunpack.c.l.b16 %v2746
  %v2819 = vunpack.c.l.b16 %v2747
  %v2820 = vunpack.c.l.b16 %v2748
  %v2821 = vunpack.c.l.b16 %v2749
  %v2822 = vunpack.c.l.b16 %v2750
  %v2823 = vunpack.c.l.b16 %v2751
  %v2824 = vunpack.c.l.b16 %v2752
  %v2825 = vunpack.c.l.b16 %v2753
  %v2826 = vunpack.c.l.b16 %v2754
  %v2827 = vunpack.c.l.b16 %v2755
  %v2828 = vunpack.c.l.b16 %v2756
  %v2829 = vunpack.c.l.b16 %v2757
  %v2830 = vunpack.c.l.b16 %v2758
  %v2831 = vunpack.c.l.b16 %v2759
  %v2832 = vunpack.c.l.b16 %v2760
  %v2833 = vunpack.c.l.b16 %v2761
  %v2834 = vunpack.c.l.b16 %v2762
  %v2835 = vunpack.c.l.b16 %v2763
  %v2836 = vunpack.c.l.b16 %v2764
  %v2837 = vunpack.c.l.b16 %v2765
  %v2838 = vunpack.c.l.b16 %v2766
  %v2839 = vunpack.c.l.b16 %v2767
  %v2840 = vunpack.c.l.b16 %v2768
  %v2841 = vunpack.c.l.b16 %v2769
  %v2842 = vunpack.c.l.b16 %v2770
  %v2843 = vunpack.c.l.b16 %v2771
  %v2844 = vunpack.c.l.b16 %v2772
  %v2845 = vunpack.c.l.b16 %v2773
  %v2846 = vunpack.c.l.b16 %v2774
  %v2847 = vunpack.c.l.b16 %v2775
  %v2848 = vunpack.c.l.b16 %v2776
  %v2849 = vunpack.c.l.b16 %v2777
  %v2850 = vpack.c.b16 %v2819, %v2818
  %v2851 = vpack.c.b16 %v2821, %v2820
  %v2852 = vpack.c.b16 %v2823, %v2822
  %v2853 = vpack.c.b16 %v2825, %v2824
  %v2854 = vpack.c.b16 %v2827, %v2826
  %v2855 = vpack.c.b16 %v2829, %v2828
  %v2856 = vpack.c.b16 %v2831, %v2830
  %v2857 = vpack.c.b16 %v2833, %v2832
  %v2858 = vpack.c.b16 %v2835, %v2834
  %v2859 = vpack.c.b16 %v2837, %v2836
  %v2860 = vpack.c.b16 %v2839, %v2838
  %v2861 = vpack.c.b16 %v2841, %v2840
  %v2862 = vpack.c.b16 %v2843, %v2842
  %v2863 = vpack.c.b16 %v2845, %v2844
  %v2864 = vpack.c.b16 %v2847, %v2846
  %v2865 = vpack.c.b16 %v2849, %v2848
  %2882 = vmatpush.bf16.msra.mxu0 %v2857
  %2883 = vmatpush.bf16.msra.mxu0 %v2856
  %2884 = vmatpush.bf16.msra.mxu0 %v2855
  %2885 = vmatpush.bf16.msra.mxu0 %v2854
  %2886 = vmatpush.bf16.msra.mxu0 %v2853
  %2887 = vmatpush.bf16.msra.mxu0 %v2852
  %2888 = vmatpush.bf16.msra.mxu0 %v2851
  %2889 = vmatpush.bf16.msra.mxu0 %v2850
  %2890 = vmatmul.bf16.gmra.mxu0 %v2778
  %v2891 = vpop.f32.mrf.mxu0
  %v2892 = vadd.f32 0.0, %v2891
  %v2893 = vpop.f32.mrf.mxu0
  %v2894 = vadd.f32 0.0, %v2893
  %2895 = vmatmul.bf16.gmra.mxu0 %v2780
  %v2896 = vpop.f32.mrf.mxu0
  %v2897 = vadd.f32 0.0, %v2896
  %v2898 = vpop.f32.mrf.mxu0
  %v2899 = vadd.f32 0.0, %v2898
  %2900 = vmatmul.bf16.gmra.mxu0 %v2782
  %v2901 = vpop.f32.mrf.mxu0
  %v2902 = vadd.f32 0.0, %v2901
  %v2903 = vpop.f32.mrf.mxu0
  %v2904 = vadd.f32 0.0, %v2903
  %2905 = vmatmul.bf16.gmra.mxu0 %v2784
  %v2906 = vpop.f32.mrf.mxu0
  %v2907 = vadd.f32 0.0, %v2906
  %v2908 = vpop.f32.mrf.mxu0
  %v2909 = vadd.f32 0.0, %v2908
  %2910 = vdwg.mxu0
  %2911 = vmatpush.bf16.msra.mxu0 %v2865
  %2912 = vmatpush.bf16.msra.mxu0 %v2864
  %2913 = vmatpush.bf16.msra.mxu0 %v2863
  %2914 = vmatpush.bf16.msra.mxu0 %v2862
  %2915 = vmatpush.bf16.msra.mxu0 %v2861
  %2916 = vmatpush.bf16.msra.mxu0 %v2860
  %2917 = vmatpush.bf16.msra.mxu0 %v2859
  %2918 = vmatpush.bf16.msra.mxu0 %v2858
  %2919 = vmatmul.bf16.gmra.mxu0 %v2779
  %v2920 = vpop.f32.mrf.mxu0
  %v2921 = vadd.f32 %v2892, %v2920
  %v2922 = vpop.f32.mrf.mxu0
  %v2923 = vadd.f32 %v2894, %v2922
  %2924 = vmatmul.bf16.gmra.mxu0 %v2781
  %v2925 = vpop.f32.mrf.mxu0
  %v2926 = vadd.f32 %v2897, %v2925
  %v2927 = vpop.f32.mrf.mxu0
  %v2928 = vadd.f32 %v2899, %v2927
  %2929 = vmatmul.bf16.gmra.mxu0 %v2783
  %v2930 = vpop.f32.mrf.mxu0
  %v2931 = vadd.f32 %v2902, %v2930
  %v2932 = vpop.f32.mrf.mxu0
  %v2933 = vadd.f32 %v2904, %v2932
  %2934 = vmatmul.bf16.gmra.mxu0 %v2785
  %v2935 = vpop.f32.mrf.mxu0
  %v2936 = vadd.f32 %v2907, %v2935
  %v2937 = vpop.f32.mrf.mxu0
  %v2938 = vadd.f32 %v2909, %v2937
  %2939 = vdwg.mxu0
  %v2940 = vadd.f32 %v2271, %v2921
  %v2941 = vadd.f32 %v2272, %v2923
  %v2942 = vadd.f32 %v2273, %v2926
  %v2943 = vadd.f32 %v2274, %v2928
  %v2944 = vadd.f32 %v2275, %v2931
  %v2945 = vadd.f32 %v2276, %v2933
  %v2946 = vadd.f32 %v2277, %v2936
  %v2947 = vadd.f32 %v2278, %v2938
  %v2948 = vld [vmem:[%s1 + $0x35] ss:$0 sm:$0xff]
  %v2949 = vadd.f32 %v2940, %v2948
  %v2950 = vadd.f32 %v2941, %v2948
  %v2951 = vadd.f32 %v2942, %v2948
  %v2952 = vadd.f32 %v2943, %v2948
  %v2953 = vadd.f32 %v2944, %v2948
  %v2954 = vadd.f32 %v2945, %v2948
  %v2955 = vadd.f32 %v2946, %v2948
  %v2956 = vadd.f32 %v2947, %v2948
  %v2957 = vld [vmem:[%s1 + $0x32] ss:$0 sm:$0xff]
  %v2958 = vld [vmem:[%s1 + $0x33] ss:$0 sm:$0xff]
  %v2959 = vsel %vm378, %v2949, 0.0
  %2960 = vadd.xlane.f32.xlu0 %v2959
  %v2961 = vpop.xlane.xlu0 %2960
  %v2962 = vsel %vm378, %v2950, 0.0
  %2963 = vadd.xlane.f32.xlu0 %v2962
  %v2964 = vpop.xlane.xlu0 %2963
  %v2965 = vsel %vm378, %v2951, 0.0
  %2966 = vadd.xlane.f32.xlu0 %v2965
  %v2967 = vpop.xlane.xlu0 %2966
  %v2968 = vsel %vm378, %v2952, 0.0
  %2969 = vadd.xlane.f32.xlu0 %v2968
  %v2970 = vpop.xlane.xlu0 %2969
  %v2971 = vsel %vm378, %v2953, 0.0
  %2972 = vadd.xlane.f32.xlu0 %v2971
  %v2973 = vpop.xlane.xlu0 %2972
  %v2974 = vsel %vm378, %v2954, 0.0
  %2975 = vadd.xlane.f32.xlu0 %v2974
  %v2976 = vpop.xlane.xlu0 %2975
  %v2977 = vsel %vm378, %v2955, 0.0
  %2978 = vadd.xlane.f32.xlu0 %v2977
  %v2979 = vpop.xlane.xlu0 %2978
  %v2980 = vsel %vm378, %v2956, 0.0
  %2981 = vadd.xlane.f32.xlu0 %v2980
  %v2982 = vpop.xlane.xlu0 %2981
  %v2983 = vmul.f32 %v2961, %v476
  %v2984 = vmul.f32 %v2964, %v476
  %v2985 = vmul.f32 %v2967, %v476
  %v2986 = vmul.f32 %v2970, %v476
  %v2987 = vmul.f32 %v2973, %v476
  %v2988 = vmul.f32 %v2976, %v476
  %v2989 = vmul.f32 %v2979, %v476
  %v2990 = vmul.f32 %v2982, %v476
  %v2991 = vsub.f32 %v2949, %v2983
  %v2992 = vsub.f32 %v2950, %v2984
  %v2993 = vsub.f32 %v2951, %v2985
  %v2994 = vsub.f32 %v2952, %v2986
  %v2995 = vsub.f32 %v2953, %v2987
  %v2996 = vsub.f32 %v2954, %v2988
  %v2997 = vsub.f32 %v2955, %v2989
  %v2998 = vsub.f32 %v2956, %v2990
  %v2999 = vmul.f32 %v2991, %v2991
  %v3000 = vmul.f32 %v2992, %v2992
  %v3001 = vmul.f32 %v2993, %v2993
  %v3002 = vmul.f32 %v2994, %v2994
  %v3003 = vmul.f32 %v2995, %v2995
  %v3004 = vmul.f32 %v2996, %v2996
  %v3005 = vmul.f32 %v2997, %v2997
  %v3006 = vmul.f32 %v2998, %v2998
  %v3007 = vsel %vm378, %v2999, 0.0
  %3008 = vadd.xlane.f32.xlu0 %v3007
  %v3009 = vpop.xlane.xlu0 %3008
  %v3010 = vsel %vm378, %v3000, 0.0
  %3011 = vadd.xlane.f32.xlu0 %v3010
  %v3012 = vpop.xlane.xlu0 %3011
  %v3013 = vsel %vm378, %v3001, 0.0
  %3014 = vadd.xlane.f32.xlu0 %v3013
  %v3015 = vpop.xlane.xlu0 %3014
  %v3016 = vsel %vm378, %v3002, 0.0
  %3017 = vadd.xlane.f32.xlu0 %v3016
  %v3018 = vpop.xlane.xlu0 %3017
  %v3019 = vsel %vm378, %v3003, 0.0
  %3020 = vadd.xlane.f32.xlu0 %v3019
  %v3021 = vpop.xlane.xlu0 %3020
  %v3022 = vsel %vm378, %v3004, 0.0
  %3023 = vadd.xlane.f32.xlu0 %v3022
  %v3024 = vpop.xlane.xlu0 %3023
  %v3025 = vsel %vm378, %v3005, 0.0
  %3026 = vadd.xlane.f32.xlu0 %v3025
  %v3027 = vpop.xlane.xlu0 %3026
  %v3028 = vsel %vm378, %v3006, 0.0
  %3029 = vadd.xlane.f32.xlu0 %v3028
  %v3030 = vpop.xlane.xlu0 %3029
  %v3031 = vmul.f32 %v3009, %v476
  %v3032 = vmul.f32 %v3012, %v476
  %v3033 = vmul.f32 %v3015, %v476
  %v3034 = vmul.f32 %v3018, %v476
  %v3035 = vmul.f32 %v3021, %v476
  %v3036 = vmul.f32 %v3024, %v476
  %v3037 = vmul.f32 %v3027, %v476
  %v3038 = vmul.f32 %v3030, %v476
  %v3039 = vadd.f32 %v3031, 1e-05
  %v3040 = vadd.f32 %v3032, 1e-05
  %v3041 = vadd.f32 %v3033, 1e-05
  %v3042 = vadd.f32 %v3034, 1e-05
  %v3043 = vadd.f32 %v3035, 1e-05
  %v3044 = vadd.f32 %v3036, 1e-05
  %v3045 = vadd.f32 %v3037, 1e-05
  %v3046 = vadd.f32 %v3038, 1e-05
  %v3047 = vrsqrt.pop %v3039
  %v3048 = vmul.f32 %v3047, %v3039
  %v3049 = vmul.f32 %v3048, %v3047
  %v3050 = vmul.f32 0.5, %v3049
  %v3051 = vsub.f32 1.5, %v3050
  %v3052 = vmul.f32 %v3047, %v3051
  %vm3053 = vweird.f32 %v3039
  %vm3054 = vweird.f32 %v3047
  %vm3055 = vmor %vm3053, %vm3054
  %v3056 = vsel %vm3055, %v3047, %v3052
  %v3057 = vrsqrt.pop %v3040
  %v3058 = vmul.f32 %v3057, %v3040
  %v3059 = vmul.f32 %v3058, %v3057
  %v3060 = vmul.f32 0.5, %v3059
  %v3061 = vsub.f32 1.5, %v3060
  %v3062 = vmul.f32 %v3057, %v3061
  %vm3063 = vweird.f32 %v3040
  %vm3064 = vweird.f32 %v3057
  %vm3065 = vmor %vm3063, %vm3064
  %v3066 = vsel %vm3065, %v3057, %v3062
  %v3067 = vrsqrt.pop %v3041
  %v3068 = vmul.f32 %v3067, %v3041
  %v3069 = vmul.f32 %v3068, %v3067
  %v3070 = vmul.f32 0.5, %v3069
  %v3071 = vsub.f32 1.5, %v3070
  %v3072 = vmul.f32 %v3067, %v3071
  %vm3073 = vweird.f32 %v3041
  %vm3074 = vweird.f32 %v3067
  %vm3075 = vmor %vm3073, %vm3074
  %v3076 = vsel %vm3075, %v3067, %v3072
  %v3077 = vrsqrt.pop %v3042
  %v3078 = vmul.f32 %v3077, %v3042
  %v3079 = vmul.f32 %v3078, %v3077
  %v3080 = vmul.f32 0.5, %v3079
  %v3081 = vsub.f32 1.5, %v3080
  %v3082 = vmul.f32 %v3077, %v3081
  %vm3083 = vweird.f32 %v3042
  %vm3084 = vweird.f32 %v3077
  %vm3085 = vmor %vm3083, %vm3084
  %v3086 = vsel %vm3085, %v3077, %v3082
  %v3087 = vrsqrt.pop %v3043
  %v3088 = vmul.f32 %v3087, %v3043
  %v3089 = vmul.f32 %v3088, %v3087
  %v3090 = vmul.f32 0.5, %v3089
  %v3091 = vsub.f32 1.5, %v3090
  %v3092 = vmul.f32 %v3087, %v3091
  %vm3093 = vweird.f32 %v3043
  %vm3094 = vweird.f32 %v3087
  %vm3095 = vmor %vm3093, %vm3094
  %v3096 = vsel %vm3095, %v3087, %v3092
  %v3097 = vrsqrt.pop %v3044
  %v3098 = vmul.f32 %v3097, %v3044
  %v3099 = vmul.f32 %v3098, %v3097
  %v3100 = vmul.f32 0.5, %v3099
  %v3101 = vsub.f32 1.5, %v3100
  %v3102 = vmul.f32 %v3097, %v3101
  %vm3103 = vweird.f32 %v3044
  %vm3104 = vweird.f32 %v3097
  %vm3105 = vmor %vm3103, %vm3104
  %v3106 = vsel %vm3105, %v3097, %v3102
  %v3107 = vrsqrt.pop %v3045
  %v3108 = vmul.f32 %v3107, %v3045
  %v3109 = vmul.f32 %v3108, %v3107
  %v3110 = vmul.f32 0.5, %v3109
  %v3111 = vsub.f32 1.5, %v3110
  %v3112 = vmul.f32 %v3107, %v3111
  %vm3113 = vweird.f32 %v3045
  %vm3114 = vweird.f32 %v3107
  %vm3115 = vmor %vm3113, %vm3114
  %v3116 = vsel %vm3115, %v3107, %v3112
  %v3117 = vrsqrt.pop %v3046
  %v3118 = vmul.f32 %v3117, %v3046
  %v3119 = vmul.f32 %v3118, %v3117
  %v3120 = vmul.f32 0.5, %v3119
  %v3121 = vsub.f32 1.5, %v3120
  %v3122 = vmul.f32 %v3117, %v3121
  %vm3123 = vweird.f32 %v3046
  %vm3124 = vweird.f32 %v3117
  %vm3125 = vmor %vm3123, %vm3124
  %v3126 = vsel %vm3125, %v3117, %v3122
  %v3127 = vmul.f32 %v2991, %v3056
  %v3128 = vmul.f32 %v2992, %v3066
  %v3129 = vmul.f32 %v2993, %v3076
  %v3130 = vmul.f32 %v2994, %v3086
  %v3131 = vmul.f32 %v2995, %v3096
  %v3132 = vmul.f32 %v2996, %v3106
  %v3133 = vmul.f32 %v2997, %v3116
  %v3134 = vmul.f32 %v2998, %v3126
  %v3135 = vmul.f32 %v3127, %v2957
  %v3136 = vmul.f32 %v3128, %v2957
  %v3137 = vmul.f32 %v3129, %v2957
  %v3138 = vmul.f32 %v3130, %v2957
  %v3139 = vmul.f32 %v3131, %v2957
  %v3140 = vmul.f32 %v3132, %v2957
  %v3141 = vmul.f32 %v3133, %v2957
  %v3142 = vmul.f32 %v3134, %v2957
  %v3143 = vadd.f32 %v3135, %v2958
  %v3144 = vadd.f32 %v3136, %v2958
  %v3145 = vadd.f32 %v3137, %v2958
  %v3146 = vadd.f32 %v3138, %v2958
  %v3147 = vadd.f32 %v3139, %v2958
  %v3148 = vadd.f32 %v3140, %v2958
  %v3149 = vadd.f32 %v3141, %v2958
  %v3150 = vadd.f32 %v3142, %v2958
  %v3151 = vld [vmem:[%s2 + $0xc0] sm:$0xff]
  %v3153 = vsel %vm378, %v3151, 0
  %3155 = vmatpush.msra.mxu0 0.0
  %3156 = vmatpush.msra.mxu0 0.0
  %3157 = vmatpush.msra.mxu0 0.0
  %3158 = vmatpush.msra.mxu0 0.0
  %3159 = vmatpush.msra.mxu0 0.0
  %3160 = vmatpush.msra.mxu0 0.0
  %3161 = vmatpush.msra.mxu0 0.0
  %3162 = vmatpush.msra.mxu0 0.0
  %3163 = vmatpush.msra.mxu0 %v3150
  %3164 = vmatpush.msra.mxu0 %v3149
  %3165 = vmatpush.msra.mxu0 %v3148
  %3166 = vmatpush.msra.mxu0 %v3147
  %3167 = vmatpush.msra.mxu0 %v3146
  %3168 = vmatpush.msra.mxu0 %v3145
  %3169 = vmatpush.msra.mxu0 %v3144
  %3170 = vmatpush.msra.mxu0 %v3143
  %3171 = vmatmul.f32.gmra.mxu0 %v3153
  %v3172 = vpop.f32.mrf.mxu0
  %v3173 = vadd.f32 0.0, %v3172
  %3174 = vdwg.mxu0
  %v3175 = vld [vmem:[%s4 + $0x90] sm:$0xf]
  %v3176 = vld [vmem:[%s4 + $0x98] sm:$0xf]
  %v3177 = vld [vmem:[%s4 + $0xa0] sm:$0xf]
  %v3178 = vld [vmem:[%s4 + $0xa8] sm:$0xf]
  %v3179 = vld [vmem:[%s4 + $0xb0] sm:$0xf]
  %v3180 = vld [vmem:[%s4 + $0xb8] sm:$0xf]
  %v3181 = vld [vmem:[%s4 + $0xc0] sm:$0xf]
  %v3182 = vld [vmem:[%s4 + $0xc8] sm:$0xf]
  %v3183 = vpack.c.bf16 %v3173, %v3173
  %v3184 = vld [vmem:[%s1 + $0x40] ss:$0 sm:$0xff]
  %v3193 = vunpack.c.l.b16 %v3175
  %v3194 = vunpack.c.l.b16 %v3176
  %v3195 = vunpack.c.l.b16 %v3177
  %v3196 = vunpack.c.l.b16 %v3178
  %v3197 = vunpack.c.l.b16 %v3179
  %v3198 = vunpack.c.l.b16 %v3180
  %v3199 = vunpack.c.l.b16 %v3181
  %v3200 = vunpack.c.l.b16 %v3182
  %v3201 = vpack.c.b16 %v3194, %v3193
  %v3202 = vpack.c.b16 %v3196, %v3195
  %v3203 = vpack.c.b16 %v3198, %v3197
  %v3204 = vpack.c.b16 %v3200, %v3199
  %v3210 = vsel %vm378, %v3183, 0
  %3212 = vmatpush.bf16.msra.mxu0 0
  %3213 = vmatpush.bf16.msra.mxu0 0
  %3214 = vmatpush.bf16.msra.mxu0 0
  %3215 = vmatpush.bf16.msra.mxu0 0
  %3216 = vmatpush.bf16.msra.mxu0 %v3204
  %3217 = vmatpush.bf16.msra.mxu0 %v3203
  %3218 = vmatpush.bf16.msra.mxu0 %v3202
  %3219 = vmatpush.bf16.msra.mxu0 %v3201
  %3220 = vmatmul.bf16.gmra.mxu0 %v3210
  %v3221 = vpop.f32.mrf.mxu0
  %v3222 = vadd.f32 %v3184, %v3221
  %v3223 = vpop.f32.mrf.mxu0
  %3224 = vdwg.mxu0
  %3225 = vst [vmem:[%s5] sm:$0xff] %v3222
  // Predicated region
  $region22: #{offline_rl_policy_forward.1} parent=0 // pred_check
    _
  $region23: #{offline_rl_policy_forward.1} parent=0 // pred_check_branch
    %3227 = sbr.rel (0) target = $region25
  $region24: #{offline_rl_policy_forward.1} parent=0 // pred_region
    _
  $region25: #{offline_rl_policy_forward.1} parent=0 // pred_fallthru
    _
  // Predicated region
  $region26: #{offline_rl_policy_forward.1} parent=0 // pred_check
    _
  $region27: #{offline_rl_policy_forward.1} parent=0 // pred_check_branch
    %3229 = sbr.rel (0) target = $region29
  $region28: #{offline_rl_policy_forward.1} parent=0 // pred_region
    _
  $region29: #{offline_rl_policy_forward.1} parent=0 // pred_fallthru
    _

</llo_original>
